<compile_context>
chip_gen: v6e
topology: v6e:2x2x1
jax: 0.10.0
libtpu: 0.0.40
codegen_flags: <defaults>
</compile_context>

<pallas_src>
import functools
import math

import jax
import jax.numpy as jnp
from jax.experimental import pallas as pl

# TODO(synk): torch.nn.GELU defaults to the exact erf GELU; the tanh
# approximation is used here for guaranteed Mosaic lowering.
_GELU = functools.partial(jax.nn.gelu, approximate=True)


def _layer_norm(y, g, b, eps=1e-5):
    mu = jnp.mean(y, axis=-1, keepdims=True)
    var = jnp.mean((y - mu) ** 2, axis=-1, keepdims=True)
    return (y - mu) * jax.lax.rsqrt(var + eps) * g + b


def _mm(a, b):
    """a @ b with f32 accumulation."""
    return jax.lax.dot_general(a, b, (((1,), (0,)), ((), ())),
                               preferred_element_type=jnp.float32)


def _mm_t(a, b):
    """a @ b.T without materializing the transpose."""
    return jax.lax.dot_general(a, b, (((1,), (1,)), ((), ())),
                               preferred_element_type=jnp.float32)


# ----------------------------------------------------------------------------
# Single fused kernel: input fusion + InitialGate + encoder stack + heads
# ----------------------------------------------------------------------------
def _fused_forward_kernel(
        # activations
        inp_ref,      # (N, D)   [sent_emb | mel_flat]
        spk_ref,      # (N, H)   speaker embedding
        maskc_ref,    # (N, 1)   validity mask column
        bias_ref,     # (N, N)   additive bias: -1e9 for cross-batch / invalid keys
        # packed parameter slabs
        wmisc_ref,    # (D + 10H, 3H) misc weight matrices
        vmisc_ref,    # (8, 3H)       misc bias vectors
        wlyr_ref,     # (nl, 5H+FF, max(H,FF)) per-layer weight matrices
        vlyr_ref,     # (nl, 16,    max(H,FF)) per-layer bias / LN vectors
        # output: (N, 8) packed [split | out0..3 | final_gate | input_gate | 0]
        out_ref,
        *, num_layers, num_heads, head_dim, hidden, ffn, din_tot):
    f32 = jnp.float32
    H, FF, D = hidden, ffn, din_tot

    # static row offsets into wmisc (must match pack_params)
    o_wm2 = D
    o_wm3 = D + 2 * H
    o_wg = D + 3 * H
    o_wh1 = D + 4 * H
    o_wh2 = D + 5 * H
    o_w3a = D + 7 * H
    o_w3b = D + 9 * H

    inp = inp_ref[...]
    spk = spk_ref[...]
    mcol = maskc_ref[...]
    bias = bias_ref[...]

    # ---- input embedding fusion -------------------------------------------
    # One K=D matmul computes the sent Linear (cols 0:H) and mel-MLP layer 1
    # (cols H:3H) from the concatenated [sent | mel] input.
    r1 = _mm(inp, wmisc_ref[0:D, 0:3 * H]) + vmisc_ref[0:1, 0:3 * H]   # (N, 3H)
    s = r1[:, 0:H]
    m = _GELU(r1[:, H:3 * H])
    m = _GELU(_mm(m, wmisc_ref[o_wm2:o_wm2 + 2 * H, 0:H]) + vmisc_ref[1:2, 0:H])
    m = _mm(m, wmisc_ref[o_wm3:o_wm3 + H, 0:H]) + vmisc_ref[2:3, 0:H]
    overall = s + spk + m                                   # use_spk & use_mel

    # TODO(synk): InitialGate definition is not in the provided source; modeled
    # as a per-token sigmoid gate (Linear H->1) followed by the padding mask,
    # returning the pre-sigmoid logit as `input_gate`.
    in_gate = (_mm(overall, wmisc_ref[o_wg:o_wg + H, 0:1])
               + vmisc_ref[3:4, 0:1])                       # (N, 1)
    x = overall * jax.nn.sigmoid(in_gate) * mcol            # (N, H)

    # Per-head lane masks, hoisted out of the layer loop.  Masking K (and V)
    # to head h's lanes makes the full-width contraction equal the per-head
    # score/context -- no 8-lane slices, no lane concatenation.
    lane = jax.lax.broadcasted_iota(jnp.int32, (1, H), 1)
    head_masks = [((lane >= h * head_dim) & (lane < (h + 1) * head_dim)).astype(f32)
                  for h in range(num_heads)]

    # ---- transformer encoder stack (stands in for VanillaTransformer) ------
    scale = 1.0 / math.sqrt(head_dim)
    for l in range(num_layers):                              # static loop
        wq = wlyr_ref[l, 0:H, 0:H]
        wk = wlyr_ref[l, H:2 * H, 0:H]
        wv = wlyr_ref[l, 2 * H:3 * H, 0:H]
        wo = wlyr_ref[l, 3 * H:4 * H, 0:H]
        wf1 = wlyr_ref[l, 4 * H:5 * H, 0:FF]
        wf2 = wlyr_ref[l, 5 * H:5 * H + FF, 0:H]

        bq = vlyr_ref[l, 0:1, 0:H]
        bk = vlyr_ref[l, 1:2, 0:H]
        bv = vlyr_ref[l, 2:3, 0:H]
        bo = vlyr_ref[l, 3:4, 0:H]
        bf1 = vlyr_ref[l, 4:5, 0:FF]
        bf2 = vlyr_ref[l, 5:6, 0:H]
        g1 = vlyr_ref[l, 6:7, 0:H]
        be1 = vlyr_ref[l, 7:8, 0:H]
        g2 = vlyr_ref[l, 8:9, 0:H]
        be2 = vlyr_ref[l, 9:10, 0:H]

        # lane-aligned Q/K/V projections (un-fused so every head sits at a
        # known lane range of a 0-offset tensor)
        q = _mm(x, wq) + bq                                  # (N, H)
        k = _mm(x, wk) + bk
        v = _mm(x, wv) + bv

        ctx = jnp.zeros_like(x)                              # (N, H)
        for hm in head_masks:                                # static loop
            # masked K => contraction only over head h's lanes
            sc = _mm_t(q, k * hm) * scale + bias             # (N, N)
            sc = sc - jnp.max(sc, axis=-1, keepdims=True)
            e = jnp.exp(sc)
            p = e * pl.reciprocal(jnp.sum(e, axis=-1, keepdims=True), approx=True)
            # masked V => context lands directly in head h's lanes
            ctx = ctx + _mm(p, v * hm)

        attn = _mm(ctx, wo) + bo
        h1 = _layer_norm(x + attn, g1, be1)
        ff = _GELU(_mm(h1, wf1) + bf1)
        ff = _mm(ff, wf2) + bf2
        x = _layer_norm(h1 + ff, g2, be2)

    # ---- fused output heads -------------------------------------------------
    # split/out MLP layer-1 fused (H -> 2H), layer-2 block-diagonal (2H -> 2H),
    # layer-3 of split (->1), out (->4) and the final gate (->1) fused into a
    # single 8-wide result written straight to the packed output slab.
    h1h = _GELU(_mm(x, wmisc_ref[o_wh1:o_wh1 + H, 0:2 * H]) + vmisc_ref[4:5, 0:2 * H])
    h2h = _GELU(_mm(h1h, wmisc_ref[o_wh2:o_wh2 + 2 * H, 0:2 * H]) + vmisc_ref[5:6, 0:2 * H])
    heads = (_mm(h2h, wmisc_ref[o_w3a:o_w3a + 2 * H, 0:8])
             + _mm(x, wmisc_ref[o_w3b:o_w3b + H, 0:8])
             + vmisc_ref[6:7, 0:8])                          # (N, 8)
    # TODO(synk): VanillaTransformer's `final_gate` is not in the provided
    # source; modeled as Linear(H,1) on the final feature (column 5).
    col = jax.lax.broadcasted_iota(jnp.int32, (1, 8), 1)
    out_ref[...] = heads + in_gate * (col == 6).astype(f32)  # in_gate -> col 6


def fused_forward(args, *, num_layers, num_heads, head_dim, hidden, ffn,
                  din_tot, n_rows):
    kern = functools.partial(
        _fused_forward_kernel,
        num_layers=num_layers, num_heads=num_heads, head_dim=head_dim,
        hidden=hidden, ffn=ffn, din_tot=din_tot)
    # Grid-less single call: every operand (< 1 MiB total) stays resident in
    # VMEM; default scoped-VMEM limits far exceed the working set.
    return pl.pallas_call(
        kern,
        out_shape=jax.ShapeDtypeStruct((n_rows, 8), jnp.float32),
    )(*args)


# ----------------------------------------------------------------------------
# Parameter init (deterministic, PyTorch-Linear-style uniform init)
# ----------------------------------------------------------------------------
def init_params(key, cfg):
    H = cfg["hidden_size"]
    Din = cfg["text_embd_dims"]
    WM = cfg["mel_width"] * cfg["mel_dim"]
    keys = iter(jax.random.split(key, 64))

    def dense(fi, fo):
        k1, k2 = jax.random.split(next(keys))
        lim = 1.0 / math.sqrt(fi)
        w = jax.random.uniform(k1, (fi, fo), jnp.float32, -lim, lim)
        b = jax.random.uniform(k2, (1, fo), jnp.float32, -lim, lim)
        return w, b

    p = {}
    p["spk_lut"] = jax.random.normal(next(keys), (cfg["spk_num"], H), jnp.float32)
    p["ws"], p["bs"] = dense(Din, H)                      # sent_input
    p["wm1"], p["bm1"] = dense(WM, 2 * H)                 # mel_input[0]
    p["wm2"], p["bm2"] = dense(2 * H, H)                  # mel_input[3]
    p["wm3"], p["bm3"] = dense(H, H)                      # mel_input[6]
    p["wg"], p["bg"] = dense(H, 1)                        # InitialGate

    layers = []
    ffn = cfg["inner_layer"] * H
    for _ in range(cfg["outer_layer"]):
        lp = {}
        lp["wq"], lp["bq"] = dense(H, H)
        lp["wk"], lp["bk"] = dense(H, H)
        lp["wv"], lp["bv"] = dense(H, H)
        lp["wo"], lp["bo"] = dense(H, H)
        lp["g1"] = jnp.ones((1, H), jnp.float32)
        lp["be1"] = jnp.zeros((1, H), jnp.float32)
        lp["wf1"], lp["bf1"] = dense(H, ffn)
        lp["wf2"], lp["bf2"] = dense(ffn, H)
        lp["g2"] = jnp.ones((1, H), jnp.float32)
        lp["be2"] = jnp.zeros((1, H), jnp.float32)
        layers.append(lp)
    p["layers"] = layers

    p["sw1"], p["sb1"] = dense(H, H)                      # split_linear
    p["sw2"], p["sb2"] = dense(H, H)
    p["sw3"], p["sb3"] = dense(H, 1)
    p["ow1"], p["ob1"] = dense(H, H)                      # out_linear
    p["ow2"], p["ob2"] = dense(H, H)
    p["ow3"], p["ob3"] = dense(H, 4)
    p["fgw"], p["fgb"] = dense(H, 1)                      # final gate head
    return p


def pack_params(p, cfg):
    """One-time (outside jit) packing of all weights into 4 kernel slabs."""
    H = cfg["hidden_size"]
    Din = cfg["text_embd_dims"]
    WM = cfg["mel_width"] * cfg["mel_dim"]
    D = Din + WM
    FF = cfg["inner_layer"] * H
    nl = cfg["outer_layer"]

    # --- misc weight-matrix slab (width 3H) ---------------------------------
    wmisc = jnp.zeros((D + 10 * H, 3 * H), jnp.float32)
    # W1: block-diag [sent Linear -> cols 0:H | mel layer-1 -> cols H:3H]
    wmisc = wmisc.at[0:Din, 0:H].set(p["ws"])
    wmisc = wmisc.at[Din:D, H:3 * H].set(p["wm1"])
    o = D
    wmisc = wmisc.at[o:o + 2 * H, 0:H].set(p["wm2"]); o += 2 * H
    wmisc = wmisc.at[o:o + H, 0:H].set(p["wm3"]); o += H
    wmisc = wmisc.at[o:o + H, 0:1].set(p["wg"]); o += H
    # heads layer-1: [split | out]
    wmisc = wmisc.at[o:o + H, 0:H].set(p["sw1"])
    wmisc = wmisc.at[o:o + H, H:2 * H].set(p["ow1"]); o += H
    # heads layer-2: block-diagonal
    wmisc = wmisc.at[o:o + H, 0:H].set(p["sw2"])
    wmisc = wmisc.at[o + H:o + 2 * H, H:2 * H].set(p["ow2"]); o += 2 * H
    # heads layer-3 from h2: split -> col 0, out -> cols 1:5
    wmisc = wmisc.at[o:o + H, 0:1].set(p["sw3"])
    wmisc = wmisc.at[o + H:o + 2 * H, 1:5].set(p["ow3"]); o += 2 * H
    # final gate from x -> col 5
    wmisc = wmisc.at[o:o + H, 5:6].set(p["fgw"]); o += H
    assert o == D + 10 * H

    # --- misc bias-vector slab ----------------------------------------------
    vmisc = jnp.zeros((8, 3 * H), jnp.float32)
    vmisc = vmisc.at[0, 0:H].set(p["bs"][0]).at[0, H:3 * H].set(p["bm1"][0])
    vmisc = vmisc.at[1, 0:H].set(p["bm2"][0])
    vmisc = vmisc.at[2, 0:H].set(p["bm3"][0])
    vmisc = vmisc.at[3, 0:1].set(p["bg"][0])
    vmisc = vmisc.at[4, 0:H].set(p["sb1"][0]).at[4, H:2 * H].set(p["ob1"][0])
    vmisc = vmisc.at[5, 0:H].set(p["sb2"][0]).at[5, H:2 * H].set(p["ob2"][0])
    vmisc = vmisc.at[6, 0:1].set(p["sb3"][0]).at[6, 1:5].set(p["ob3"][0])
    vmisc = vmisc.at[6, 5:6].set(p["fgb"][0])

    # --- stacked per-layer slabs --------------------------------------------
    lcol = max(H, FF)
    wlyr = jnp.zeros((nl, 5 * H + FF, lcol), jnp.float32)
    vlyr = jnp.zeros((nl, 16, lcol), jnp.float32)
    for i, lp in enumerate(p["layers"]):
        wlyr = wlyr.at[i, 0:H, 0:H].set(lp["wq"])
        wlyr = wlyr.at[i, H:2 * H, 0:H].set(lp["wk"])
        wlyr = wlyr.at[i, 2 * H:3 * H, 0:H].set(lp["wv"])
        wlyr = wlyr.at[i, 3 * H:4 * H, 0:H].set(lp["wo"])
        wlyr = wlyr.at[i, 4 * H:5 * H, 0:FF].set(lp["wf1"])
        wlyr = wlyr.at[i, 5 * H:5 * H + FF, 0:H].set(lp["wf2"])
        vlyr = vlyr.at[i, 0, 0:H].set(lp["bq"][0])
        vlyr = vlyr.at[i, 1, 0:H].set(lp["bk"][0])
        vlyr = vlyr.at[i, 2, 0:H].set(lp["bv"][0])
        vlyr = vlyr.at[i, 3, 0:H].set(lp["bo"][0])
        vlyr = vlyr.at[i, 4, 0:FF].set(lp["bf1"][0])
        vlyr = vlyr.at[i, 5, 0:H].set(lp["bf2"][0])
        vlyr = vlyr.at[i, 6, 0:H].set(lp["g1"][0])
        vlyr = vlyr.at[i, 7, 0:H].set(lp["be1"][0])
        vlyr = vlyr.at[i, 8, 0:H].set(lp["g2"][0])
        vlyr = vlyr.at[i, 9, 0:H].set(lp["be2"][0])

    return {"spk_lut": p["spk_lut"], "wmisc": wmisc, "vmisc": vmisc,
            "wlyr": wlyr, "vlyr": vlyr}


# ----------------------------------------------------------------------------
# MainModel.forward
# ----------------------------------------------------------------------------
def main_model_forward(packed, sent_emb, spk, mask, mel, cfg):
    B, L = spk.shape
    H = cfg["hidden_size"]
    N = B * L
    maskf = mask.astype(jnp.float32)

    # glue: flatten + fuse inputs + embedding lookup + mask preprocessing
    inp = jnp.concatenate([sent_emb.reshape(N, -1), mel.reshape(N, -1)], axis=-1)
    spk_emb = jnp.take(packed["spk_lut"], spk.reshape(-1), axis=0)       # (N, H)
    mask_col = maskf.reshape(N, 1)

    # combined additive attention bias: -1e9 for cross-batch or invalid keys
    batch_ids = jnp.repeat(jnp.arange(B), L)
    same_batch = batch_ids[:, None] == batch_ids[None, :]
    key_valid = (maskf.reshape(-1) > 0.5)[None, :]
    attn_bias = jnp.where(same_batch & key_valid, 0.0, -1e9).astype(jnp.float32)

    packed_out = fused_forward(
        (inp, spk_emb, mask_col, attn_bias,
         packed["wmisc"], packed["vmisc"], packed["wlyr"], packed["vlyr"]),
        num_layers=cfg["outer_layer"], num_heads=cfg["head_num"],
        head_dim=H // cfg["head_num"], hidden=H,
        ffn=cfg["inner_layer"] * H, din_tot=inp.shape[1], n_rows=N)

    split_logit = packed_out[:, 0].reshape(B, L)          # .squeeze(-1)
    out_logit = packed_out[:, 1:5].reshape(B, L, 4)       # squeeze(-1) is a no-op
    final_logit = packed_out[:, 5].reshape(B, L)
    input_gate = packed_out[:, 6].reshape(B, L)

    init_logit = input_gate if (cfg["use_init"] and cfg["use_final"]) else None
    # TODO(synk): Pivot / TransformerXL / Longformer / GRU cores are not
    # defined in the provided source and are not implemented.
    return {"split_logit": split_logit,
            "out_logit": out_logit,
            "init_logit": init_logit,
            "final_logit": final_logit}


if __name__ == "__main__":
    cfg = dict(text_embd_dims=48, spk_num=6, hidden_size=32, dropout=0.1,
               num_labels=4, head_num=4, inner_layer=2, outer_layer=2,
               max_text_num=8, mel_width=5, mel_dim=16, chunk_size=4,
               chunk_num=2, gate_bias=0.0, use_gate=True, core="Transformer",
               use_shift=False, use_spk=True, use_mel=True, use_pivot=False,
               use_init=True, use_final=True)

    key = jax.random.PRNGKey(0)
    kp_, k1, k2, k3 = jax.random.split(key, 4)
    params = init_params(kp_, cfg)
    packed = pack_params(params, cfg)   # one-time packing, outside jit

    B, L = 2, cfg["max_text_num"]
    sent_emb = jax.random.normal(k1, (B, L, cfg["text_embd_dims"]), jnp.float32)
    spk = jax.random.randint(k2, (B, L), 0, cfg["spk_num"])
    mask = jnp.concatenate([jnp.ones((B, L - 2), jnp.int32),
                            jnp.zeros((B, 2), jnp.int32)], axis=1)
    mel = jax.random.normal(k3, (B, L, cfg["mel_width"], cfg["mel_dim"]),
                            jnp.float32)

    fwd = jax.jit(lambda pp, a, b, c, d: main_model_forward(pp, a, b, c, d, cfg))
    out = fwd(packed, sent_emb, spk, mask, mel)
    jax.block_until_ready(out)

    assert out["split_logit"].shape == (B, L)
    assert out["out_logit"].shape == (B, L, 4)
    assert out["init_logit"].shape == (B, L)
    assert out["final_logit"].shape == (B, L)
    print("KERNEL_OK")
</pallas_src>

<mosaic_0001>
module attributes {stable_mosaic.version = 11 : i64} {
  func.func @_fused_forward_kernel(%arg0: memref<16x128xf32, #tpu.memory_space<vmem>>, %arg1: memref<16x32xf32, #tpu.memory_space<vmem>>, %arg2: memref<16x1xf32, #tpu.memory_space<vmem>>, %arg3: memref<16x16xf32, #tpu.memory_space<vmem>>, %arg4: memref<448x96xf32, #tpu.memory_space<vmem>>, %arg5: memref<8x96xf32, #tpu.memory_space<vmem>>, %arg6: memref<2x224x64xf32, #tpu.memory_space<vmem>>, %arg7: memref<2x16x64xf32, #tpu.memory_space<vmem>>, %arg8: memref<16x8xf32, #tpu.memory_space<vmem>>) attributes {dimension_semantics = [], scalar_prefetch = 0 : i64, scratch_operands = 0 : i64, tpu.core_type = #tpu.core_type<tc>} {
    %c0 = arith.constant 0 : index
    %c0_0 = arith.constant 0 : index
    %0 = vector.load %arg0[%c0, %c0_0] : memref<16x128xf32, #tpu.memory_space<vmem>>, vector<16x128xf32>
    %c0_1 = arith.constant 0 : index
    %c0_2 = arith.constant 0 : index
    %1 = vector.load %arg1[%c0_1, %c0_2] : memref<16x32xf32, #tpu.memory_space<vmem>>, vector<16x32xf32>
    %c0_3 = arith.constant 0 : index
    %c0_4 = arith.constant 0 : index
    %2 = vector.load %arg2[%c0_3, %c0_4] : memref<16x1xf32, #tpu.memory_space<vmem>>, vector<16x1xf32>
    %c0_5 = arith.constant 0 : index
    %c0_6 = arith.constant 0 : index
    %3 = vector.load %arg3[%c0_5, %c0_6] : memref<16x16xf32, #tpu.memory_space<vmem>>, vector<16x16xf32>
    %c0_7 = arith.constant 0 : index
    %c0_8 = arith.constant 0 : index
    %4 = vector.load %arg4[%c0_7, %c0_8] : memref<448x96xf32, #tpu.memory_space<vmem>>, vector<128x96xf32>
    %cst = arith.constant dense<0.000000e+00> : vector<16x96xf32>
    %5 = tpu.matmul %0, %4, %cst {dimension_numbers = #tpu.dot_dimension_numbers<[1], [0], [0], [1], [0, 0, 1, 1], [], []>} : vector<16x128xf32>, vector<128x96xf32>, vector<16x96xf32> -> vector<16x96xf32>
    %c0_9 = arith.constant 0 : index
    %c0_10 = arith.constant 0 : index
    %6 = vector.load %arg5[%c0_9, %c0_10] : memref<8x96xf32, #tpu.memory_space<vmem>>, vector<1x96xf32>
    %7 = vector.broadcast %6 : vector<1x96xf32> to vector<16x96xf32>
    %8 = arith.addf %5, %7 : vector<16x96xf32>
    %9 = vector.extract_strided_slice %8 {offsets = [0, 0], sizes = [16, 32], strides = [1, 1]} : vector<16x96xf32> to vector<16x32xf32>
    %10 = vector.extract_strided_slice %8 {offsets = [0, 32], sizes = [16, 64], strides = [1, 1]} : vector<16x96xf32> to vector<16x64xf32>
    %11 = arith.mulf %10, %10 : vector<16x64xf32>
    %12 = arith.mulf %10, %11 : vector<16x64xf32>
    %cst_11 = arith.constant 4.471500e-02 : f32
    %13 = vector.broadcast %cst_11 : f32 to vector<16x64xf32>
    %14 = arith.mulf %13, %12 : vector<16x64xf32>
    %15 = arith.addf %10, %14 : vector<16x64xf32>
    %cst_12 = arith.constant 0.797884583 : f32
    %16 = vector.broadcast %cst_12 : f32 to vector<16x64xf32>
    %17 = arith.mulf %16, %15 : vector<16x64xf32>
    %18 = math.tanh %17 : vector<16x64xf32>
    %cst_13 = arith.constant 1.000000e+00 : f32
    %19 = vector.broadcast %cst_13 : f32 to vector<16x64xf32>
    %20 = arith.addf %19, %18 : vector<16x64xf32>
    %cst_14 = arith.constant 5.000000e-01 : f32
    %21 = vector.broadcast %cst_14 : f32 to vector<16x64xf32>
    %22 = arith.mulf %21, %20 : vector<16x64xf32>
    %23 = arith.mulf %10, %22 : vector<16x64xf32>
    %c128 = arith.constant 128 : index
    %c0_15 = arith.constant 0 : index
    %24 = vector.load %arg4[%c128, %c0_15] : memref<448x96xf32, #tpu.memory_space<vmem>>, vector<64x32xf32>
    %cst_16 = arith.constant dense<0.000000e+00> : vector<16x32xf32>
    %25 = tpu.matmul %23, %24, %cst_16 {dimension_numbers = #tpu.dot_dimension_numbers<[1], [0], [0], [1], [0, 0, 1, 1], [], []>} : vector<16x64xf32>, vector<64x32xf32>, vector<16x32xf32> -> vector<16x32xf32>
    %c1 = arith.constant 1 : index
    %c0_17 = arith.constant 0 : index
    %26 = vector.load %arg5[%c1, %c0_17] : memref<8x96xf32, #tpu.memory_space<vmem>>, vector<1x32xf32>
    %27 = vector.broadcast %26 : vector<1x32xf32> to vector<16x32xf32>
    %28 = arith.addf %25, %27 : vector<16x32xf32>
    %29 = arith.mulf %28, %28 : vector<16x32xf32>
    %30 = arith.mulf %28, %29 : vector<16x32xf32>
    %cst_18 = arith.constant 4.471500e-02 : f32
    %31 = vector.broadcast %cst_18 : f32 to vector<16x32xf32>
    %32 = arith.mulf %31, %30 : vector<16x32xf32>
    %33 = arith.addf %28, %32 : vector<16x32xf32>
    %cst_19 = arith.constant 0.797884583 : f32
    %34 = vector.broadcast %cst_19 : f32 to vector<16x32xf32>
    %35 = arith.mulf %34, %33 : vector<16x32xf32>
    %36 = math.tanh %35 : vector<16x32xf32>
    %cst_20 = arith.constant 1.000000e+00 : f32
    %37 = vector.broadcast %cst_20 : f32 to vector<16x32xf32>
    %38 = arith.addf %37, %36 : vector<16x32xf32>
    %cst_21 = arith.constant 5.000000e-01 : f32
    %39 = vector.broadcast %cst_21 : f32 to vector<16x32xf32>
    %40 = arith.mulf %39, %38 : vector<16x32xf32>
    %41 = arith.mulf %28, %40 : vector<16x32xf32>
    %c192 = arith.constant 192 : index
    %c0_22 = arith.constant 0 : index
    %42 = vector.load %arg4[%c192, %c0_22] : memref<448x96xf32, #tpu.memory_space<vmem>>, vector<32x32xf32>
    %cst_23 = arith.constant dense<0.000000e+00> : vector<16x32xf32>
    %43 = tpu.matmul %41, %42, %cst_23 {dimension_numbers = #tpu.dot_dimension_numbers<[1], [0], [0], [1], [0, 0, 1, 1], [], []>} : vector<16x32xf32>, vector<32x32xf32>, vector<16x32xf32> -> vector<16x32xf32>
    %c2 = arith.constant 2 : index
    %c0_24 = arith.constant 0 : index
    %44 = vector.load %arg5[%c2, %c0_24] : memref<8x96xf32, #tpu.memory_space<vmem>>, vector<1x32xf32>
    %45 = vector.broadcast %44 : vector<1x32xf32> to vector<16x32xf32>
    %46 = arith.addf %43, %45 : vector<16x32xf32>
    %47 = arith.addf %9, %1 : vector<16x32xf32>
    %48 = arith.addf %47, %46 : vector<16x32xf32>
    %c224 = arith.constant 224 : index
    %c0_25 = arith.constant 0 : index
    %49 = vector.load %arg4[%c224, %c0_25] : memref<448x96xf32, #tpu.memory_space<vmem>>, vector<32x1xf32>
    %cst_26 = arith.constant dense<0.000000e+00> : vector<16x1xf32>
    %50 = tpu.matmul %48, %49, %cst_26 {dimension_numbers = #tpu.dot_dimension_numbers<[1], [0], [0], [1], [0, 0, 1, 1], [], []>} : vector<16x32xf32>, vector<32x1xf32>, vector<16x1xf32> -> vector<16x1xf32>
    %c3 = arith.constant 3 : index
    %c0_27 = arith.constant 0 : index
    %51 = vector.load %arg5[%c3, %c0_27] : memref<8x96xf32, #tpu.memory_space<vmem>>, vector<1x1xf32>
    %52 = vector.broadcast %51 : vector<1x1xf32> to vector<16x1xf32>
    %53 = arith.addf %50, %52 : vector<16x1xf32>
    %54 = arith.negf %53 : vector<16x1xf32>
    %55 = math.exp %54 : vector<16x1xf32>
    %cst_28 = arith.constant 1.000000e+00 : f32
    %56 = vector.broadcast %cst_28 : f32 to vector<16x1xf32>
    %57 = arith.addf %56, %55 : vector<16x1xf32>
    %58 = arith.divf %56, %57 : vector<16x1xf32>
    %59 = vector.broadcast %58 : vector<16x1xf32> to vector<16x32xf32>
    %60 = arith.mulf %48, %59 : vector<16x32xf32>
    %61 = vector.broadcast %2 : vector<16x1xf32> to vector<16x32xf32>
    %62 = arith.mulf %60, %61 : vector<16x32xf32>
    %63 = tpu.iota {dimensions = array<i32: 1>} : vector<1x32xi32>
    %c0_i32 = arith.constant 0 : i32
    %64 = vector.broadcast %c0_i32 : i32 to vector<1x32xi32>
    %65 = arith.cmpi sge, %63, %64 : vector<1x32xi32>
    %c8_i32 = arith.constant 8 : i32
    %66 = vector.broadcast %c8_i32 : i32 to vector<1x32xi32>
    %67 = arith.cmpi slt, %63, %66 : vector<1x32xi32>
    %68 = arith.andi %65, %67 : vector<1x32xi1>
    %69 = arith.extui %68 : vector<1x32xi1> to vector<1x32xi32>
    %70 = arith.sitofp %69 : vector<1x32xi32> to vector<1x32xf32>
    %c8_i32_29 = arith.constant 8 : i32
    %71 = vector.broadcast %c8_i32_29 : i32 to vector<1x32xi32>
    %72 = arith.cmpi sge, %63, %71 : vector<1x32xi32>
    %c16_i32 = arith.constant 16 : i32
    %73 = vector.broadcast %c16_i32 : i32 to vector<1x32xi32>
    %74 = arith.cmpi slt, %63, %73 : vector<1x32xi32>
    %75 = arith.andi %72, %74 : vector<1x32xi1>
    %76 = arith.extui %75 : vector<1x32xi1> to vector<1x32xi32>
    %77 = arith.sitofp %76 : vector<1x32xi32> to vector<1x32xf32>
    %c16_i32_30 = arith.constant 16 : i32
    %78 = vector.broadcast %c16_i32_30 : i32 to vector<1x32xi32>
    %79 = arith.cmpi sge, %63, %78 : vector<1x32xi32>
    %c24_i32 = arith.constant 24 : i32
    %80 = vector.broadcast %c24_i32 : i32 to vector<1x32xi32>
    %81 = arith.cmpi slt, %63, %80 : vector<1x32xi32>
    %82 = arith.andi %79, %81 : vector<1x32xi1>
    %83 = arith.extui %82 : vector<1x32xi1> to vector<1x32xi32>
    %84 = arith.sitofp %83 : vector<1x32xi32> to vector<1x32xf32>
    %c24_i32_31 = arith.constant 24 : i32
    %85 = vector.broadcast %c24_i32_31 : i32 to vector<1x32xi32>
    %86 = arith.cmpi sge, %63, %85 : vector<1x32xi32>
    %c32_i32 = arith.constant 32 : i32
    %87 = vector.broadcast %c32_i32 : i32 to vector<1x32xi32>
    %88 = arith.cmpi slt, %63, %87 : vector<1x32xi32>
    %89 = arith.andi %86, %88 : vector<1x32xi1>
    %90 = arith.extui %89 : vector<1x32xi1> to vector<1x32xi32>
    %91 = arith.sitofp %90 : vector<1x32xi32> to vector<1x32xf32>
    %c0_32 = arith.constant 0 : index
    %c0_33 = arith.constant 0 : index
    %c0_34 = arith.constant 0 : index
    %92 = vector.load %arg6[%c0_32, %c0_33, %c0_34] : memref<2x224x64xf32, #tpu.memory_space<vmem>>, vector<1x32x32xf32>
    %93 = vector.shape_cast %92 : vector<1x32x32xf32> to vector<32x32xf32>
    %c0_35 = arith.constant 0 : index
    %c32 = arith.constant 32 : index
    %c0_36 = arith.constant 0 : index
    %94 = vector.load %arg6[%c0_35, %c32, %c0_36] : memref<2x224x64xf32, #tpu.memory_space<vmem>>, vector<1x32x32xf32>
    %95 = vector.shape_cast %94 : vector<1x32x32xf32> to vector<32x32xf32>
    %c0_37 = arith.constant 0 : index
    %c64 = arith.constant 64 : index
    %c0_38 = arith.constant 0 : index
    %96 = vector.load %arg6[%c0_37, %c64, %c0_38] : memref<2x224x64xf32, #tpu.memory_space<vmem>>, vector<1x32x32xf32>
    %97 = vector.shape_cast %96 : vector<1x32x32xf32> to vector<32x32xf32>
    %c0_39 = arith.constant 0 : index
    %c96 = arith.constant 96 : index
    %c0_40 = arith.constant 0 : index
    %98 = vector.load %arg6[%c0_39, %c96, %c0_40] : memref<2x224x64xf32, #tpu.memory_space<vmem>>, vector<1x32x32xf32>
    %99 = vector.shape_cast %98 : vector<1x32x32xf32> to vector<32x32xf32>
    %c0_41 = arith.constant 0 : index
    %c128_42 = arith.constant 128 : index
    %c0_43 = arith.constant 0 : index
    %100 = vector.load %arg6[%c0_41, %c128_42, %c0_43] : memref<2x224x64xf32, #tpu.memory_space<vmem>>, vector<1x32x64xf32>
    %101 = vector.shape_cast %100 : vector<1x32x64xf32> to vector<32x64xf32>
    %c0_44 = arith.constant 0 : index
    %c160 = arith.constant 160 : index
    %c0_45 = arith.constant 0 : index
    %102 = vector.load %arg6[%c0_44, %c160, %c0_45] : memref<2x224x64xf32, #tpu.memory_space<vmem>>, vector<1x64x32xf32>
    %103 = vector.shape_cast %102 : vector<1x64x32xf32> to vector<64x32xf32>
    %c0_46 = arith.constant 0 : index
    %c0_47 = arith.constant 0 : index
    %c0_48 = arith.constant 0 : index
    %104 = vector.load %arg7[%c0_46, %c0_47, %c0_48] : memref<2x16x64xf32, #tpu.memory_space<vmem>>, vector<1x1x32xf32>
    %105 = vector.shape_cast %104 : vector<1x1x32xf32> to vector<1x32xf32>
    %c0_49 = arith.constant 0 : index
    %c1_50 = arith.constant 1 : index
    %c0_51 = arith.constant 0 : index
    %106 = vector.load %arg7[%c0_49, %c1_50, %c0_51] : memref<2x16x64xf32, #tpu.memory_space<vmem>>, vector<1x1x32xf32>
    %107 = vector.shape_cast %106 : vector<1x1x32xf32> to vector<1x32xf32>
    %c0_52 = arith.constant 0 : index
    %c2_53 = arith.constant 2 : index
    %c0_54 = arith.constant 0 : index
    %108 = vector.load %arg7[%c0_52, %c2_53, %c0_54] : memref<2x16x64xf32, #tpu.memory_space<vmem>>, vector<1x1x32xf32>
    %109 = vector.shape_cast %108 : vector<1x1x32xf32> to vector<1x32xf32>
    %c0_55 = arith.constant 0 : index
    %c3_56 = arith.constant 3 : index
    %c0_57 = arith.constant 0 : index
    %110 = vector.load %arg7[%c0_55, %c3_56, %c0_57] : memref<2x16x64xf32, #tpu.memory_space<vmem>>, vector<1x1x32xf32>
    %111 = vector.shape_cast %110 : vector<1x1x32xf32> to vector<1x32xf32>
    %c0_58 = arith.constant 0 : index
    %c4 = arith.constant 4 : index
    %c0_59 = arith.constant 0 : index
    %112 = vector.load %arg7[%c0_58, %c4, %c0_59] : memref<2x16x64xf32, #tpu.memory_space<vmem>>, vector<1x1x64xf32>
    %113 = vector.shape_cast %112 : vector<1x1x64xf32> to vector<1x64xf32>
    %c0_60 = arith.constant 0 : index
    %c5 = arith.constant 5 : index
    %c0_61 = arith.constant 0 : index
    %114 = vector.load %arg7[%c0_60, %c5, %c0_61] : memref<2x16x64xf32, #tpu.memory_space<vmem>>, vector<1x1x32xf32>
    %115 = vector.shape_cast %114 : vector<1x1x32xf32> to vector<1x32xf32>
    %c0_62 = arith.constant 0 : index
    %c6 = arith.constant 6 : index
    %c0_63 = arith.constant 0 : index
    %116 = vector.load %arg7[%c0_62, %c6, %c0_63] : memref<2x16x64xf32, #tpu.memory_space<vmem>>, vector<1x1x32xf32>
    %117 = vector.shape_cast %116 : vector<1x1x32xf32> to vector<1x32xf32>
    %c0_64 = arith.constant 0 : index
    %c7 = arith.constant 7 : index
    %c0_65 = arith.constant 0 : index
    %118 = vector.load %arg7[%c0_64, %c7, %c0_65] : memref<2x16x64xf32, #tpu.memory_space<vmem>>, vector<1x1x32xf32>
    %119 = vector.shape_cast %118 : vector<1x1x32xf32> to vector<1x32xf32>
    %c0_66 = arith.constant 0 : index
    %c8 = arith.constant 8 : index
    %c0_67 = arith.constant 0 : index
    %120 = vector.load %arg7[%c0_66, %c8, %c0_67] : memref<2x16x64xf32, #tpu.memory_space<vmem>>, vector<1x1x32xf32>
    %121 = vector.shape_cast %120 : vector<1x1x32xf32> to vector<1x32xf32>
    %c0_68 = arith.constant 0 : index
    %c9 = arith.constant 9 : index
    %c0_69 = arith.constant 0 : index
    %122 = vector.load %arg7[%c0_68, %c9, %c0_69] : memref<2x16x64xf32, #tpu.memory_space<vmem>>, vector<1x1x32xf32>
    %123 = vector.shape_cast %122 : vector<1x1x32xf32> to vector<1x32xf32>
    %cst_70 = arith.constant dense<0.000000e+00> : vector<16x32xf32>
    %124 = tpu.matmul %62, %93, %cst_70 {dimension_numbers = #tpu.dot_dimension_numbers<[1], [0], [0], [1], [0, 0, 1, 1], [], []>} : vector<16x32xf32>, vector<32x32xf32>, vector<16x32xf32> -> vector<16x32xf32>
    %125 = vector.broadcast %105 : vector<1x32xf32> to vector<16x32xf32>
    %126 = arith.addf %124, %125 : vector<16x32xf32>
    %cst_71 = arith.constant dense<0.000000e+00> : vector<16x32xf32>
    %127 = tpu.matmul %62, %95, %cst_71 {dimension_numbers = #tpu.dot_dimension_numbers<[1], [0], [0], [1], [0, 0, 1, 1], [], []>} : vector<16x32xf32>, vector<32x32xf32>, vector<16x32xf32> -> vector<16x32xf32>
    %128 = vector.broadcast %107 : vector<1x32xf32> to vector<16x32xf32>
    %129 = arith.addf %127, %128 : vector<16x32xf32>
    %cst_72 = arith.constant dense<0.000000e+00> : vector<16x32xf32>
    %130 = tpu.matmul %62, %97, %cst_72 {dimension_numbers = #tpu.dot_dimension_numbers<[1], [0], [0], [1], [0, 0, 1, 1], [], []>} : vector<16x32xf32>, vector<32x32xf32>, vector<16x32xf32> -> vector<16x32xf32>
    %131 = vector.broadcast %109 : vector<1x32xf32> to vector<16x32xf32>
    %132 = arith.addf %130, %131 : vector<16x32xf32>
    %cst_73 = arith.constant 0.000000e+00 : f32
    %133 = vector.broadcast %cst_73 : f32 to vector<16x32xf32>
    %134 = vector.broadcast %70 : vector<1x32xf32> to vector<16x32xf32>
    %135 = arith.mulf %129, %134 : vector<16x32xf32>
    %cst_74 = arith.constant dense<0.000000e+00> : vector<16x16xf32>
    %136 = tpu.matmul %126, %135, %cst_74 {dimension_numbers = #tpu.dot_dimension_numbers<[1], [1], [0], [0], [0, 0, 1, 0], [], []>} : vector<16x32xf32>, vector<16x32xf32>, vector<16x16xf32> -> vector<16x16xf32>
    %cst_75 = arith.constant 0.353553385 : f32
    %137 = vector.broadcast %cst_75 : f32 to vector<16x16xf32>
    %138 = arith.mulf %136, %137 : vector<16x16xf32>
    %139 = arith.addf %138, %3 : vector<16x16xf32>
    %cst_76 = arith.constant dense<0xFF800000> : vector<16xf32>
    %140 = vector.multi_reduction <maximumf>, %139, %cst_76 [1] : vector<16x16xf32> to vector<16xf32>
    %141 = vector.shape_cast %140 : vector<16xf32> to vector<16x1xf32>
    %142 = vector.broadcast %141 : vector<16x1xf32> to vector<16x16xf32>
    %143 = arith.subf %139, %142 : vector<16x16xf32>
    %144 = math.exp %143 : vector<16x16xf32>
    %cst_77 = arith.constant dense<0.000000e+00> : vector<16xf32>
    %145 = vector.multi_reduction <add>, %144, %cst_77 [1] : vector<16x16xf32> to vector<16xf32>
    %146 = vector.shape_cast %145 : vector<16xf32> to vector<16x1xf32>
    %147 = tpu.reciprocal %146 {approx = true} : vector<16x1xf32> -> vector<16x1xf32>
    %148 = vector.broadcast %147 : vector<16x1xf32> to vector<16x16xf32>
    %149 = arith.mulf %144, %148 : vector<16x16xf32>
    %150 = vector.broadcast %70 : vector<1x32xf32> to vector<16x32xf32>
    %151 = arith.mulf %132, %150 : vector<16x32xf32>
    %cst_78 = arith.constant dense<0.000000e+00> : vector<16x32xf32>
    %152 = tpu.matmul %149, %151, %cst_78 {dimension_numbers = #tpu.dot_dimension_numbers<[1], [0], [0], [1], [0, 0, 1, 1], [], []>} : vector<16x16xf32>, vector<16x32xf32>, vector<16x32xf32> -> vector<16x32xf32>
    %153 = arith.addf %133, %152 : vector<16x32xf32>
    %154 = vector.broadcast %77 : vector<1x32xf32> to vector<16x32xf32>
    %155 = arith.mulf %129, %154 : vector<16x32xf32>
    %cst_79 = arith.constant dense<0.000000e+00> : vector<16x16xf32>
    %156 = tpu.matmul %126, %155, %cst_79 {dimension_numbers = #tpu.dot_dimension_numbers<[1], [1], [0], [0], [0, 0, 1, 0], [], []>} : vector<16x32xf32>, vector<16x32xf32>, vector<16x16xf32> -> vector<16x16xf32>
    %cst_80 = arith.constant 0.353553385 : f32
    %157 = vector.broadcast %cst_80 : f32 to vector<16x16xf32>
    %158 = arith.mulf %156, %157 : vector<16x16xf32>
    %159 = arith.addf %158, %3 : vector<16x16xf32>
    %cst_81 = arith.constant dense<0xFF800000> : vector<16xf32>
    %160 = vector.multi_reduction <maximumf>, %159, %cst_81 [1] : vector<16x16xf32> to vector<16xf32>
    %161 = vector.shape_cast %160 : vector<16xf32> to vector<16x1xf32>
    %162 = vector.broadcast %161 : vector<16x1xf32> to vector<16x16xf32>
    %163 = arith.subf %159, %162 : vector<16x16xf32>
    %164 = math.exp %163 : vector<16x16xf32>
    %cst_82 = arith.constant dense<0.000000e+00> : vector<16xf32>
    %165 = vector.multi_reduction <add>, %164, %cst_82 [1] : vector<16x16xf32> to vector<16xf32>
    %166 = vector.shape_cast %165 : vector<16xf32> to vector<16x1xf32>
    %167 = tpu.reciprocal %166 {approx = true} : vector<16x1xf32> -> vector<16x1xf32>
    %168 = vector.broadcast %167 : vector<16x1xf32> to vector<16x16xf32>
    %169 = arith.mulf %164, %168 : vector<16x16xf32>
    %170 = vector.broadcast %77 : vector<1x32xf32> to vector<16x32xf32>
    %171 = arith.mulf %132, %170 : vector<16x32xf32>
    %cst_83 = arith.constant dense<0.000000e+00> : vector<16x32xf32>
    %172 = tpu.matmul %169, %171, %cst_83 {dimension_numbers = #tpu.dot_dimension_numbers<[1], [0], [0], [1], [0, 0, 1, 1], [], []>} : vector<16x16xf32>, vector<16x32xf32>, vector<16x32xf32> -> vector<16x32xf32>
    %173 = arith.addf %153, %172 : vector<16x32xf32>
    %174 = vector.broadcast %84 : vector<1x32xf32> to vector<16x32xf32>
    %175 = arith.mulf %129, %174 : vector<16x32xf32>
    %cst_84 = arith.constant dense<0.000000e+00> : vector<16x16xf32>
    %176 = tpu.matmul %126, %175, %cst_84 {dimension_numbers = #tpu.dot_dimension_numbers<[1], [1], [0], [0], [0, 0, 1, 0], [], []>} : vector<16x32xf32>, vector<16x32xf32>, vector<16x16xf32> -> vector<16x16xf32>
    %cst_85 = arith.constant 0.353553385 : f32
    %177 = vector.broadcast %cst_85 : f32 to vector<16x16xf32>
    %178 = arith.mulf %176, %177 : vector<16x16xf32>
    %179 = arith.addf %178, %3 : vector<16x16xf32>
    %cst_86 = arith.constant dense<0xFF800000> : vector<16xf32>
    %180 = vector.multi_reduction <maximumf>, %179, %cst_86 [1] : vector<16x16xf32> to vector<16xf32>
    %181 = vector.shape_cast %180 : vector<16xf32> to vector<16x1xf32>
    %182 = vector.broadcast %181 : vector<16x1xf32> to vector<16x16xf32>
    %183 = arith.subf %179, %182 : vector<16x16xf32>
    %184 = math.exp %183 : vector<16x16xf32>
    %cst_87 = arith.constant dense<0.000000e+00> : vector<16xf32>
    %185 = vector.multi_reduction <add>, %184, %cst_87 [1] : vector<16x16xf32> to vector<16xf32>
    %186 = vector.shape_cast %185 : vector<16xf32> to vector<16x1xf32>
    %187 = tpu.reciprocal %186 {approx = true} : vector<16x1xf32> -> vector<16x1xf32>
    %188 = vector.broadcast %187 : vector<16x1xf32> to vector<16x16xf32>
    %189 = arith.mulf %184, %188 : vector<16x16xf32>
    %190 = vector.broadcast %84 : vector<1x32xf32> to vector<16x32xf32>
    %191 = arith.mulf %132, %190 : vector<16x32xf32>
    %cst_88 = arith.constant dense<0.000000e+00> : vector<16x32xf32>
    %192 = tpu.matmul %189, %191, %cst_88 {dimension_numbers = #tpu.dot_dimension_numbers<[1], [0], [0], [1], [0, 0, 1, 1], [], []>} : vector<16x16xf32>, vector<16x32xf32>, vector<16x32xf32> -> vector<16x32xf32>
    %193 = arith.addf %173, %192 : vector<16x32xf32>
    %194 = vector.broadcast %91 : vector<1x32xf32> to vector<16x32xf32>
    %195 = arith.mulf %129, %194 : vector<16x32xf32>
    %cst_89 = arith.constant dense<0.000000e+00> : vector<16x16xf32>
    %196 = tpu.matmul %126, %195, %cst_89 {dimension_numbers = #tpu.dot_dimension_numbers<[1], [1], [0], [0], [0, 0, 1, 0], [], []>} : vector<16x32xf32>, vector<16x32xf32>, vector<16x16xf32> -> vector<16x16xf32>
    %cst_90 = arith.constant 0.353553385 : f32
    %197 = vector.broadcast %cst_90 : f32 to vector<16x16xf32>
    %198 = arith.mulf %196, %197 : vector<16x16xf32>
    %199 = arith.addf %198, %3 : vector<16x16xf32>
    %cst_91 = arith.constant dense<0xFF800000> : vector<16xf32>
    %200 = vector.multi_reduction <maximumf>, %199, %cst_91 [1] : vector<16x16xf32> to vector<16xf32>
    %201 = vector.shape_cast %200 : vector<16xf32> to vector<16x1xf32>
    %202 = vector.broadcast %201 : vector<16x1xf32> to vector<16x16xf32>
    %203 = arith.subf %199, %202 : vector<16x16xf32>
    %204 = math.exp %203 : vector<16x16xf32>
    %cst_92 = arith.constant dense<0.000000e+00> : vector<16xf32>
    %205 = vector.multi_reduction <add>, %204, %cst_92 [1] : vector<16x16xf32> to vector<16xf32>
    %206 = vector.shape_cast %205 : vector<16xf32> to vector<16x1xf32>
    %207 = tpu.reciprocal %206 {approx = true} : vector<16x1xf32> -> vector<16x1xf32>
    %208 = vector.broadcast %207 : vector<16x1xf32> to vector<16x16xf32>
    %209 = arith.mulf %204, %208 : vector<16x16xf32>
    %210 = vector.broadcast %91 : vector<1x32xf32> to vector<16x32xf32>
    %211 = arith.mulf %132, %210 : vector<16x32xf32>
    %cst_93 = arith.constant dense<0.000000e+00> : vector<16x32xf32>
    %212 = tpu.matmul %209, %211, %cst_93 {dimension_numbers = #tpu.dot_dimension_numbers<[1], [0], [0], [1], [0, 0, 1, 1], [], []>} : vector<16x16xf32>, vector<16x32xf32>, vector<16x32xf32> -> vector<16x32xf32>
    %213 = arith.addf %193, %212 : vector<16x32xf32>
    %cst_94 = arith.constant dense<0.000000e+00> : vector<16x32xf32>
    %214 = tpu.matmul %213, %99, %cst_94 {dimension_numbers = #tpu.dot_dimension_numbers<[1], [0], [0], [1], [0, 0, 1, 1], [], []>} : vector<16x32xf32>, vector<32x32xf32>, vector<16x32xf32> -> vector<16x32xf32>
    %215 = vector.broadcast %111 : vector<1x32xf32> to vector<16x32xf32>
    %216 = arith.addf %214, %215 : vector<16x32xf32>
    %217 = arith.addf %62, %216 : vector<16x32xf32>
    %cst_95 = arith.constant dense<0.000000e+00> : vector<16xf32>
    %218 = vector.multi_reduction <add>, %217, %cst_95 [1] : vector<16x32xf32> to vector<16xf32>
    %219 = vector.shape_cast %218 : vector<16xf32> to vector<16x1xf32>
    %cst_96 = arith.constant 3.200000e+01 : f32
    %220 = vector.broadcast %cst_96 : f32 to vector<16x1xf32>
    %221 = arith.divf %219, %220 : vector<16x1xf32>
    %222 = vector.broadcast %221 : vector<16x1xf32> to vector<16x32xf32>
    %223 = arith.subf %217, %222 : vector<16x32xf32>
    %224 = arith.mulf %223, %223 : vector<16x32xf32>
    %cst_97 = arith.constant dense<0.000000e+00> : vector<16xf32>
    %225 = vector.multi_reduction <add>, %224, %cst_97 [1] : vector<16x32xf32> to vector<16xf32>
    %226 = vector.shape_cast %225 : vector<16xf32> to vector<16x1xf32>
    %cst_98 = arith.constant 3.200000e+01 : f32
    %227 = vector.broadcast %cst_98 : f32 to vector<16x1xf32>
    %228 = arith.divf %226, %227 : vector<16x1xf32>
    %229 = vector.broadcast %221 : vector<16x1xf32> to vector<16x32xf32>
    %230 = arith.subf %217, %229 : vector<16x32xf32>
    %cst_99 = arith.constant 9.99999974E-6 : f32
    %231 = vector.broadcast %cst_99 : f32 to vector<16x1xf32>
    %232 = arith.addf %228, %231 : vector<16x1xf32>
    %233 = math.rsqrt %232 : vector<16x1xf32>
    %234 = vector.broadcast %233 : vector<16x1xf32> to vector<16x32xf32>
    %235 = arith.mulf %230, %234 : vector<16x32xf32>
    %236 = vector.broadcast %117 : vector<1x32xf32> to vector<16x32xf32>
    %237 = arith.mulf %235, %236 : vector<16x32xf32>
    %238 = vector.broadcast %119 : vector<1x32xf32> to vector<16x32xf32>
    %239 = arith.addf %237, %238 : vector<16x32xf32>
    %cst_100 = arith.constant dense<0.000000e+00> : vector<16x64xf32>
    %240 = tpu.matmul %239, %101, %cst_100 {dimension_numbers = #tpu.dot_dimension_numbers<[1], [0], [0], [1], [0, 0, 1, 1], [], []>} : vector<16x32xf32>, vector<32x64xf32>, vector<16x64xf32> -> vector<16x64xf32>
    %241 = vector.broadcast %113 : vector<1x64xf32> to vector<16x64xf32>
    %242 = arith.addf %240, %241 : vector<16x64xf32>
    %243 = arith.mulf %242, %242 : vector<16x64xf32>
    %244 = arith.mulf %242, %243 : vector<16x64xf32>
    %cst_101 = arith.constant 4.471500e-02 : f32
    %245 = vector.broadcast %cst_101 : f32 to vector<16x64xf32>
    %246 = arith.mulf %245, %244 : vector<16x64xf32>
    %247 = arith.addf %242, %246 : vector<16x64xf32>
    %cst_102 = arith.constant 0.797884583 : f32
    %248 = vector.broadcast %cst_102 : f32 to vector<16x64xf32>
    %249 = arith.mulf %248, %247 : vector<16x64xf32>
    %250 = math.tanh %249 : vector<16x64xf32>
    %cst_103 = arith.constant 1.000000e+00 : f32
    %251 = vector.broadcast %cst_103 : f32 to vector<16x64xf32>
    %252 = arith.addf %251, %250 : vector<16x64xf32>
    %cst_104 = arith.constant 5.000000e-01 : f32
    %253 = vector.broadcast %cst_104 : f32 to vector<16x64xf32>
    %254 = arith.mulf %253, %252 : vector<16x64xf32>
    %255 = arith.mulf %242, %254 : vector<16x64xf32>
    %cst_105 = arith.constant dense<0.000000e+00> : vector<16x32xf32>
    %256 = tpu.matmul %255, %103, %cst_105 {dimension_numbers = #tpu.dot_dimension_numbers<[1], [0], [0], [1], [0, 0, 1, 1], [], []>} : vector<16x64xf32>, vector<64x32xf32>, vector<16x32xf32> -> vector<16x32xf32>
    %257 = vector.broadcast %115 : vector<1x32xf32> to vector<16x32xf32>
    %258 = arith.addf %256, %257 : vector<16x32xf32>
    %259 = arith.addf %239, %258 : vector<16x32xf32>
    %cst_106 = arith.constant dense<0.000000e+00> : vector<16xf32>
    %260 = vector.multi_reduction <add>, %259, %cst_106 [1] : vector<16x32xf32> to vector<16xf32>
    %261 = vector.shape_cast %260 : vector<16xf32> to vector<16x1xf32>
    %cst_107 = arith.constant 3.200000e+01 : f32
    %262 = vector.broadcast %cst_107 : f32 to vector<16x1xf32>
    %263 = arith.divf %261, %262 : vector<16x1xf32>
    %264 = vector.broadcast %263 : vector<16x1xf32> to vector<16x32xf32>
    %265 = arith.subf %259, %264 : vector<16x32xf32>
    %266 = arith.mulf %265, %265 : vector<16x32xf32>
    %cst_108 = arith.constant dense<0.000000e+00> : vector<16xf32>
    %267 = vector.multi_reduction <add>, %266, %cst_108 [1] : vector<16x32xf32> to vector<16xf32>
    %268 = vector.shape_cast %267 : vector<16xf32> to vector<16x1xf32>
    %cst_109 = arith.constant 3.200000e+01 : f32
    %269 = vector.broadcast %cst_109 : f32 to vector<16x1xf32>
    %270 = arith.divf %268, %269 : vector<16x1xf32>
    %271 = vector.broadcast %263 : vector<16x1xf32> to vector<16x32xf32>
    %272 = arith.subf %259, %271 : vector<16x32xf32>
    %cst_110 = arith.constant 9.99999974E-6 : f32
    %273 = vector.broadcast %cst_110 : f32 to vector<16x1xf32>
    %274 = arith.addf %270, %273 : vector<16x1xf32>
    %275 = math.rsqrt %274 : vector<16x1xf32>
    %276 = vector.broadcast %275 : vector<16x1xf32> to vector<16x32xf32>
    %277 = arith.mulf %272, %276 : vector<16x32xf32>
    %278 = vector.broadcast %121 : vector<1x32xf32> to vector<16x32xf32>
    %279 = arith.mulf %277, %278 : vector<16x32xf32>
    %280 = vector.broadcast %123 : vector<1x32xf32> to vector<16x32xf32>
    %281 = arith.addf %279, %280 : vector<16x32xf32>
    %c1_111 = arith.constant 1 : index
    %c0_112 = arith.constant 0 : index
    %c0_113 = arith.constant 0 : index
    %282 = vector.load %arg6[%c1_111, %c0_112, %c0_113] : memref<2x224x64xf32, #tpu.memory_space<vmem>>, vector<1x32x32xf32>
    %283 = vector.shape_cast %282 : vector<1x32x32xf32> to vector<32x32xf32>
    %c1_114 = arith.constant 1 : index
    %c32_115 = arith.constant 32 : index
    %c0_116 = arith.constant 0 : index
    %284 = vector.load %arg6[%c1_114, %c32_115, %c0_116] : memref<2x224x64xf32, #tpu.memory_space<vmem>>, vector<1x32x32xf32>
    %285 = vector.shape_cast %284 : vector<1x32x32xf32> to vector<32x32xf32>
    %c1_117 = arith.constant 1 : index
    %c64_118 = arith.constant 64 : index
    %c0_119 = arith.constant 0 : index
    %286 = vector.load %arg6[%c1_117, %c64_118, %c0_119] : memref<2x224x64xf32, #tpu.memory_space<vmem>>, vector<1x32x32xf32>
    %287 = vector.shape_cast %286 : vector<1x32x32xf32> to vector<32x32xf32>
    %c1_120 = arith.constant 1 : index
    %c96_121 = arith.constant 96 : index
    %c0_122 = arith.constant 0 : index
    %288 = vector.load %arg6[%c1_120, %c96_121, %c0_122] : memref<2x224x64xf32, #tpu.memory_space<vmem>>, vector<1x32x32xf32>
    %289 = vector.shape_cast %288 : vector<1x32x32xf32> to vector<32x32xf32>
    %c1_123 = arith.constant 1 : index
    %c128_124 = arith.constant 128 : index
    %c0_125 = arith.constant 0 : index
    %290 = vector.load %arg6[%c1_123, %c128_124, %c0_125] : memref<2x224x64xf32, #tpu.memory_space<vmem>>, vector<1x32x64xf32>
    %291 = vector.shape_cast %290 : vector<1x32x64xf32> to vector<32x64xf32>
    %c1_126 = arith.constant 1 : index
    %c160_127 = arith.constant 160 : index
    %c0_128 = arith.constant 0 : index
    %292 = vector.load %arg6[%c1_126, %c160_127, %c0_128] : memref<2x224x64xf32, #tpu.memory_space<vmem>>, vector<1x64x32xf32>
    %293 = vector.shape_cast %292 : vector<1x64x32xf32> to vector<64x32xf32>
    %c1_129 = arith.constant 1 : index
    %c0_130 = arith.constant 0 : index
    %c0_131 = arith.constant 0 : index
    %294 = vector.load %arg7[%c1_129, %c0_130, %c0_131] : memref<2x16x64xf32, #tpu.memory_space<vmem>>, vector<1x1x32xf32>
    %295 = vector.shape_cast %294 : vector<1x1x32xf32> to vector<1x32xf32>
    %c1_132 = arith.constant 1 : index
    %c1_133 = arith.constant 1 : index
    %c0_134 = arith.constant 0 : index
    %296 = vector.load %arg7[%c1_132, %c1_133, %c0_134] : memref<2x16x64xf32, #tpu.memory_space<vmem>>, vector<1x1x32xf32>
    %297 = vector.shape_cast %296 : vector<1x1x32xf32> to vector<1x32xf32>
    %c1_135 = arith.constant 1 : index
    %c2_136 = arith.constant 2 : index
    %c0_137 = arith.constant 0 : index
    %298 = vector.load %arg7[%c1_135, %c2_136, %c0_137] : memref<2x16x64xf32, #tpu.memory_space<vmem>>, vector<1x1x32xf32>
    %299 = vector.shape_cast %298 : vector<1x1x32xf32> to vector<1x32xf32>
    %c1_138 = arith.constant 1 : index
    %c3_139 = arith.constant 3 : index
    %c0_140 = arith.constant 0 : index
    %300 = vector.load %arg7[%c1_138, %c3_139, %c0_140] : memref<2x16x64xf32, #tpu.memory_space<vmem>>, vector<1x1x32xf32>
    %301 = vector.shape_cast %300 : vector<1x1x32xf32> to vector<1x32xf32>
    %c1_141 = arith.constant 1 : index
    %c4_142 = arith.constant 4 : index
    %c0_143 = arith.constant 0 : index
    %302 = vector.load %arg7[%c1_141, %c4_142, %c0_143] : memref<2x16x64xf32, #tpu.memory_space<vmem>>, vector<1x1x64xf32>
    %303 = vector.shape_cast %302 : vector<1x1x64xf32> to vector<1x64xf32>
    %c1_144 = arith.constant 1 : index
    %c5_145 = arith.constant 5 : index
    %c0_146 = arith.constant 0 : index
    %304 = vector.load %arg7[%c1_144, %c5_145, %c0_146] : memref<2x16x64xf32, #tpu.memory_space<vmem>>, vector<1x1x32xf32>
    %305 = vector.shape_cast %304 : vector<1x1x32xf32> to vector<1x32xf32>
    %c1_147 = arith.constant 1 : index
    %c6_148 = arith.constant 6 : index
    %c0_149 = arith.constant 0 : index
    %306 = vector.load %arg7[%c1_147, %c6_148, %c0_149] : memref<2x16x64xf32, #tpu.memory_space<vmem>>, vector<1x1x32xf32>
    %307 = vector.shape_cast %306 : vector<1x1x32xf32> to vector<1x32xf32>
    %c1_150 = arith.constant 1 : index
    %c7_151 = arith.constant 7 : index
    %c0_152 = arith.constant 0 : index
    %308 = vector.load %arg7[%c1_150, %c7_151, %c0_152] : memref<2x16x64xf32, #tpu.memory_space<vmem>>, vector<1x1x32xf32>
    %309 = vector.shape_cast %308 : vector<1x1x32xf32> to vector<1x32xf32>
    %c1_153 = arith.constant 1 : index
    %c8_154 = arith.constant 8 : index
    %c0_155 = arith.constant 0 : index
    %310 = vector.load %arg7[%c1_153, %c8_154, %c0_155] : memref<2x16x64xf32, #tpu.memory_space<vmem>>, vector<1x1x32xf32>
    %311 = vector.shape_cast %310 : vector<1x1x32xf32> to vector<1x32xf32>
    %c1_156 = arith.constant 1 : index
    %c9_157 = arith.constant 9 : index
    %c0_158 = arith.constant 0 : index
    %312 = vector.load %arg7[%c1_156, %c9_157, %c0_158] : memref<2x16x64xf32, #tpu.memory_space<vmem>>, vector<1x1x32xf32>
    %313 = vector.shape_cast %312 : vector<1x1x32xf32> to vector<1x32xf32>
    %cst_159 = arith.constant dense<0.000000e+00> : vector<16x32xf32>
    %314 = tpu.matmul %281, %283, %cst_159 {dimension_numbers = #tpu.dot_dimension_numbers<[1], [0], [0], [1], [0, 0, 1, 1], [], []>} : vector<16x32xf32>, vector<32x32xf32>, vector<16x32xf32> -> vector<16x32xf32>
    %315 = vector.broadcast %295 : vector<1x32xf32> to vector<16x32xf32>
    %316 = arith.addf %314, %315 : vector<16x32xf32>
    %cst_160 = arith.constant dense<0.000000e+00> : vector<16x32xf32>
    %317 = tpu.matmul %281, %285, %cst_160 {dimension_numbers = #tpu.dot_dimension_numbers<[1], [0], [0], [1], [0, 0, 1, 1], [], []>} : vector<16x32xf32>, vector<32x32xf32>, vector<16x32xf32> -> vector<16x32xf32>
    %318 = vector.broadcast %297 : vector<1x32xf32> to vector<16x32xf32>
    %319 = arith.addf %317, %318 : vector<16x32xf32>
    %cst_161 = arith.constant dense<0.000000e+00> : vector<16x32xf32>
    %320 = tpu.matmul %281, %287, %cst_161 {dimension_numbers = #tpu.dot_dimension_numbers<[1], [0], [0], [1], [0, 0, 1, 1], [], []>} : vector<16x32xf32>, vector<32x32xf32>, vector<16x32xf32> -> vector<16x32xf32>
    %321 = vector.broadcast %299 : vector<1x32xf32> to vector<16x32xf32>
    %322 = arith.addf %320, %321 : vector<16x32xf32>
    %cst_162 = arith.constant 0.000000e+00 : f32
    %323 = vector.broadcast %cst_162 : f32 to vector<16x32xf32>
    %324 = vector.broadcast %70 : vector<1x32xf32> to vector<16x32xf32>
    %325 = arith.mulf %319, %324 : vector<16x32xf32>
    %cst_163 = arith.constant dense<0.000000e+00> : vector<16x16xf32>
    %326 = tpu.matmul %316, %325, %cst_163 {dimension_numbers = #tpu.dot_dimension_numbers<[1], [1], [0], [0], [0, 0, 1, 0], [], []>} : vector<16x32xf32>, vector<16x32xf32>, vector<16x16xf32> -> vector<16x16xf32>
    %cst_164 = arith.constant 0.353553385 : f32
    %327 = vector.broadcast %cst_164 : f32 to vector<16x16xf32>
    %328 = arith.mulf %326, %327 : vector<16x16xf32>
    %329 = arith.addf %328, %3 : vector<16x16xf32>
    %cst_165 = arith.constant dense<0xFF800000> : vector<16xf32>
    %330 = vector.multi_reduction <maximumf>, %329, %cst_165 [1] : vector<16x16xf32> to vector<16xf32>
    %331 = vector.shape_cast %330 : vector<16xf32> to vector<16x1xf32>
    %332 = vector.broadcast %331 : vector<16x1xf32> to vector<16x16xf32>
    %333 = arith.subf %329, %332 : vector<16x16xf32>
    %334 = math.exp %333 : vector<16x16xf32>
    %cst_166 = arith.constant dense<0.000000e+00> : vector<16xf32>
    %335 = vector.multi_reduction <add>, %334, %cst_166 [1] : vector<16x16xf32> to vector<16xf32>
    %336 = vector.shape_cast %335 : vector<16xf32> to vector<16x1xf32>
    %337 = tpu.reciprocal %336 {approx = true} : vector<16x1xf32> -> vector<16x1xf32>
    %338 = vector.broadcast %337 : vector<16x1xf32> to vector<16x16xf32>
    %339 = arith.mulf %334, %338 : vector<16x16xf32>
    %340 = vector.broadcast %70 : vector<1x32xf32> to vector<16x32xf32>
    %341 = arith.mulf %322, %340 : vector<16x32xf32>
    %cst_167 = arith.constant dense<0.000000e+00> : vector<16x32xf32>
    %342 = tpu.matmul %339, %341, %cst_167 {dimension_numbers = #tpu.dot_dimension_numbers<[1], [0], [0], [1], [0, 0, 1, 1], [], []>} : vector<16x16xf32>, vector<16x32xf32>, vector<16x32xf32> -> vector<16x32xf32>
    %343 = arith.addf %323, %342 : vector<16x32xf32>
    %344 = vector.broadcast %77 : vector<1x32xf32> to vector<16x32xf32>
    %345 = arith.mulf %319, %344 : vector<16x32xf32>
    %cst_168 = arith.constant dense<0.000000e+00> : vector<16x16xf32>
    %346 = tpu.matmul %316, %345, %cst_168 {dimension_numbers = #tpu.dot_dimension_numbers<[1], [1], [0], [0], [0, 0, 1, 0], [], []>} : vector<16x32xf32>, vector<16x32xf32>, vector<16x16xf32> -> vector<16x16xf32>
    %cst_169 = arith.constant 0.353553385 : f32
    %347 = vector.broadcast %cst_169 : f32 to vector<16x16xf32>
    %348 = arith.mulf %346, %347 : vector<16x16xf32>
    %349 = arith.addf %348, %3 : vector<16x16xf32>
    %cst_170 = arith.constant dense<0xFF800000> : vector<16xf32>
    %350 = vector.multi_reduction <maximumf>, %349, %cst_170 [1] : vector<16x16xf32> to vector<16xf32>
    %351 = vector.shape_cast %350 : vector<16xf32> to vector<16x1xf32>
    %352 = vector.broadcast %351 : vector<16x1xf32> to vector<16x16xf32>
    %353 = arith.subf %349, %352 : vector<16x16xf32>
    %354 = math.exp %353 : vector<16x16xf32>
    %cst_171 = arith.constant dense<0.000000e+00> : vector<16xf32>
    %355 = vector.multi_reduction <add>, %354, %cst_171 [1] : vector<16x16xf32> to vector<16xf32>
    %356 = vector.shape_cast %355 : vector<16xf32> to vector<16x1xf32>
    %357 = tpu.reciprocal %356 {approx = true} : vector<16x1xf32> -> vector<16x1xf32>
    %358 = vector.broadcast %357 : vector<16x1xf32> to vector<16x16xf32>
    %359 = arith.mulf %354, %358 : vector<16x16xf32>
    %360 = vector.broadcast %77 : vector<1x32xf32> to vector<16x32xf32>
    %361 = arith.mulf %322, %360 : vector<16x32xf32>
    %cst_172 = arith.constant dense<0.000000e+00> : vector<16x32xf32>
    %362 = tpu.matmul %359, %361, %cst_172 {dimension_numbers = #tpu.dot_dimension_numbers<[1], [0], [0], [1], [0, 0, 1, 1], [], []>} : vector<16x16xf32>, vector<16x32xf32>, vector<16x32xf32> -> vector<16x32xf32>
    %363 = arith.addf %343, %362 : vector<16x32xf32>
    %364 = vector.broadcast %84 : vector<1x32xf32> to vector<16x32xf32>
    %365 = arith.mulf %319, %364 : vector<16x32xf32>
    %cst_173 = arith.constant dense<0.000000e+00> : vector<16x16xf32>
    %366 = tpu.matmul %316, %365, %cst_173 {dimension_numbers = #tpu.dot_dimension_numbers<[1], [1], [0], [0], [0, 0, 1, 0], [], []>} : vector<16x32xf32>, vector<16x32xf32>, vector<16x16xf32> -> vector<16x16xf32>
    %cst_174 = arith.constant 0.353553385 : f32
    %367 = vector.broadcast %cst_174 : f32 to vector<16x16xf32>
    %368 = arith.mulf %366, %367 : vector<16x16xf32>
    %369 = arith.addf %368, %3 : vector<16x16xf32>
    %cst_175 = arith.constant dense<0xFF800000> : vector<16xf32>
    %370 = vector.multi_reduction <maximumf>, %369, %cst_175 [1] : vector<16x16xf32> to vector<16xf32>
    %371 = vector.shape_cast %370 : vector<16xf32> to vector<16x1xf32>
    %372 = vector.broadcast %371 : vector<16x1xf32> to vector<16x16xf32>
    %373 = arith.subf %369, %372 : vector<16x16xf32>
    %374 = math.exp %373 : vector<16x16xf32>
    %cst_176 = arith.constant dense<0.000000e+00> : vector<16xf32>
    %375 = vector.multi_reduction <add>, %374, %cst_176 [1] : vector<16x16xf32> to vector<16xf32>
    %376 = vector.shape_cast %375 : vector<16xf32> to vector<16x1xf32>
    %377 = tpu.reciprocal %376 {approx = true} : vector<16x1xf32> -> vector<16x1xf32>
    %378 = vector.broadcast %377 : vector<16x1xf32> to vector<16x16xf32>
    %379 = arith.mulf %374, %378 : vector<16x16xf32>
    %380 = vector.broadcast %84 : vector<1x32xf32> to vector<16x32xf32>
    %381 = arith.mulf %322, %380 : vector<16x32xf32>
    %cst_177 = arith.constant dense<0.000000e+00> : vector<16x32xf32>
    %382 = tpu.matmul %379, %381, %cst_177 {dimension_numbers = #tpu.dot_dimension_numbers<[1], [0], [0], [1], [0, 0, 1, 1], [], []>} : vector<16x16xf32>, vector<16x32xf32>, vector<16x32xf32> -> vector<16x32xf32>
    %383 = arith.addf %363, %382 : vector<16x32xf32>
    %384 = vector.broadcast %91 : vector<1x32xf32> to vector<16x32xf32>
    %385 = arith.mulf %319, %384 : vector<16x32xf32>
    %cst_178 = arith.constant dense<0.000000e+00> : vector<16x16xf32>
    %386 = tpu.matmul %316, %385, %cst_178 {dimension_numbers = #tpu.dot_dimension_numbers<[1], [1], [0], [0], [0, 0, 1, 0], [], []>} : vector<16x32xf32>, vector<16x32xf32>, vector<16x16xf32> -> vector<16x16xf32>
    %cst_179 = arith.constant 0.353553385 : f32
    %387 = vector.broadcast %cst_179 : f32 to vector<16x16xf32>
    %388 = arith.mulf %386, %387 : vector<16x16xf32>
    %389 = arith.addf %388, %3 : vector<16x16xf32>
    %cst_180 = arith.constant dense<0xFF800000> : vector<16xf32>
    %390 = vector.multi_reduction <maximumf>, %389, %cst_180 [1] : vector<16x16xf32> to vector<16xf32>
    %391 = vector.shape_cast %390 : vector<16xf32> to vector<16x1xf32>
    %392 = vector.broadcast %391 : vector<16x1xf32> to vector<16x16xf32>
    %393 = arith.subf %389, %392 : vector<16x16xf32>
    %394 = math.exp %393 : vector<16x16xf32>
    %cst_181 = arith.constant dense<0.000000e+00> : vector<16xf32>
    %395 = vector.multi_reduction <add>, %394, %cst_181 [1] : vector<16x16xf32> to vector<16xf32>
    %396 = vector.shape_cast %395 : vector<16xf32> to vector<16x1xf32>
    %397 = tpu.reciprocal %396 {approx = true} : vector<16x1xf32> -> vector<16x1xf32>
    %398 = vector.broadcast %397 : vector<16x1xf32> to vector<16x16xf32>
    %399 = arith.mulf %394, %398 : vector<16x16xf32>
    %400 = vector.broadcast %91 : vector<1x32xf32> to vector<16x32xf32>
    %401 = arith.mulf %322, %400 : vector<16x32xf32>
    %cst_182 = arith.constant dense<0.000000e+00> : vector<16x32xf32>
    %402 = tpu.matmul %399, %401, %cst_182 {dimension_numbers = #tpu.dot_dimension_numbers<[1], [0], [0], [1], [0, 0, 1, 1], [], []>} : vector<16x16xf32>, vector<16x32xf32>, vector<16x32xf32> -> vector<16x32xf32>
    %403 = arith.addf %383, %402 : vector<16x32xf32>
    %cst_183 = arith.constant dense<0.000000e+00> : vector<16x32xf32>
    %404 = tpu.matmul %403, %289, %cst_183 {dimension_numbers = #tpu.dot_dimension_numbers<[1], [0], [0], [1], [0, 0, 1, 1], [], []>} : vector<16x32xf32>, vector<32x32xf32>, vector<16x32xf32> -> vector<16x32xf32>
    %405 = vector.broadcast %301 : vector<1x32xf32> to vector<16x32xf32>
    %406 = arith.addf %404, %405 : vector<16x32xf32>
    %407 = arith.addf %281, %406 : vector<16x32xf32>
    %cst_184 = arith.constant dense<0.000000e+00> : vector<16xf32>
    %408 = vector.multi_reduction <add>, %407, %cst_184 [1] : vector<16x32xf32> to vector<16xf32>
    %409 = vector.shape_cast %408 : vector<16xf32> to vector<16x1xf32>
    %cst_185 = arith.constant 3.200000e+01 : f32
    %410 = vector.broadcast %cst_185 : f32 to vector<16x1xf32>
    %411 = arith.divf %409, %410 : vector<16x1xf32>
    %412 = vector.broadcast %411 : vector<16x1xf32> to vector<16x32xf32>
    %413 = arith.subf %407, %412 : vector<16x32xf32>
    %414 = arith.mulf %413, %413 : vector<16x32xf32>
    %cst_186 = arith.constant dense<0.000000e+00> : vector<16xf32>
    %415 = vector.multi_reduction <add>, %414, %cst_186 [1] : vector<16x32xf32> to vector<16xf32>
    %416 = vector.shape_cast %415 : vector<16xf32> to vector<16x1xf32>
    %cst_187 = arith.constant 3.200000e+01 : f32
    %417 = vector.broadcast %cst_187 : f32 to vector<16x1xf32>
    %418 = arith.divf %416, %417 : vector<16x1xf32>
    %419 = vector.broadcast %411 : vector<16x1xf32> to vector<16x32xf32>
    %420 = arith.subf %407, %419 : vector<16x32xf32>
    %cst_188 = arith.constant 9.99999974E-6 : f32
    %421 = vector.broadcast %cst_188 : f32 to vector<16x1xf32>
    %422 = arith.addf %418, %421 : vector<16x1xf32>
    %423 = math.rsqrt %422 : vector<16x1xf32>
    %424 = vector.broadcast %423 : vector<16x1xf32> to vector<16x32xf32>
    %425 = arith.mulf %420, %424 : vector<16x32xf32>
    %426 = vector.broadcast %307 : vector<1x32xf32> to vector<16x32xf32>
    %427 = arith.mulf %425, %426 : vector<16x32xf32>
    %428 = vector.broadcast %309 : vector<1x32xf32> to vector<16x32xf32>
    %429 = arith.addf %427, %428 : vector<16x32xf32>
    %cst_189 = arith.constant dense<0.000000e+00> : vector<16x64xf32>
    %430 = tpu.matmul %429, %291, %cst_189 {dimension_numbers = #tpu.dot_dimension_numbers<[1], [0], [0], [1], [0, 0, 1, 1], [], []>} : vector<16x32xf32>, vector<32x64xf32>, vector<16x64xf32> -> vector<16x64xf32>
    %431 = vector.broadcast %303 : vector<1x64xf32> to vector<16x64xf32>
    %432 = arith.addf %430, %431 : vector<16x64xf32>
    %433 = arith.mulf %432, %432 : vector<16x64xf32>
    %434 = arith.mulf %432, %433 : vector<16x64xf32>
    %cst_190 = arith.constant 4.471500e-02 : f32
    %435 = vector.broadcast %cst_190 : f32 to vector<16x64xf32>
    %436 = arith.mulf %435, %434 : vector<16x64xf32>
    %437 = arith.addf %432, %436 : vector<16x64xf32>
    %cst_191 = arith.constant 0.797884583 : f32
    %438 = vector.broadcast %cst_191 : f32 to vector<16x64xf32>
    %439 = arith.mulf %438, %437 : vector<16x64xf32>
    %440 = math.tanh %439 : vector<16x64xf32>
    %cst_192 = arith.constant 1.000000e+00 : f32
    %441 = vector.broadcast %cst_192 : f32 to vector<16x64xf32>
    %442 = arith.addf %441, %440 : vector<16x64xf32>
    %cst_193 = arith.constant 5.000000e-01 : f32
    %443 = vector.broadcast %cst_193 : f32 to vector<16x64xf32>
    %444 = arith.mulf %443, %442 : vector<16x64xf32>
    %445 = arith.mulf %432, %444 : vector<16x64xf32>
    %cst_194 = arith.constant dense<0.000000e+00> : vector<16x32xf32>
    %446 = tpu.matmul %445, %293, %cst_194 {dimension_numbers = #tpu.dot_dimension_numbers<[1], [0], [0], [1], [0, 0, 1, 1], [], []>} : vector<16x64xf32>, vector<64x32xf32>, vector<16x32xf32> -> vector<16x32xf32>
    %447 = vector.broadcast %305 : vector<1x32xf32> to vector<16x32xf32>
    %448 = arith.addf %446, %447 : vector<16x32xf32>
    %449 = arith.addf %429, %448 : vector<16x32xf32>
    %cst_195 = arith.constant dense<0.000000e+00> : vector<16xf32>
    %450 = vector.multi_reduction <add>, %449, %cst_195 [1] : vector<16x32xf32> to vector<16xf32>
    %451 = vector.shape_cast %450 : vector<16xf32> to vector<16x1xf32>
    %cst_196 = arith.constant 3.200000e+01 : f32
    %452 = vector.broadcast %cst_196 : f32 to vector<16x1xf32>
    %453 = arith.divf %451, %452 : vector<16x1xf32>
    %454 = vector.broadcast %453 : vector<16x1xf32> to vector<16x32xf32>
    %455 = arith.subf %449, %454 : vector<16x32xf32>
    %456 = arith.mulf %455, %455 : vector<16x32xf32>
    %cst_197 = arith.constant dense<0.000000e+00> : vector<16xf32>
    %457 = vector.multi_reduction <add>, %456, %cst_197 [1] : vector<16x32xf32> to vector<16xf32>
    %458 = vector.shape_cast %457 : vector<16xf32> to vector<16x1xf32>
    %cst_198 = arith.constant 3.200000e+01 : f32
    %459 = vector.broadcast %cst_198 : f32 to vector<16x1xf32>
    %460 = arith.divf %458, %459 : vector<16x1xf32>
    %461 = vector.broadcast %453 : vector<16x1xf32> to vector<16x32xf32>
    %462 = arith.subf %449, %461 : vector<16x32xf32>
    %cst_199 = arith.constant 9.99999974E-6 : f32
    %463 = vector.broadcast %cst_199 : f32 to vector<16x1xf32>
    %464 = arith.addf %460, %463 : vector<16x1xf32>
    %465 = math.rsqrt %464 : vector<16x1xf32>
    %466 = vector.broadcast %465 : vector<16x1xf32> to vector<16x32xf32>
    %467 = arith.mulf %462, %466 : vector<16x32xf32>
    %468 = vector.broadcast %311 : vector<1x32xf32> to vector<16x32xf32>
    %469 = arith.mulf %467, %468 : vector<16x32xf32>
    %470 = vector.broadcast %313 : vector<1x32xf32> to vector<16x32xf32>
    %471 = arith.addf %469, %470 : vector<16x32xf32>
    %c256 = arith.constant 256 : index
    %c0_200 = arith.constant 0 : index
    %472 = vector.load %arg4[%c256, %c0_200] : memref<448x96xf32, #tpu.memory_space<vmem>>, vector<32x64xf32>
    %cst_201 = arith.constant dense<0.000000e+00> : vector<16x64xf32>
    %473 = tpu.matmul %471, %472, %cst_201 {dimension_numbers = #tpu.dot_dimension_numbers<[1], [0], [0], [1], [0, 0, 1, 1], [], []>} : vector<16x32xf32>, vector<32x64xf32>, vector<16x64xf32> -> vector<16x64xf32>
    %c4_202 = arith.constant 4 : index
    %c0_203 = arith.constant 0 : index
    %474 = vector.load %arg5[%c4_202, %c0_203] : memref<8x96xf32, #tpu.memory_space<vmem>>, vector<1x64xf32>
    %475 = vector.broadcast %474 : vector<1x64xf32> to vector<16x64xf32>
    %476 = arith.addf %473, %475 : vector<16x64xf32>
    %477 = arith.mulf %476, %476 : vector<16x64xf32>
    %478 = arith.mulf %476, %477 : vector<16x64xf32>
    %cst_204 = arith.constant 4.471500e-02 : f32
    %479 = vector.broadcast %cst_204 : f32 to vector<16x64xf32>
    %480 = arith.mulf %479, %478 : vector<16x64xf32>
    %481 = arith.addf %476, %480 : vector<16x64xf32>
    %cst_205 = arith.constant 0.797884583 : f32
    %482 = vector.broadcast %cst_205 : f32 to vector<16x64xf32>
    %483 = arith.mulf %482, %481 : vector<16x64xf32>
    %484 = math.tanh %483 : vector<16x64xf32>
    %cst_206 = arith.constant 1.000000e+00 : f32
    %485 = vector.broadcast %cst_206 : f32 to vector<16x64xf32>
    %486 = arith.addf %485, %484 : vector<16x64xf32>
    %cst_207 = arith.constant 5.000000e-01 : f32
    %487 = vector.broadcast %cst_207 : f32 to vector<16x64xf32>
    %488 = arith.mulf %487, %486 : vector<16x64xf32>
    %489 = arith.mulf %476, %488 : vector<16x64xf32>
    %c288 = arith.constant 288 : index
    %c0_208 = arith.constant 0 : index
    %490 = vector.load %arg4[%c288, %c0_208] : memref<448x96xf32, #tpu.memory_space<vmem>>, vector<64x64xf32>
    %cst_209 = arith.constant dense<0.000000e+00> : vector<16x64xf32>
    %491 = tpu.matmul %489, %490, %cst_209 {dimension_numbers = #tpu.dot_dimension_numbers<[1], [0], [0], [1], [0, 0, 1, 1], [], []>} : vector<16x64xf32>, vector<64x64xf32>, vector<16x64xf32> -> vector<16x64xf32>
    %c5_210 = arith.constant 5 : index
    %c0_211 = arith.constant 0 : index
    %492 = vector.load %arg5[%c5_210, %c0_211] : memref<8x96xf32, #tpu.memory_space<vmem>>, vector<1x64xf32>
    %493 = vector.broadcast %492 : vector<1x64xf32> to vector<16x64xf32>
    %494 = arith.addf %491, %493 : vector<16x64xf32>
    %495 = arith.mulf %494, %494 : vector<16x64xf32>
    %496 = arith.mulf %494, %495 : vector<16x64xf32>
    %cst_212 = arith.constant 4.471500e-02 : f32
    %497 = vector.broadcast %cst_212 : f32 to vector<16x64xf32>
    %498 = arith.mulf %497, %496 : vector<16x64xf32>
    %499 = arith.addf %494, %498 : vector<16x64xf32>
    %cst_213 = arith.constant 0.797884583 : f32
    %500 = vector.broadcast %cst_213 : f32 to vector<16x64xf32>
    %501 = arith.mulf %500, %499 : vector<16x64xf32>
    %502 = math.tanh %501 : vector<16x64xf32>
    %cst_214 = arith.constant 1.000000e+00 : f32
    %503 = vector.broadcast %cst_214 : f32 to vector<16x64xf32>
    %504 = arith.addf %503, %502 : vector<16x64xf32>
    %cst_215 = arith.constant 5.000000e-01 : f32
    %505 = vector.broadcast %cst_215 : f32 to vector<16x64xf32>
    %506 = arith.mulf %505, %504 : vector<16x64xf32>
    %507 = arith.mulf %494, %506 : vector<16x64xf32>
    %c352 = arith.constant 352 : index
    %c0_216 = arith.constant 0 : index
    %508 = vector.load %arg4[%c352, %c0_216] : memref<448x96xf32, #tpu.memory_space<vmem>>, vector<64x8xf32>
    %cst_217 = arith.constant dense<0.000000e+00> : vector<16x8xf32>
    %509 = tpu.matmul %507, %508, %cst_217 {dimension_numbers = #tpu.dot_dimension_numbers<[1], [0], [0], [1], [0, 0, 1, 1], [], []>} : vector<16x64xf32>, vector<64x8xf32>, vector<16x8xf32> -> vector<16x8xf32>
    %c416 = arith.constant 416 : index
    %c0_218 = arith.constant 0 : index
    %510 = vector.load %arg4[%c416, %c0_218] : memref<448x96xf32, #tpu.memory_space<vmem>>, vector<32x8xf32>
    %cst_219 = arith.constant dense<0.000000e+00> : vector<16x8xf32>
    %511 = tpu.matmul %471, %510, %cst_219 {dimension_numbers = #tpu.dot_dimension_numbers<[1], [0], [0], [1], [0, 0, 1, 1], [], []>} : vector<16x32xf32>, vector<32x8xf32>, vector<16x8xf32> -> vector<16x8xf32>
    %512 = arith.addf %509, %511 : vector<16x8xf32>
    %c6_220 = arith.constant 6 : index
    %c0_221 = arith.constant 0 : index
    %513 = vector.load %arg5[%c6_220, %c0_221] : memref<8x96xf32, #tpu.memory_space<vmem>>, vector<1x8xf32>
    %514 = vector.broadcast %513 : vector<1x8xf32> to vector<16x8xf32>
    %515 = arith.addf %512, %514 : vector<16x8xf32>
    %516 = tpu.iota {dimensions = array<i32: 1>} : vector<1x8xi32>
    %c6_i32 = arith.constant 6 : i32
    %517 = vector.broadcast %c6_i32 : i32 to vector<1x8xi32>
    %518 = arith.cmpi eq, %516, %517 : vector<1x8xi32>
    %519 = arith.extui %518 : vector<1x8xi1> to vector<1x8xi32>
    %520 = arith.sitofp %519 : vector<1x8xi32> to vector<1x8xf32>
    %521 = vector.broadcast %53 : vector<16x1xf32> to vector<16x8xf32>
    %522 = vector.broadcast %520 : vector<1x8xf32> to vector<16x8xf32>
    %523 = arith.mulf %521, %522 : vector<16x8xf32>
    %524 = arith.addf %515, %523 : vector<16x8xf32>
    %c0_222 = arith.constant 0 : index
    %c0_223 = arith.constant 0 : index
    %525 = vector.load %arg8[%c0_222, %c0_223] : memref<16x8xf32, #tpu.memory_space<vmem>>, vector<16x8xf32>
    tpu.vector_store %arg8[%c0_222, %c0_223], %524 {strides = array<i32>} : memref<16x8xf32, #tpu.memory_space<vmem>>, vector<16x8xf32>,
    return
  }
}

</mosaic_0001>

<llo_original>
// kernel: squeeze.3
$region0: #{squeeze.3}
  %s0 = inlined_call_operand.vmem [shape: f32[16], index: 0, kind: input, shape index: {}]
  %s1 = inlined_call_operand.hbm [shape: f32[2,8], index: 1, kind: output, shape index: {}]
  $region1: #{squeeze.3} parent=0
    #allocation0 [shape = 'u8[1024]{0}', space=vmem, size = 0x400, scoped, tag = 'operand span for operand 1']
    #allocation1 [shape = 's32[1]{0}', space=sflag, size = 0x4, scoped, tag = 'scoped memory for squeeze.3']
    #allocation2 [shape = 'u8[4096]{0}', space=vmem, size = 0x1000, scoped, tag = 'scoped mem for output reshape']
    #allocation3 [shape = 'u8[4096]{0}', space=vmem, size = 0x1000, scoped, tag = 'scoped mem for input reshape']
    %2 = vsyncpa [#allocation1], 0
    %s4 = sshll.u32 1, 1
    %s5 = ssub.s32 %s4, 1
    %v6 = vld [vmem:[%s0] sm:%s5]
    %7 = vst [vmem:[#allocation3] sm:%s5] %v6
    %v8 = vld [vmem:[#allocation3] sm:$0x1]
    %vm9 = vcmask 64512
    %10 = vst.msk [vmem:[#allocation2] sm:$0x1] %vm9, %v8
    %v11 = vld [vmem:[#allocation3] sm:$0x1]
    %12 = vrot.lane.b32.xlu0 %v11, 120
    %v13 = vpop.permute.xlu0 %12
    %vm14 = vcmask 64512
    %s15 = scalar_lea.vmem [#allocation2], 1
    %16 = vst.msk [vmem:[%s15] sm:$0x1] %vm14, %v13
    %s18 = sshll.u32 1, 2
    %s19 = ssub.s32 %s18, 1
    %v21 = vld [vmem:[#allocation2] sm:%s19]
    %s22 = sshll.u32 1, 2
    %s23 = ssub.s32 %s22, 1
    %24 = vst [vmem:[#allocation0] sm:%s23] %v21
    %s26 = ssub.s32 32, 32
    %27 = vsyncadd [#allocation1], %s26
    %s29 = sshll.u32 [#allocation0], 4
    %s30 = int_to_ptr.vmem [resolvable:$true] %s29
    %32 = dma.vmem_to_hbm [thread:$0]  %s30, 32, %s1, [#allocation1]
    %33 = dma.done [#allocation1], 32
    %34 = vsyncpa [#allocation1], 1

// kernel: _lambda_.1
$region0: #{_lambda_.1}
  #allocation0 [shape = 'u32[]', space=smem, size = 0x4, offset = 0x4, fixed_abs, tag = 'smem constant byte address 0x4 - core index']
  #allocation1 [shape = 'u32[144,128]{1,0:T(1,128)}', space=vmem, size = 0x12000, scoped, tag = 'internal scratch']
  %s0 = inlined_call_operand.vmem [shape: f32[16,128], index: 0, kind: input, shape index: {}]
  %s1 = inlined_call_operand.vmem [shape: f32[16,32], index: 1, kind: input, shape index: {}]
  %s2 = inlined_call_operand.vmem [shape: f32[16,1], index: 2, kind: input, shape index: {}]
  %s3 = inlined_call_operand.vmem [shape: f32[16,16], index: 3, kind: input, shape index: {}]
  %s4 = inlined_call_operand.vmem [shape: f32[448,96], index: 4, kind: input, shape index: {}]
  %s5 = inlined_call_operand.vmem [shape: f32[8,96], index: 5, kind: input, shape index: {}]
  %s6 = inlined_call_operand.vmem [shape: f32[2,224,64], index: 6, kind: input, shape index: {}]
  %s7 = inlined_call_operand.vmem [shape: f32[2,16,64], index: 7, kind: input, shape index: {}]
  %s8 = inlined_call_operand.vmem [shape: f32[16,8], index: 8, kind: output, shape index: {}]
  %s9 = sld [smem:[#allocation0]]
  $region42: #{_lambda_.1} parent=0
    _
  %s11 = ssub.s32 1, %s9
  %s12 = scalar_select 0, %s11, %s9
  // Predicated region
  $region2: #{_lambda_.1} parent=0 // pred_check
    _
  $region3: #{_lambda_.1} parent=0 // pred_check_branch
    %14 = sbr.rel (0) target = $region5
  $region4: #{_lambda_.1} parent=0 // pred_region
    _
  $region5: #{_lambda_.1} parent=0 // pred_fallthru
    _
  // Predicated region
  $region6: #{_lambda_.1} parent=0 // pred_check
    _
  $region7: #{_lambda_.1} parent=0 // pred_check_branch
    %16 = sbr.rel (0) target = $region9
  $region8: #{_lambda_.1} parent=0 // pred_region
    _
  $region9: #{_lambda_.1} parent=0 // pred_fallthru
    _
  // Predicated region
  $region10: #{_lambda_.1} parent=0 // pred_check
    _
  $region11: #{_lambda_.1} parent=0 // pred_check_branch
    %18 = sbr.rel (0) target = $region13
  $region12: #{_lambda_.1} parent=0 // pred_region
    _
  $region13: #{_lambda_.1} parent=0 // pred_fallthru
    _
  // Predicated region
  $region14: #{_lambda_.1} parent=0 // pred_check
    _
  $region15: #{_lambda_.1} parent=0 // pred_check_branch
    %20 = sbr.rel (0) target = $region17
  $region16: #{_lambda_.1} parent=0 // pred_region
    _
  $region17: #{_lambda_.1} parent=0 // pred_fallthru
    _
  // Predicated region
  $region18: #{_lambda_.1} parent=0 // pred_check
    _
  $region19: #{_lambda_.1} parent=0 // pred_check_branch
    %22 = sbr.rel (0) target = $region21
  $region20: #{_lambda_.1} parent=0 // pred_region
    _
  $region21: #{_lambda_.1} parent=0 // pred_fallthru
    _
  // Predicated region
  $region22: #{_lambda_.1} parent=0 // pred_check
    _
  $region23: #{_lambda_.1} parent=0 // pred_check_branch
    %24 = sbr.rel (0) target = $region25
  $region24: #{_lambda_.1} parent=0 // pred_region
    _
  $region25: #{_lambda_.1} parent=0 // pred_fallthru
    _
  // Predicated region
  $region26: #{_lambda_.1} parent=0 // pred_check
    _
  $region27: #{_lambda_.1} parent=0 // pred_check_branch
    %26 = sbr.rel (0) target = $region29
  $region28: #{_lambda_.1} parent=0 // pred_region
    _
  $region29: #{_lambda_.1} parent=0 // pred_fallthru
    _
  // Predicated region
  $region30: #{_lambda_.1} parent=0 // pred_check
    _
  $region31: #{_lambda_.1} parent=0 // pred_check_branch
    %28 = sbr.rel (0) target = $region33
  $region32: #{_lambda_.1} parent=0 // pred_region
    _
  $region33: #{_lambda_.1} parent=0 // pred_fallthru
    _
  %v29 = vld [vmem:[%s0] sm:$0xff]
  %v30 = vld [vmem:[%s0 + $0x8] sm:$0xff]
  %v31 = vld [vmem:[%s1] sm:$0xff]
  %v32 = vld [vmem:[%s1 + $0x8] sm:$0xff]
  %v33 = vld [vmem:[%s2] sm:$0xff]
  %v34 = vld [vmem:[%s2 + $0x8] sm:$0xff]
  %v35 = vld [vmem:[%s3] sm:$0xff]
  %v36 = vld [vmem:[%s3 + $0x8] sm:$0xff]
  %v37 = vld [vmem:[%s4] sm:$0xff]
  %v38 = vld [vmem:[%s4 + $0x8] sm:$0xff]
  %v39 = vld [vmem:[%s4 + $0x10] sm:$0xff]
  %v40 = vld [vmem:[%s4 + $0x18] sm:$0xff]
  %v41 = vld [vmem:[%s4 + $0x20] sm:$0xff]
  %v42 = vld [vmem:[%s4 + $0x28] sm:$0xff]
  %v43 = vld [vmem:[%s4 + $0x30] sm:$0xff]
  %v44 = vld [vmem:[%s4 + $0x38] sm:$0xff]
  %v45 = vld [vmem:[%s4 + $0x40] sm:$0xff]
  %v46 = vld [vmem:[%s4 + $0x48] sm:$0xff]
  %v47 = vld [vmem:[%s4 + $0x50] sm:$0xff]
  %v48 = vld [vmem:[%s4 + $0x58] sm:$0xff]
  %v49 = vld [vmem:[%s4 + $0x60] sm:$0xff]
  %v50 = vld [vmem:[%s4 + $0x68] sm:$0xff]
  %v51 = vld [vmem:[%s4 + $0x70] sm:$0xff]
  %v52 = vld [vmem:[%s4 + $0x78] sm:$0xff]
  %v53 = vld [vmem:[%s5] sm:$0x1]
  %v54 = vlaneseq
  %v55 = vshrl.u32 %v54, 7
  %v56 = vsub.s32 0, %v55
  %v57 = vrot.slane %v53, %v56
  %58 = vmatprep.subr.mxu0 0.0
  %59 = vmatpush1.msra.mxu0 %v52
  %60 = vmatprep.subr.mxu0 0.0
  %61 = vmatpush1.msra.mxu0 %v51
  %62 = vmatprep.subr.mxu0 0.0
  %63 = vmatpush1.msra.mxu0 %v50
  %64 = vmatprep.subr.mxu0 0.0
  %65 = vmatpush1.msra.mxu0 %v49
  %66 = vmatprep.subr.mxu0 0.0
  %67 = vmatpush1.msra.mxu0 %v48
  %68 = vmatprep.subr.mxu0 0.0
  %69 = vmatpush1.msra.mxu0 %v47
  %70 = vmatprep.subr.mxu0 0.0
  %71 = vmatpush1.msra.mxu0 %v46
  %72 = vmatprep.subr.mxu0 0.0
  %73 = vmatpush1.msra.mxu0 %v45
  %74 = vmatprep.subr.mxu0 0.0
  %75 = vmatpush1.msra.mxu0 %v44
  %76 = vmatprep.subr.mxu0 0.0
  %77 = vmatpush1.msra.mxu0 %v43
  %78 = vmatprep.subr.mxu0 0.0
  %79 = vmatpush1.msra.mxu0 %v42
  %80 = vmatprep.subr.mxu0 0.0
  %81 = vmatpush1.msra.mxu0 %v41
  %82 = vmatprep.subr.mxu0 0.0
  %83 = vmatpush1.msra.mxu0 %v40
  %84 = vmatprep.subr.mxu0 0.0
  %85 = vmatpush1.msra.mxu0 %v39
  %86 = vmatprep.subr.mxu0 0.0
  %87 = vmatpush1.msra.mxu0 %v38
  %88 = vmatprep.subr.mxu0 0.0
  %89 = vmatpush1.msra.mxu0 %v37
  %90 = vmatprep.subr.mxu0 0.0
  %91 = vmatpush2.msra.mxu0 0.0
  %92 = vmatprep.subr.mxu0 0.0
  %93 = vmatpush2.msra.mxu0 0.0
  %94 = vmatprep.subr.mxu0 0.0
  %95 = vmatpush2.msra.mxu0 0.0
  %96 = vmatprep.subr.mxu0 0.0
  %97 = vmatpush2.msra.mxu0 0.0
  %98 = vmatprep.subr.mxu0 0.0
  %99 = vmatpush2.msra.mxu0 0.0
  %100 = vmatprep.subr.mxu0 0.0
  %101 = vmatpush2.msra.mxu0 0.0
  %102 = vmatprep.subr.mxu0 0.0
  %103 = vmatpush2.msra.mxu0 0.0
  %104 = vmatprep.subr.mxu0 0.0
  %105 = vmatpush2.msra.mxu0 0.0
  %106 = vmatprep.subr.mxu0 0.0
  %107 = vmatpush2.msra.mxu0 0.0
  %108 = vmatprep.subr.mxu0 0.0
  %109 = vmatpush2.msra.mxu0 0.0
  %110 = vmatprep.subr.mxu0 0.0
  %111 = vmatpush2.msra.mxu0 0.0
  %112 = vmatprep.subr.mxu0 0.0
  %113 = vmatpush2.msra.mxu0 0.0
  %114 = vmatprep.subr.mxu0 0.0
  %115 = vmatpush2.msra.mxu0 0.0
  %116 = vmatprep.subr.mxu0 0.0
  %117 = vmatpush2.msra.mxu0 0.0
  %118 = vmatprep.subr.mxu0 0.0
  %119 = vmatpush2.msra.mxu0 0.0
  %120 = vmatprep.subr.mxu0 0.0
  %121 = vmatpush2.msra.mxu0 0.0
  %122 = vmatprep.mubr.f32.mxu0 0.0
  %123 = vmatmul.mubr.f32.gmra.mxu0 %v29
  %v124 = vpop.f32.mrf.mxu0
  %v125 = vadd.f32 %v57, %v124
  %v126 = vpop.f32.mrf.mxu0
  %127 = vmatprep.mubr.f32.mxu0 0.0
  %128 = vmatmul.mubr.f32.gmra.mxu0 %v30
  %v129 = vpop.f32.mrf.mxu0
  %v130 = vadd.f32 %v57, %v129
  %v131 = vpop.f32.mrf.mxu0
  %132 = vdwg.mxu0
  %v133 = vmul.f32 %v125, %v125
  %v134 = vmul.f32 %v130, %v130
  %v135 = vmul.f32 %v125, %v133
  %v136 = vmul.f32 %v130, %v134
  %v137 = vmul.f32 %v135, 0.044715
  %v138 = vmul.f32 %v136, 0.044715
  %v139 = vadd.f32 %v125, %v137
  %v140 = vadd.f32 %v130, %v138
  %v141 = vmul.f32 %v139, 0.7978846
  %v142 = vmul.f32 %v140, 0.7978846
  %v143 = vtanh.pop %v141
  %v144 = vtanh.pop %v142
  %v145 = vadd.f32 %v143, 1.0
  %v146 = vadd.f32 %v144, 1.0
  %v147 = vmul.f32 %v145, 0.5
  %v148 = vmul.f32 %v146, 0.5
  %v149 = vmul.f32 %v125, %v147
  %v150 = vmul.f32 %v130, %v148
  %v151 = vld [vmem:[%s4 + $0x80] sm:$0xff]
  %v152 = vld [vmem:[%s4 + $0x88] sm:$0xff]
  %v153 = vld [vmem:[%s4 + $0x90] sm:$0xff]
  %v154 = vld [vmem:[%s4 + $0x98] sm:$0xff]
  %v155 = vld [vmem:[%s4 + $0xa0] sm:$0xff]
  %v156 = vld [vmem:[%s4 + $0xa8] sm:$0xff]
  %v157 = vld [vmem:[%s4 + $0xb0] sm:$0xff]
  %v158 = vld [vmem:[%s4 + $0xb8] sm:$0xff]
  %v159 = vld [vmem:[%s5 + $0x1] sm:$0x1]
  %v160 = vlaneseq
  %v161 = vshrl.u32 %v160, 7
  %v162 = vsub.s32 0, %v161
  %v163 = vrot.slane %v159, %v162
  %166 = vrot.lane.b32.xlu0 %v149, 96
  %v167 = vpop.permute.xlu0 %166
  %168 = vrot.lane.b32.xlu0 %v150, 96
  %v169 = vpop.permute.xlu0 %168
  %vm170 = vcmask 523264
  %v171 = vsel %vm170, %v167, 0
  %v173 = vsel %vm170, %v169, 0
  %175 = vmatprep.subr.mxu0 0.0
  %176 = vmatpush1.msra.mxu0 0.0
  %177 = vmatprep.subr.mxu0 0.0
  %178 = vmatpush1.msra.mxu0 0.0
  %179 = vmatprep.subr.mxu0 0.0
  %180 = vmatpush1.msra.mxu0 0.0
  %181 = vmatprep.subr.mxu0 0.0
  %182 = vmatpush1.msra.mxu0 0.0
  %183 = vmatprep.subr.mxu0 0.0
  %184 = vmatpush1.msra.mxu0 0.0
  %185 = vmatprep.subr.mxu0 0.0
  %186 = vmatpush1.msra.mxu0 0.0
  %187 = vmatprep.subr.mxu0 0.0
  %188 = vmatpush1.msra.mxu0 0.0
  %189 = vmatprep.subr.mxu0 0.0
  %190 = vmatpush1.msra.mxu0 0.0
  %191 = vmatprep.subr.mxu0 0.0
  %192 = vmatpush1.msra.mxu0 %v158
  %193 = vmatprep.subr.mxu0 0.0
  %194 = vmatpush1.msra.mxu0 %v157
  %195 = vmatprep.subr.mxu0 0.0
  %196 = vmatpush1.msra.mxu0 %v156
  %197 = vmatprep.subr.mxu0 0.0
  %198 = vmatpush1.msra.mxu0 %v155
  %199 = vmatprep.subr.mxu0 0.0
  %200 = vmatpush1.msra.mxu0 %v154
  %201 = vmatprep.subr.mxu0 0.0
  %202 = vmatpush1.msra.mxu0 %v153
  %203 = vmatprep.subr.mxu0 0.0
  %204 = vmatpush1.msra.mxu0 %v152
  %205 = vmatprep.subr.mxu0 0.0
  %206 = vmatpush1.msra.mxu0 %v151
  %207 = vmatprep.subr.mxu0 0.0
  %208 = vmatpush2.msra.mxu0 0.0
  %209 = vmatprep.subr.mxu0 0.0
  %210 = vmatpush2.msra.mxu0 0.0
  %211 = vmatprep.subr.mxu0 0.0
  %212 = vmatpush2.msra.mxu0 0.0
  %213 = vmatprep.subr.mxu0 0.0
  %214 = vmatpush2.msra.mxu0 0.0
  %215 = vmatprep.subr.mxu0 0.0
  %216 = vmatpush2.msra.mxu0 0.0
  %217 = vmatprep.subr.mxu0 0.0
  %218 = vmatpush2.msra.mxu0 0.0
  %219 = vmatprep.subr.mxu0 0.0
  %220 = vmatpush2.msra.mxu0 0.0
  %221 = vmatprep.subr.mxu0 0.0
  %222 = vmatpush2.msra.mxu0 0.0
  %223 = vmatprep.subr.mxu0 0.0
  %224 = vmatpush2.msra.mxu0 0.0
  %225 = vmatprep.subr.mxu0 0.0
  %226 = vmatpush2.msra.mxu0 0.0
  %227 = vmatprep.subr.mxu0 0.0
  %228 = vmatpush2.msra.mxu0 0.0
  %229 = vmatprep.subr.mxu0 0.0
  %230 = vmatpush2.msra.mxu0 0.0
  %231 = vmatprep.subr.mxu0 0.0
  %232 = vmatpush2.msra.mxu0 0.0
  %233 = vmatprep.subr.mxu0 0.0
  %234 = vmatpush2.msra.mxu0 0.0
  %235 = vmatprep.subr.mxu0 0.0
  %236 = vmatpush2.msra.mxu0 0.0
  %237 = vmatprep.subr.mxu0 0.0
  %238 = vmatpush2.msra.mxu0 0.0
  %239 = vmatprep.mubr.f32.mxu0 0.0
  %240 = vmatmul.mubr.f32.gmra.mxu0 %v171
  %v241 = vpop.f32.mrf.mxu0
  %v242 = vadd.f32 %v163, %v241
  %v243 = vpop.f32.mrf.mxu0
  %244 = vmatprep.mubr.f32.mxu0 0.0
  %245 = vmatmul.mubr.f32.gmra.mxu0 %v173
  %v246 = vpop.f32.mrf.mxu0
  %v247 = vadd.f32 %v163, %v246
  %v248 = vpop.f32.mrf.mxu0
  %249 = vdwg.mxu0
  %v250 = vmul.f32 %v242, %v242
  %v251 = vmul.f32 %v247, %v247
  %v252 = vmul.f32 %v242, %v250
  %v253 = vmul.f32 %v247, %v251
  %v254 = vmul.f32 %v252, 0.044715
  %v255 = vmul.f32 %v253, 0.044715
  %v256 = vadd.f32 %v242, %v254
  %v257 = vadd.f32 %v247, %v255
  %v258 = vmul.f32 %v256, 0.7978846
  %v259 = vmul.f32 %v257, 0.7978846
  %v260 = vtanh.pop %v258
  %v261 = vtanh.pop %v259
  %v262 = vadd.f32 %v260, 1.0
  %v263 = vadd.f32 %v261, 1.0
  %v264 = vmul.f32 %v262, 0.5
  %v265 = vmul.f32 %v263, 0.5
  %v266 = vmul.f32 %v242, %v264
  %v267 = vmul.f32 %v247, %v265
  %v268 = vld [vmem:[%s4 + $0xc0] sm:$0xff]
  %v269 = vld [vmem:[%s4 + $0xc8] sm:$0xff]
  %v270 = vld [vmem:[%s4 + $0xd0] sm:$0xff]
  %v271 = vld [vmem:[%s4 + $0xd8] sm:$0xff]
  %v272 = vld [vmem:[%s5 + $0x2] sm:$0x1]
  %v273 = vlaneseq
  %v274 = vshrl.u32 %v273, 7
  %v275 = vsub.s32 0, %v274
  %v276 = vrot.slane %v272, %v275
  %vm277 = vcmask 261120
  %v279 = vsel %vm277, %v266, 0
  %v282 = vsel %vm277, %v267, 0
  %284 = vmatprep.subr.mxu0 0.0
  %285 = vmatpush1.msra.mxu0 0.0
  %286 = vmatprep.subr.mxu0 0.0
  %287 = vmatpush1.msra.mxu0 0.0
  %288 = vmatprep.subr.mxu0 0.0
  %289 = vmatpush1.msra.mxu0 0.0
  %290 = vmatprep.subr.mxu0 0.0
  %291 = vmatpush1.msra.mxu0 0.0
  %292 = vmatprep.subr.mxu0 0.0
  %293 = vmatpush1.msra.mxu0 0.0
  %294 = vmatprep.subr.mxu0 0.0
  %295 = vmatpush1.msra.mxu0 0.0
  %296 = vmatprep.subr.mxu0 0.0
  %297 = vmatpush1.msra.mxu0 0.0
  %298 = vmatprep.subr.mxu0 0.0
  %299 = vmatpush1.msra.mxu0 0.0
  %300 = vmatprep.subr.mxu0 0.0
  %301 = vmatpush1.msra.mxu0 0.0
  %302 = vmatprep.subr.mxu0 0.0
  %303 = vmatpush1.msra.mxu0 0.0
  %304 = vmatprep.subr.mxu0 0.0
  %305 = vmatpush1.msra.mxu0 0.0
  %306 = vmatprep.subr.mxu0 0.0
  %307 = vmatpush1.msra.mxu0 0.0
  %308 = vmatprep.subr.mxu0 0.0
  %309 = vmatpush1.msra.mxu0 %v271
  %310 = vmatprep.subr.mxu0 0.0
  %311 = vmatpush1.msra.mxu0 %v270
  %312 = vmatprep.subr.mxu0 0.0
  %313 = vmatpush1.msra.mxu0 %v269
  %314 = vmatprep.subr.mxu0 0.0
  %315 = vmatpush1.msra.mxu0 %v268
  %316 = vmatprep.subr.mxu0 0.0
  %317 = vmatpush2.msra.mxu0 0.0
  %318 = vmatprep.subr.mxu0 0.0
  %319 = vmatpush2.msra.mxu0 0.0
  %320 = vmatprep.subr.mxu0 0.0
  %321 = vmatpush2.msra.mxu0 0.0
  %322 = vmatprep.subr.mxu0 0.0
  %323 = vmatpush2.msra.mxu0 0.0
  %324 = vmatprep.subr.mxu0 0.0
  %325 = vmatpush2.msra.mxu0 0.0
  %326 = vmatprep.subr.mxu0 0.0
  %327 = vmatpush2.msra.mxu0 0.0
  %328 = vmatprep.subr.mxu0 0.0
  %329 = vmatpush2.msra.mxu0 0.0
  %330 = vmatprep.subr.mxu0 0.0
  %331 = vmatpush2.msra.mxu0 0.0
  %332 = vmatprep.subr.mxu0 0.0
  %333 = vmatpush2.msra.mxu0 0.0
  %334 = vmatprep.subr.mxu0 0.0
  %335 = vmatpush2.msra.mxu0 0.0
  %336 = vmatprep.subr.mxu0 0.0
  %337 = vmatpush2.msra.mxu0 0.0
  %338 = vmatprep.subr.mxu0 0.0
  %339 = vmatpush2.msra.mxu0 0.0
  %340 = vmatprep.subr.mxu0 0.0
  %341 = vmatpush2.msra.mxu0 0.0
  %342 = vmatprep.subr.mxu0 0.0
  %343 = vmatpush2.msra.mxu0 0.0
  %344 = vmatprep.subr.mxu0 0.0
  %345 = vmatpush2.msra.mxu0 0.0
  %346 = vmatprep.subr.mxu0 0.0
  %347 = vmatpush2.msra.mxu0 0.0
  %348 = vmatprep.mubr.f32.mxu0 0.0
  %349 = vmatmul.mubr.f32.gmra.mxu0 %v279
  %v350 = vpop.f32.mrf.mxu0
  %v351 = vadd.f32 %v276, %v350
  %v352 = vpop.f32.mrf.mxu0
  %353 = vmatprep.mubr.f32.mxu0 0.0
  %354 = vmatmul.mubr.f32.gmra.mxu0 %v282
  %v355 = vpop.f32.mrf.mxu0
  %v356 = vadd.f32 %v276, %v355
  %v357 = vpop.f32.mrf.mxu0
  %358 = vdwg.mxu0
  %v359 = vadd.f32 %v125, %v31
  %v360 = vadd.f32 %v130, %v32
  %v361 = vadd.f32 %v359, %v351
  %v362 = vadd.f32 %v360, %v356
  %v363 = vld [vmem:[%s4 + $0xe0] sm:$0xff]
  %v364 = vld [vmem:[%s4 + $0xe8] sm:$0xff]
  %v365 = vld [vmem:[%s4 + $0xf0] sm:$0xff]
  %v366 = vld [vmem:[%s4 + $0xf8] sm:$0xff]
  %v367 = vld [vmem:[%s5 + $0x3] sm:$0x1]
  %v368 = vlaneseq
  %v369 = vshrl.u32 %v368, 7
  %v370 = vsub.s32 0, %v369
  %v371 = vrot.slane %v367, %v370
  %v373 = vsel %vm277, %v361, 0
  %v376 = vsel %vm277, %v362, 0
  %378 = vmatprep.subr.mxu0 0.0
  %379 = vmatpush1.msra.mxu0 0.0
  %380 = vmatprep.subr.mxu0 0.0
  %381 = vmatpush1.msra.mxu0 0.0
  %382 = vmatprep.subr.mxu0 0.0
  %383 = vmatpush1.msra.mxu0 0.0
  %384 = vmatprep.subr.mxu0 0.0
  %385 = vmatpush1.msra.mxu0 0.0
  %386 = vmatprep.subr.mxu0 0.0
  %387 = vmatpush1.msra.mxu0 0.0
  %388 = vmatprep.subr.mxu0 0.0
  %389 = vmatpush1.msra.mxu0 0.0
  %390 = vmatprep.subr.mxu0 0.0
  %391 = vmatpush1.msra.mxu0 0.0
  %392 = vmatprep.subr.mxu0 0.0
  %393 = vmatpush1.msra.mxu0 0.0
  %394 = vmatprep.subr.mxu0 0.0
  %395 = vmatpush1.msra.mxu0 0.0
  %396 = vmatprep.subr.mxu0 0.0
  %397 = vmatpush1.msra.mxu0 0.0
  %398 = vmatprep.subr.mxu0 0.0
  %399 = vmatpush1.msra.mxu0 0.0
  %400 = vmatprep.subr.mxu0 0.0
  %401 = vmatpush1.msra.mxu0 0.0
  %402 = vmatprep.subr.mxu0 0.0
  %403 = vmatpush1.msra.mxu0 %v366
  %404 = vmatprep.subr.mxu0 0.0
  %405 = vmatpush1.msra.mxu0 %v365
  %406 = vmatprep.subr.mxu0 0.0
  %407 = vmatpush1.msra.mxu0 %v364
  %408 = vmatprep.subr.mxu0 0.0
  %409 = vmatpush1.msra.mxu0 %v363
  %410 = vmatprep.subr.mxu0 0.0
  %411 = vmatpush2.msra.mxu0 0.0
  %412 = vmatprep.subr.mxu0 0.0
  %413 = vmatpush2.msra.mxu0 0.0
  %414 = vmatprep.subr.mxu0 0.0
  %415 = vmatpush2.msra.mxu0 0.0
  %416 = vmatprep.subr.mxu0 0.0
  %417 = vmatpush2.msra.mxu0 0.0
  %418 = vmatprep.subr.mxu0 0.0
  %419 = vmatpush2.msra.mxu0 0.0
  %420 = vmatprep.subr.mxu0 0.0
  %421 = vmatpush2.msra.mxu0 0.0
  %422 = vmatprep.subr.mxu0 0.0
  %423 = vmatpush2.msra.mxu0 0.0
  %424 = vmatprep.subr.mxu0 0.0
  %425 = vmatpush2.msra.mxu0 0.0
  %426 = vmatprep.subr.mxu0 0.0
  %427 = vmatpush2.msra.mxu0 0.0
  %428 = vmatprep.subr.mxu0 0.0
  %429 = vmatpush2.msra.mxu0 0.0
  %430 = vmatprep.subr.mxu0 0.0
  %431 = vmatpush2.msra.mxu0 0.0
  %432 = vmatprep.subr.mxu0 0.0
  %433 = vmatpush2.msra.mxu0 0.0
  %434 = vmatprep.subr.mxu0 0.0
  %435 = vmatpush2.msra.mxu0 0.0
  %436 = vmatprep.subr.mxu0 0.0
  %437 = vmatpush2.msra.mxu0 0.0
  %438 = vmatprep.subr.mxu0 0.0
  %439 = vmatpush2.msra.mxu0 0.0
  %440 = vmatprep.subr.mxu0 0.0
  %441 = vmatpush2.msra.mxu0 0.0
  %442 = vmatprep.mubr.f32.mxu0 0.0
  %443 = vmatmul.mubr.f32.gmra.mxu0 %v373
  %v444 = vpop.f32.mrf.mxu0
  %v445 = vadd.f32 %v371, %v444
  %v446 = vpop.f32.mrf.mxu0
  %447 = vmatprep.mubr.f32.mxu0 0.0
  %448 = vmatmul.mubr.f32.gmra.mxu0 %v376
  %v449 = vpop.f32.mrf.mxu0
  %v450 = vadd.f32 %v371, %v449
  %v451 = vpop.f32.mrf.mxu0
  %452 = vdwg.mxu0
  %v453 = vxor.u32 %v445, 2147483648
  %v454 = vxor.u32 %v450, 2147483648
  %v455 = vmul.f32 %v453, 1.442695
  %v456 = vpow.pop %v455
  %v457 = vmul.f32 %v454, 1.442695
  %v458 = vpow.pop %v457
  %v459 = vadd.f32 %v456, 1.0
  %v460 = vadd.f32 %v458, 1.0
  %v461 = vrcp.pop %v459
  %v462 = vmul.f32 1.0, %v461
  %v463 = vrcp.pop %v460
  %v464 = vmul.f32 1.0, %v463
  %466 = vset.pattern.permute.xlu0 0
  %467 = vperm.xlu0 %466, %v462
  %v468 = vpop.permute.xlu0 %467
  %471 = vset.pattern.permute.xlu0 0
  %472 = vperm.xlu0 %471, %v464
  %v473 = vpop.permute.xlu0 %472
  %v475 = vmul.f32 %v361, %v468
  %v476 = vmul.f32 %v362, %v473
  %478 = vset.pattern.permute.xlu0 0
  %479 = vperm.xlu0 %478, %v33
  %v480 = vpop.permute.xlu0 %479
  %483 = vset.pattern.permute.xlu0 0
  %484 = vperm.xlu0 %483, %v34
  %v485 = vpop.permute.xlu0 %484
  %v487 = vmul.f32 %v475, %v480
  %v488 = vmul.f32 %v476, %v485
  %v489 = vlaneseq
  %v490 = vand.u32 %v489, 127
  %vm491 = vcmp.ge.s32.totalorder %v490, 0
  %vm492 = vcmp.lt.s32.totalorder %v490, 8
  %vm493 = vmand %vm491, %vm492
  %v494 = vsel %vm493, 1, 0
  %v495 = vcvt.s32.f32 %v494
  %vm496 = vcmp.ge.s32.totalorder %v490, 8
  %vm497 = vcmp.lt.s32.totalorder %v490, 16
  %vm498 = vmand %vm496, %vm497
  %v499 = vsel %vm498, 1, 0
  %v500 = vcvt.s32.f32 %v499
  %vm501 = vcmp.ge.s32.totalorder %v490, 16
  %vm502 = vcmp.lt.s32.totalorder %v490, 24
  %vm503 = vmand %vm501, %vm502
  %v504 = vsel %vm503, 1, 0
  %v505 = vcvt.s32.f32 %v504
  %vm506 = vcmp.ge.s32.totalorder %v490, 24
  %vm507 = vcmp.lt.s32.totalorder %v490, 32
  %vm508 = vmand %vm506, %vm507
  %v509 = vsel %vm508, 1, 0
  %v510 = vcvt.s32.f32 %v509
  %v511 = vld [vmem:[%s6] sm:$0xff]
  %v512 = vld [vmem:[%s6 + $0x8] sm:$0xff]
  %v513 = vld [vmem:[%s6 + $0x10] sm:$0xff]
  %v514 = vld [vmem:[%s6 + $0x18] sm:$0xff]
  %v515 = vld [vmem:[%s6 + $0x20] sm:$0xff]
  %v516 = vld [vmem:[%s6 + $0x28] sm:$0xff]
  %v517 = vld [vmem:[%s6 + $0x30] sm:$0xff]
  %v518 = vld [vmem:[%s6 + $0x38] sm:$0xff]
  %v519 = vld [vmem:[%s6 + $0x40] sm:$0xff]
  %v520 = vld [vmem:[%s6 + $0x48] sm:$0xff]
  %v521 = vld [vmem:[%s6 + $0x50] sm:$0xff]
  %v522 = vld [vmem:[%s6 + $0x58] sm:$0xff]
  %v523 = vld [vmem:[%s6 + $0x60] sm:$0xff]
  %v524 = vld [vmem:[%s6 + $0x68] sm:$0xff]
  %v525 = vld [vmem:[%s6 + $0x70] sm:$0xff]
  %v526 = vld [vmem:[%s6 + $0x78] sm:$0xff]
  %v527 = vld [vmem:[%s6 + $0x80] sm:$0xff]
  %v528 = vld [vmem:[%s6 + $0x88] sm:$0xff]
  %v529 = vld [vmem:[%s6 + $0x90] sm:$0xff]
  %v530 = vld [vmem:[%s6 + $0x98] sm:$0xff]
  %v531 = vld [vmem:[%s6 + $0xa0] sm:$0xff]
  %v532 = vld [vmem:[%s6 + $0xa8] sm:$0xff]
  %v533 = vld [vmem:[%s6 + $0xb0] sm:$0xff]
  %v534 = vld [vmem:[%s6 + $0xb8] sm:$0xff]
  %v535 = vld [vmem:[%s6 + $0xc0] sm:$0xff]
  %v536 = vld [vmem:[%s6 + $0xc8] sm:$0xff]
  %v537 = vld [vmem:[%s6 + $0xd0] sm:$0xff]
  %v538 = vld [vmem:[%s6 + $0xd8] sm:$0xff]
  %v539 = vld [vmem:[%s7] sm:$0x1]
  %v540 = vld [vmem:[%s7 + $0x1] sm:$0x1]
  %v541 = vld [vmem:[%s7 + $0x2] sm:$0x1]
  %v542 = vld [vmem:[%s7 + $0x3] sm:$0x1]
  %v543 = vld [vmem:[%s7 + $0x4] sm:$0x1]
  %v544 = vld [vmem:[%s7 + $0x5] sm:$0x1]
  %v545 = vld [vmem:[%s7 + $0x6] sm:$0x1]
  %v546 = vld [vmem:[%s7 + $0x7] sm:$0x1]
  %v547 = vld [vmem:[%s7 + $0x8] sm:$0x1]
  %v548 = vld [vmem:[%s7 + $0x9] sm:$0x1]
  %v549 = vlaneseq
  %v550 = vshrl.u32 %v549, 7
  %v551 = vsub.s32 0, %v550
  %v552 = vrot.slane %v539, %v551
  %v554 = vsel %vm277, %v487, 0
  %v557 = vsel %vm277, %v488, 0
  %559 = vmatprep.subr.mxu0 0.0
  %560 = vmatpush1.msra.mxu0 0.0
  %561 = vmatprep.subr.mxu0 0.0
  %562 = vmatpush1.msra.mxu0 0.0
  %563 = vmatprep.subr.mxu0 0.0
  %564 = vmatpush1.msra.mxu0 0.0
  %565 = vmatprep.subr.mxu0 0.0
  %566 = vmatpush1.msra.mxu0 0.0
  %567 = vmatprep.subr.mxu0 0.0
  %568 = vmatpush1.msra.mxu0 0.0
  %569 = vmatprep.subr.mxu0 0.0
  %570 = vmatpush1.msra.mxu0 0.0
  %571 = vmatprep.subr.mxu0 0.0
  %572 = vmatpush1.msra.mxu0 0.0
  %573 = vmatprep.subr.mxu0 0.0
  %574 = vmatpush1.msra.mxu0 0.0
  %575 = vmatprep.subr.mxu0 0.0
  %576 = vmatpush1.msra.mxu0 0.0
  %577 = vmatprep.subr.mxu0 0.0
  %578 = vmatpush1.msra.mxu0 0.0
  %579 = vmatprep.subr.mxu0 0.0
  %580 = vmatpush1.msra.mxu0 0.0
  %581 = vmatprep.subr.mxu0 0.0
  %582 = vmatpush1.msra.mxu0 0.0
  %583 = vmatprep.subr.mxu0 0.0
  %584 = vmatpush1.msra.mxu0 %v514
  %585 = vmatprep.subr.mxu0 0.0
  %586 = vmatpush1.msra.mxu0 %v513
  %587 = vmatprep.subr.mxu0 0.0
  %588 = vmatpush1.msra.mxu0 %v512
  %589 = vmatprep.subr.mxu0 0.0
  %590 = vmatpush1.msra.mxu0 %v511
  %591 = vmatprep.subr.mxu0 0.0
  %592 = vmatpush2.msra.mxu0 0.0
  %593 = vmatprep.subr.mxu0 0.0
  %594 = vmatpush2.msra.mxu0 0.0
  %595 = vmatprep.subr.mxu0 0.0
  %596 = vmatpush2.msra.mxu0 0.0
  %597 = vmatprep.subr.mxu0 0.0
  %598 = vmatpush2.msra.mxu0 0.0
  %599 = vmatprep.subr.mxu0 0.0
  %600 = vmatpush2.msra.mxu0 0.0
  %601 = vmatprep.subr.mxu0 0.0
  %602 = vmatpush2.msra.mxu0 0.0
  %603 = vmatprep.subr.mxu0 0.0
  %604 = vmatpush2.msra.mxu0 0.0
  %605 = vmatprep.subr.mxu0 0.0
  %606 = vmatpush2.msra.mxu0 0.0
  %607 = vmatprep.subr.mxu0 0.0
  %608 = vmatpush2.msra.mxu0 0.0
  %609 = vmatprep.subr.mxu0 0.0
  %610 = vmatpush2.msra.mxu0 0.0
  %611 = vmatprep.subr.mxu0 0.0
  %612 = vmatpush2.msra.mxu0 0.0
  %613 = vmatprep.subr.mxu0 0.0
  %614 = vmatpush2.msra.mxu0 0.0
  %615 = vmatprep.subr.mxu0 0.0
  %616 = vmatpush2.msra.mxu0 0.0
  %617 = vmatprep.subr.mxu0 0.0
  %618 = vmatpush2.msra.mxu0 0.0
  %619 = vmatprep.subr.mxu0 0.0
  %620 = vmatpush2.msra.mxu0 0.0
  %621 = vmatprep.subr.mxu0 0.0
  %622 = vmatpush2.msra.mxu0 0.0
  %623 = vmatprep.mubr.f32.mxu0 0.0
  %624 = vmatmul.mubr.f32.gmra.mxu0 %v554
  %v625 = vpop.f32.mrf.mxu0
  %v626 = vadd.f32 %v552, %v625
  %v627 = vpop.f32.mrf.mxu0
  %628 = vmatprep.mubr.f32.mxu0 0.0
  %629 = vmatmul.mubr.f32.gmra.mxu0 %v557
  %v630 = vpop.f32.mrf.mxu0
  %v631 = vadd.f32 %v552, %v630
  %v632 = vpop.f32.mrf.mxu0
  %633 = vdwg.mxu0
  %v634 = vlaneseq
  %v635 = vshrl.u32 %v634, 7
  %v636 = vsub.s32 0, %v635
  %v637 = vrot.slane %v540, %v636
  %638 = vmatprep.subr.mxu0 0.0
  %639 = vmatpush1.msra.mxu0 0.0
  %640 = vmatprep.subr.mxu0 0.0
  %641 = vmatpush1.msra.mxu0 0.0
  %642 = vmatprep.subr.mxu0 0.0
  %643 = vmatpush1.msra.mxu0 0.0
  %644 = vmatprep.subr.mxu0 0.0
  %645 = vmatpush1.msra.mxu0 0.0
  %646 = vmatprep.subr.mxu0 0.0
  %647 = vmatpush1.msra.mxu0 0.0
  %648 = vmatprep.subr.mxu0 0.0
  %649 = vmatpush1.msra.mxu0 0.0
  %650 = vmatprep.subr.mxu0 0.0
  %651 = vmatpush1.msra.mxu0 0.0
  %652 = vmatprep.subr.mxu0 0.0
  %653 = vmatpush1.msra.mxu0 0.0
  %654 = vmatprep.subr.mxu0 0.0
  %655 = vmatpush1.msra.mxu0 0.0
  %656 = vmatprep.subr.mxu0 0.0
  %657 = vmatpush1.msra.mxu0 0.0
  %658 = vmatprep.subr.mxu0 0.0
  %659 = vmatpush1.msra.mxu0 0.0
  %660 = vmatprep.subr.mxu0 0.0
  %661 = vmatpush1.msra.mxu0 0.0
  %662 = vmatprep.subr.mxu0 0.0
  %663 = vmatpush1.msra.mxu0 %v518
  %664 = vmatprep.subr.mxu0 0.0
  %665 = vmatpush1.msra.mxu0 %v517
  %666 = vmatprep.subr.mxu0 0.0
  %667 = vmatpush1.msra.mxu0 %v516
  %668 = vmatprep.subr.mxu0 0.0
  %669 = vmatpush1.msra.mxu0 %v515
  %670 = vmatprep.subr.mxu0 0.0
  %671 = vmatpush2.msra.mxu0 0.0
  %672 = vmatprep.subr.mxu0 0.0
  %673 = vmatpush2.msra.mxu0 0.0
  %674 = vmatprep.subr.mxu0 0.0
  %675 = vmatpush2.msra.mxu0 0.0
  %676 = vmatprep.subr.mxu0 0.0
  %677 = vmatpush2.msra.mxu0 0.0
  %678 = vmatprep.subr.mxu0 0.0
  %679 = vmatpush2.msra.mxu0 0.0
  %680 = vmatprep.subr.mxu0 0.0
  %681 = vmatpush2.msra.mxu0 0.0
  %682 = vmatprep.subr.mxu0 0.0
  %683 = vmatpush2.msra.mxu0 0.0
  %684 = vmatprep.subr.mxu0 0.0
  %685 = vmatpush2.msra.mxu0 0.0
  %686 = vmatprep.subr.mxu0 0.0
  %687 = vmatpush2.msra.mxu0 0.0
  %688 = vmatprep.subr.mxu0 0.0
  %689 = vmatpush2.msra.mxu0 0.0
  %690 = vmatprep.subr.mxu0 0.0
  %691 = vmatpush2.msra.mxu0 0.0
  %692 = vmatprep.subr.mxu0 0.0
  %693 = vmatpush2.msra.mxu0 0.0
  %694 = vmatprep.subr.mxu0 0.0
  %695 = vmatpush2.msra.mxu0 0.0
  %696 = vmatprep.subr.mxu0 0.0
  %697 = vmatpush2.msra.mxu0 0.0
  %698 = vmatprep.subr.mxu0 0.0
  %699 = vmatpush2.msra.mxu0 0.0
  %700 = vmatprep.subr.mxu0 0.0
  %701 = vmatpush2.msra.mxu0 0.0
  %702 = vmatprep.mubr.f32.mxu0 0.0
  %703 = vmatmul.mubr.f32.gmra.mxu0 %v554
  %v704 = vpop.f32.mrf.mxu0
  %v705 = vadd.f32 %v637, %v704
  %v706 = vpop.f32.mrf.mxu0
  %707 = vmatprep.mubr.f32.mxu0 0.0
  %708 = vmatmul.mubr.f32.gmra.mxu0 %v557
  %v709 = vpop.f32.mrf.mxu0
  %v710 = vadd.f32 %v637, %v709
  %v711 = vpop.f32.mrf.mxu0
  %712 = vdwg.mxu0
  %v713 = vlaneseq
  %v714 = vshrl.u32 %v713, 7
  %v715 = vsub.s32 0, %v714
  %v716 = vrot.slane %v541, %v715
  %717 = vmatprep.subr.mxu0 0.0
  %718 = vmatpush1.msra.mxu0 0.0
  %719 = vmatprep.subr.mxu0 0.0
  %720 = vmatpush1.msra.mxu0 0.0
  %721 = vmatprep.subr.mxu0 0.0
  %722 = vmatpush1.msra.mxu0 0.0
  %723 = vmatprep.subr.mxu0 0.0
  %724 = vmatpush1.msra.mxu0 0.0
  %725 = vmatprep.subr.mxu0 0.0
  %726 = vmatpush1.msra.mxu0 0.0
  %727 = vmatprep.subr.mxu0 0.0
  %728 = vmatpush1.msra.mxu0 0.0
  %729 = vmatprep.subr.mxu0 0.0
  %730 = vmatpush1.msra.mxu0 0.0
  %731 = vmatprep.subr.mxu0 0.0
  %732 = vmatpush1.msra.mxu0 0.0
  %733 = vmatprep.subr.mxu0 0.0
  %734 = vmatpush1.msra.mxu0 0.0
  %735 = vmatprep.subr.mxu0 0.0
  %736 = vmatpush1.msra.mxu0 0.0
  %737 = vmatprep.subr.mxu0 0.0
  %738 = vmatpush1.msra.mxu0 0.0
  %739 = vmatprep.subr.mxu0 0.0
  %740 = vmatpush1.msra.mxu0 0.0
  %741 = vmatprep.subr.mxu0 0.0
  %742 = vmatpush1.msra.mxu0 %v522
  %743 = vmatprep.subr.mxu0 0.0
  %744 = vmatpush1.msra.mxu0 %v521
  %745 = vmatprep.subr.mxu0 0.0
  %746 = vmatpush1.msra.mxu0 %v520
  %747 = vmatprep.subr.mxu0 0.0
  %748 = vmatpush1.msra.mxu0 %v519
  %749 = vmatprep.subr.mxu0 0.0
  %750 = vmatpush2.msra.mxu0 0.0
  %751 = vmatprep.subr.mxu0 0.0
  %752 = vmatpush2.msra.mxu0 0.0
  %753 = vmatprep.subr.mxu0 0.0
  %754 = vmatpush2.msra.mxu0 0.0
  %755 = vmatprep.subr.mxu0 0.0
  %756 = vmatpush2.msra.mxu0 0.0
  %757 = vmatprep.subr.mxu0 0.0
  %758 = vmatpush2.msra.mxu0 0.0
  %759 = vmatprep.subr.mxu0 0.0
  %760 = vmatpush2.msra.mxu0 0.0
  %761 = vmatprep.subr.mxu0 0.0
  %762 = vmatpush2.msra.mxu0 0.0
  %763 = vmatprep.subr.mxu0 0.0
  %764 = vmatpush2.msra.mxu0 0.0
  %765 = vmatprep.subr.mxu0 0.0
  %766 = vmatpush2.msra.mxu0 0.0
  %767 = vmatprep.subr.mxu0 0.0
  %768 = vmatpush2.msra.mxu0 0.0
  %769 = vmatprep.subr.mxu0 0.0
  %770 = vmatpush2.msra.mxu0 0.0
  %771 = vmatprep.subr.mxu0 0.0
  %772 = vmatpush2.msra.mxu0 0.0
  %773 = vmatprep.subr.mxu0 0.0
  %774 = vmatpush2.msra.mxu0 0.0
  %775 = vmatprep.subr.mxu0 0.0
  %776 = vmatpush2.msra.mxu0 0.0
  %777 = vmatprep.subr.mxu0 0.0
  %778 = vmatpush2.msra.mxu0 0.0
  %779 = vmatprep.subr.mxu0 0.0
  %780 = vmatpush2.msra.mxu0 0.0
  %781 = vmatprep.mubr.f32.mxu0 0.0
  %782 = vmatmul.mubr.f32.gmra.mxu0 %v554
  %v783 = vpop.f32.mrf.mxu0
  %v784 = vadd.f32 %v716, %v783
  %v785 = vpop.f32.mrf.mxu0
  %786 = vmatprep.mubr.f32.mxu0 0.0
  %787 = vmatmul.mubr.f32.gmra.mxu0 %v557
  %v788 = vpop.f32.mrf.mxu0
  %v789 = vadd.f32 %v716, %v788
  %v790 = vpop.f32.mrf.mxu0
  %791 = vdwg.mxu0
  %v792 = vmul.f32 %v705, %v495
  %v793 = vmul.f32 %v710, %v495
  %v795 = vsel %vm277, %v626, 0
  %v798 = vsel %vm277, %v631, 0
  %v801 = vsel %vm277, %v792, 0
  %v804 = vsel %vm277, %v793, 0
  %806 = vmatprep.subr.mxu0 0.0
  %807 = vmatpush1.xpose.msra.mxu0 0.0
  %808 = vmatprep.subr.mxu0 0.0
  %809 = vmatpush1.xpose.msra.mxu0 0.0
  %810 = vmatprep.subr.mxu0 0.0
  %811 = vmatpush1.xpose.msra.mxu0 0.0
  %812 = vmatprep.subr.mxu0 0.0
  %813 = vmatpush1.xpose.msra.mxu0 0.0
  %814 = vmatprep.subr.mxu0 0.0
  %815 = vmatpush1.xpose.msra.mxu0 0.0
  %816 = vmatprep.subr.mxu0 0.0
  %817 = vmatpush1.xpose.msra.mxu0 0.0
  %818 = vmatprep.subr.mxu0 0.0
  %819 = vmatpush1.xpose.msra.mxu0 0.0
  %820 = vmatprep.subr.mxu0 0.0
  %821 = vmatpush1.xpose.msra.mxu0 0.0
  %822 = vmatprep.subr.mxu0 0.0
  %823 = vmatpush1.xpose.msra.mxu0 0.0
  %824 = vmatprep.subr.mxu0 0.0
  %825 = vmatpush1.xpose.msra.mxu0 0.0
  %826 = vmatprep.subr.mxu0 0.0
  %827 = vmatpush1.xpose.msra.mxu0 0.0
  %828 = vmatprep.subr.mxu0 0.0
  %829 = vmatpush1.xpose.msra.mxu0 0.0
  %830 = vmatprep.subr.mxu0 0.0
  %831 = vmatpush1.xpose.msra.mxu0 0.0
  %832 = vmatprep.subr.mxu0 0.0
  %833 = vmatpush1.xpose.msra.mxu0 0.0
  %834 = vmatprep.subr.mxu0 0.0
  %835 = vmatpush1.xpose.msra.mxu0 %v804
  %836 = vmatprep.subr.mxu0 0.0
  %837 = vmatpush1.xpose.msra.mxu0 %v801
  %838 = vmatprep.subr.mxu0 0.0
  %839 = vmatpush2.xpose.msra.mxu0 0.0
  %840 = vmatprep.subr.mxu0 0.0
  %841 = vmatpush2.xpose.msra.mxu0 0.0
  %842 = vmatprep.subr.mxu0 0.0
  %843 = vmatpush2.xpose.msra.mxu0 0.0
  %844 = vmatprep.subr.mxu0 0.0
  %845 = vmatpush2.xpose.msra.mxu0 0.0
  %846 = vmatprep.subr.mxu0 0.0
  %847 = vmatpush2.xpose.msra.mxu0 0.0
  %848 = vmatprep.subr.mxu0 0.0
  %849 = vmatpush2.xpose.msra.mxu0 0.0
  %850 = vmatprep.subr.mxu0 0.0
  %851 = vmatpush2.xpose.msra.mxu0 0.0
  %852 = vmatprep.subr.mxu0 0.0
  %853 = vmatpush2.xpose.msra.mxu0 0.0
  %854 = vmatprep.subr.mxu0 0.0
  %855 = vmatpush2.xpose.msra.mxu0 0.0
  %856 = vmatprep.subr.mxu0 0.0
  %857 = vmatpush2.xpose.msra.mxu0 0.0
  %858 = vmatprep.subr.mxu0 0.0
  %859 = vmatpush2.xpose.msra.mxu0 0.0
  %860 = vmatprep.subr.mxu0 0.0
  %861 = vmatpush2.xpose.msra.mxu0 0.0
  %862 = vmatprep.subr.mxu0 0.0
  %863 = vmatpush2.xpose.msra.mxu0 0.0
  %864 = vmatprep.subr.mxu0 0.0
  %865 = vmatpush2.xpose.msra.mxu0 0.0
  %866 = vmatprep.subr.mxu0 0.0
  %867 = vmatpush2.xpose.msra.mxu0 0.0
  %868 = vmatprep.subr.mxu0 0.0
  %869 = vmatpush2.xpose.msra.mxu0 0.0
  %870 = vmatprep.mubr.f32.mxu0 0.0
  %871 = vmatmul.mubr.f32.gmra.mxu0 %v795
  %v872 = vpop.f32.mrf.mxu0
  %v873 = vadd.f32 0.0, %v872
  %v874 = vpop.f32.mrf.mxu0
  %875 = vmatprep.mubr.f32.mxu0 0.0
  %876 = vmatmul.mubr.f32.gmra.mxu0 %v798
  %v877 = vpop.f32.mrf.mxu0
  %v878 = vadd.f32 0.0, %v877
  %v879 = vpop.f32.mrf.mxu0
  %880 = vdwg.mxu0
  %v881 = vmul.f32 %v873, 0.35355338
  %v882 = vmul.f32 %v878, 0.35355338
  %v883 = vadd.f32 %v881, %v35
  %v884 = vadd.f32 %v882, %v36
  %vm885 = vcmask 130048
  %v886 = vsel %vm885, %v883, -inf
  %887 = vmax.xlane.f32.xlu0 %v886
  %v888 = vpop.xlane.xlu0 %887
  %v889 = vsel %vm885, %v884, -inf
  %890 = vmax.xlane.f32.xlu0 %v889
  %v891 = vpop.xlane.xlu0 %890
  %v892 = vsub.f32 %v883, %v888
  %v893 = vsub.f32 %v884, %v891
  %v894 = vmul.f32 %v892, 1.442695
  %v895 = vpow.pop %v894
  %v896 = vmul.f32 %v893, 1.442695
  %v897 = vpow.pop %v896
  %v898 = vsel %vm885, %v895, 0.0
  %899 = vadd.xlane.f32.xlu0 %v898
  %v900 = vpop.xlane.xlu0 %899
  %v901 = vsel %vm885, %v897, 0.0
  %902 = vadd.xlane.f32.xlu0 %v901
  %v903 = vpop.xlane.xlu0 %902
  %v904 = vrcp.pop %v900
  %v905 = vrcp.pop %v903
  %v906 = vmul.f32 %v895, %v904
  %v907 = vmul.f32 %v897, %v905
  %v908 = vmul.f32 %v784, %v495
  %v909 = vmul.f32 %v789, %v495
  %v910 = vmul.f32 %v705, %v500
  %v911 = vmul.f32 %v710, %v500
  %v913 = vsel %vm277, %v910, 0
  %v916 = vsel %vm277, %v911, 0
  %918 = vmatprep.subr.mxu0 0.0
  %919 = vmatpush1.xpose.msra.mxu0 0.0
  %920 = vmatprep.subr.mxu0 0.0
  %921 = vmatpush1.xpose.msra.mxu0 0.0
  %922 = vmatprep.subr.mxu0 0.0
  %923 = vmatpush1.xpose.msra.mxu0 0.0
  %924 = vmatprep.subr.mxu0 0.0
  %925 = vmatpush1.xpose.msra.mxu0 0.0
  %926 = vmatprep.subr.mxu0 0.0
  %927 = vmatpush1.xpose.msra.mxu0 0.0
  %928 = vmatprep.subr.mxu0 0.0
  %929 = vmatpush1.xpose.msra.mxu0 0.0
  %930 = vmatprep.subr.mxu0 0.0
  %931 = vmatpush1.xpose.msra.mxu0 0.0
  %932 = vmatprep.subr.mxu0 0.0
  %933 = vmatpush1.xpose.msra.mxu0 0.0
  %934 = vmatprep.subr.mxu0 0.0
  %935 = vmatpush1.xpose.msra.mxu0 0.0
  %936 = vmatprep.subr.mxu0 0.0
  %937 = vmatpush1.xpose.msra.mxu0 0.0
  %938 = vmatprep.subr.mxu0 0.0
  %939 = vmatpush1.xpose.msra.mxu0 0.0
  %940 = vmatprep.subr.mxu0 0.0
  %941 = vmatpush1.xpose.msra.mxu0 0.0
  %942 = vmatprep.subr.mxu0 0.0
  %943 = vmatpush1.xpose.msra.mxu0 0.0
  %944 = vmatprep.subr.mxu0 0.0
  %945 = vmatpush1.xpose.msra.mxu0 0.0
  %946 = vmatprep.subr.mxu0 0.0
  %947 = vmatpush1.xpose.msra.mxu0 %v916
  %948 = vmatprep.subr.mxu0 0.0
  %949 = vmatpush1.xpose.msra.mxu0 %v913
  %950 = vmatprep.subr.mxu0 0.0
  %951 = vmatpush2.xpose.msra.mxu0 0.0
  %952 = vmatprep.subr.mxu0 0.0
  %953 = vmatpush2.xpose.msra.mxu0 0.0
  %954 = vmatprep.subr.mxu0 0.0
  %955 = vmatpush2.xpose.msra.mxu0 0.0
  %956 = vmatprep.subr.mxu0 0.0
  %957 = vmatpush2.xpose.msra.mxu0 0.0
  %958 = vmatprep.subr.mxu0 0.0
  %959 = vmatpush2.xpose.msra.mxu0 0.0
  %960 = vmatprep.subr.mxu0 0.0
  %961 = vmatpush2.xpose.msra.mxu0 0.0
  %962 = vmatprep.subr.mxu0 0.0
  %963 = vmatpush2.xpose.msra.mxu0 0.0
  %964 = vmatprep.subr.mxu0 0.0
  %965 = vmatpush2.xpose.msra.mxu0 0.0
  %966 = vmatprep.subr.mxu0 0.0
  %967 = vmatpush2.xpose.msra.mxu0 0.0
  %968 = vmatprep.subr.mxu0 0.0
  %969 = vmatpush2.xpose.msra.mxu0 0.0
  %970 = vmatprep.subr.mxu0 0.0
  %971 = vmatpush2.xpose.msra.mxu0 0.0
  %972 = vmatprep.subr.mxu0 0.0
  %973 = vmatpush2.xpose.msra.mxu0 0.0
  %974 = vmatprep.subr.mxu0 0.0
  %975 = vmatpush2.xpose.msra.mxu0 0.0
  %976 = vmatprep.subr.mxu0 0.0
  %977 = vmatpush2.xpose.msra.mxu0 0.0
  %978 = vmatprep.subr.mxu0 0.0
  %979 = vmatpush2.xpose.msra.mxu0 0.0
  %980 = vmatprep.subr.mxu0 0.0
  %981 = vmatpush2.xpose.msra.mxu0 0.0
  %982 = vmatprep.mubr.f32.mxu0 0.0
  %983 = vmatmul.mubr.f32.gmra.mxu0 %v795
  %v984 = vpop.f32.mrf.mxu0
  %v985 = vadd.f32 0.0, %v984
  %v986 = vpop.f32.mrf.mxu0
  %987 = vmatprep.mubr.f32.mxu0 0.0
  %988 = vmatmul.mubr.f32.gmra.mxu0 %v798
  %v989 = vpop.f32.mrf.mxu0
  %v990 = vadd.f32 0.0, %v989
  %v991 = vpop.f32.mrf.mxu0
  %992 = vdwg.mxu0
  %v993 = vmul.f32 %v985, 0.35355338
  %v994 = vmul.f32 %v990, 0.35355338
  %v995 = vadd.f32 %v993, %v35
  %v996 = vadd.f32 %v994, %v36
  %v997 = vsel %vm885, %v995, -inf
  %998 = vmax.xlane.f32.xlu0 %v997
  %v999 = vpop.xlane.xlu0 %998
  %v1000 = vsel %vm885, %v996, -inf
  %1001 = vmax.xlane.f32.xlu0 %v1000
  %v1002 = vpop.xlane.xlu0 %1001
  %v1003 = vsub.f32 %v995, %v999
  %v1004 = vsub.f32 %v996, %v1002
  %v1005 = vmul.f32 %v1003, 1.442695
  %v1006 = vpow.pop %v1005
  %v1007 = vmul.f32 %v1004, 1.442695
  %v1008 = vpow.pop %v1007
  %v1009 = vsel %vm885, %v1006, 0.0
  %1010 = vadd.xlane.f32.xlu0 %v1009
  %v1011 = vpop.xlane.xlu0 %1010
  %v1012 = vsel %vm885, %v1008, 0.0
  %1013 = vadd.xlane.f32.xlu0 %v1012
  %v1014 = vpop.xlane.xlu0 %1013
  %v1015 = vrcp.pop %v1011
  %v1016 = vrcp.pop %v1014
  %v1017 = vmul.f32 %v1006, %v1015
  %v1018 = vmul.f32 %v1008, %v1016
  %v1019 = vmul.f32 %v784, %v500
  %v1020 = vmul.f32 %v789, %v500
  %v1022 = vsel %vm885, %v1017, 0
  %v1025 = vsel %vm885, %v1018, 0
  %1027 = vmatprep.subr.mxu0 0.0
  %1028 = vmatpush1.msra.mxu0 0.0
  %1029 = vmatprep.subr.mxu0 0.0
  %1030 = vmatpush1.msra.mxu0 0.0
  %1031 = vmatprep.subr.mxu0 0.0
  %1032 = vmatpush1.msra.mxu0 0.0
  %1033 = vmatprep.subr.mxu0 0.0
  %1034 = vmatpush1.msra.mxu0 0.0
  %1035 = vmatprep.subr.mxu0 0.0
  %1036 = vmatpush1.msra.mxu0 0.0
  %1037 = vmatprep.subr.mxu0 0.0
  %1038 = vmatpush1.msra.mxu0 0.0
  %1039 = vmatprep.subr.mxu0 0.0
  %1040 = vmatpush1.msra.mxu0 0.0
  %1041 = vmatprep.subr.mxu0 0.0
  %1042 = vmatpush1.msra.mxu0 0.0
  %1043 = vmatprep.subr.mxu0 0.0
  %1044 = vmatpush1.msra.mxu0 0.0
  %1045 = vmatprep.subr.mxu0 0.0
  %1046 = vmatpush1.msra.mxu0 0.0
  %1047 = vmatprep.subr.mxu0 0.0
  %1048 = vmatpush1.msra.mxu0 0.0
  %1049 = vmatprep.subr.mxu0 0.0
  %1050 = vmatpush1.msra.mxu0 0.0
  %1051 = vmatprep.subr.mxu0 0.0
  %1052 = vmatpush1.msra.mxu0 0.0
  %1053 = vmatprep.subr.mxu0 0.0
  %1054 = vmatpush1.msra.mxu0 0.0
  %1055 = vmatprep.subr.mxu0 0.0
  %1056 = vmatpush1.msra.mxu0 %v1020
  %1057 = vmatprep.subr.mxu0 0.0
  %1058 = vmatpush1.msra.mxu0 %v1019
  %1059 = vmatprep.subr.mxu0 0.0
  %1060 = vmatpush2.msra.mxu0 0.0
  %1061 = vmatprep.subr.mxu0 0.0
  %1062 = vmatpush2.msra.mxu0 0.0
  %1063 = vmatprep.subr.mxu0 0.0
  %1064 = vmatpush2.msra.mxu0 0.0
  %1065 = vmatprep.subr.mxu0 0.0
  %1066 = vmatpush2.msra.mxu0 0.0
  %1067 = vmatprep.subr.mxu0 0.0
  %1068 = vmatpush2.msra.mxu0 0.0
  %1069 = vmatprep.subr.mxu0 0.0
  %1070 = vmatpush2.msra.mxu0 0.0
  %1071 = vmatprep.subr.mxu0 0.0
  %1072 = vmatpush2.msra.mxu0 0.0
  %1073 = vmatprep.subr.mxu0 0.0
  %1074 = vmatpush2.msra.mxu0 0.0
  %1075 = vmatprep.subr.mxu0 0.0
  %1076 = vmatpush2.msra.mxu0 0.0
  %1077 = vmatprep.subr.mxu0 0.0
  %1078 = vmatpush2.msra.mxu0 0.0
  %1079 = vmatprep.subr.mxu0 0.0
  %1080 = vmatpush2.msra.mxu0 0.0
  %1081 = vmatprep.subr.mxu0 0.0
  %1082 = vmatpush2.msra.mxu0 0.0
  %1083 = vmatprep.subr.mxu0 0.0
  %1084 = vmatpush2.msra.mxu0 0.0
  %1085 = vmatprep.subr.mxu0 0.0
  %1086 = vmatpush2.msra.mxu0 0.0
  %1087 = vmatprep.subr.mxu0 0.0
  %1088 = vmatpush2.msra.mxu0 0.0
  %1089 = vmatprep.subr.mxu0 0.0
  %1090 = vmatpush2.msra.mxu0 0.0
  %1091 = vmatprep.mubr.f32.mxu0 0.0
  %1092 = vmatmul.mubr.f32.gmra.mxu0 %v1022
  %v1093 = vpop.f32.mrf.mxu0
  %v1094 = vadd.f32 0.0, %v1093
  %v1095 = vpop.f32.mrf.mxu0
  %1096 = vmatprep.mubr.f32.mxu0 0.0
  %1097 = vmatmul.mubr.f32.gmra.mxu0 %v1025
  %v1098 = vpop.f32.mrf.mxu0
  %v1099 = vadd.f32 0.0, %v1098
  %v1100 = vpop.f32.mrf.mxu0
  %1101 = vdwg.mxu0
  %v1103 = vsel %vm885, %v906, 0
  %v1106 = vsel %vm885, %v907, 0
  %1108 = vmatprep.subr.mxu0 0.0
  %1109 = vmatpush1.msra.mxu0 0.0
  %1110 = vmatprep.subr.mxu0 0.0
  %1111 = vmatpush1.msra.mxu0 0.0
  %1112 = vmatprep.subr.mxu0 0.0
  %1113 = vmatpush1.msra.mxu0 0.0
  %1114 = vmatprep.subr.mxu0 0.0
  %1115 = vmatpush1.msra.mxu0 0.0
  %1116 = vmatprep.subr.mxu0 0.0
  %1117 = vmatpush1.msra.mxu0 0.0
  %1118 = vmatprep.subr.mxu0 0.0
  %1119 = vmatpush1.msra.mxu0 0.0
  %1120 = vmatprep.subr.mxu0 0.0
  %1121 = vmatpush1.msra.mxu0 0.0
  %1122 = vmatprep.subr.mxu0 0.0
  %1123 = vmatpush1.msra.mxu0 0.0
  %1124 = vmatprep.subr.mxu0 0.0
  %1125 = vmatpush1.msra.mxu0 0.0
  %1126 = vmatprep.subr.mxu0 0.0
  %1127 = vmatpush1.msra.mxu0 0.0
  %1128 = vmatprep.subr.mxu0 0.0
  %1129 = vmatpush1.msra.mxu0 0.0
  %1130 = vmatprep.subr.mxu0 0.0
  %1131 = vmatpush1.msra.mxu0 0.0
  %1132 = vmatprep.subr.mxu0 0.0
  %1133 = vmatpush1.msra.mxu0 0.0
  %1134 = vmatprep.subr.mxu0 0.0
  %1135 = vmatpush1.msra.mxu0 0.0
  %1136 = vmatprep.subr.mxu0 0.0
  %1137 = vmatpush1.msra.mxu0 %v909
  %1138 = vmatprep.subr.mxu0 0.0
  %1139 = vmatpush1.msra.mxu0 %v908
  %1140 = vmatprep.subr.mxu0 0.0
  %1141 = vmatpush2.msra.mxu0 0.0
  %1142 = vmatprep.subr.mxu0 0.0
  %1143 = vmatpush2.msra.mxu0 0.0
  %1144 = vmatprep.subr.mxu0 0.0
  %1145 = vmatpush2.msra.mxu0 0.0
  %1146 = vmatprep.subr.mxu0 0.0
  %1147 = vmatpush2.msra.mxu0 0.0
  %1148 = vmatprep.subr.mxu0 0.0
  %1149 = vmatpush2.msra.mxu0 0.0
  %1150 = vmatprep.subr.mxu0 0.0
  %1151 = vmatpush2.msra.mxu0 0.0
  %1152 = vmatprep.subr.mxu0 0.0
  %1153 = vmatpush2.msra.mxu0 0.0
  %1154 = vmatprep.subr.mxu0 0.0
  %1155 = vmatpush2.msra.mxu0 0.0
  %1156 = vmatprep.subr.mxu0 0.0
  %1157 = vmatpush2.msra.mxu0 0.0
  %1158 = vmatprep.subr.mxu0 0.0
  %1159 = vmatpush2.msra.mxu0 0.0
  %1160 = vmatprep.subr.mxu0 0.0
  %1161 = vmatpush2.msra.mxu0 0.0
  %1162 = vmatprep.subr.mxu0 0.0
  %1163 = vmatpush2.msra.mxu0 0.0
  %1164 = vmatprep.subr.mxu0 0.0
  %1165 = vmatpush2.msra.mxu0 0.0
  %1166 = vmatprep.subr.mxu0 0.0
  %1167 = vmatpush2.msra.mxu0 0.0
  %1168 = vmatprep.subr.mxu0 0.0
  %1169 = vmatpush2.msra.mxu0 0.0
  %1170 = vmatprep.subr.mxu0 0.0
  %1171 = vmatpush2.msra.mxu0 0.0
  %1172 = vmatprep.mubr.f32.mxu0 0.0
  %1173 = vmatmul.mubr.f32.gmra.mxu0 %v1103
  %v1174 = vpop.f32.mrf.mxu0
  %v1175 = vadd.f32 %v1094, %v1174
  %v1176 = vpop.f32.mrf.mxu0
  %1177 = vmatprep.mubr.f32.mxu0 0.0
  %1178 = vmatmul.mubr.f32.gmra.mxu0 %v1106
  %v1179 = vpop.f32.mrf.mxu0
  %v1180 = vadd.f32 %v1099, %v1179
  %v1181 = vpop.f32.mrf.mxu0
  %1182 = vdwg.mxu0
  %v1183 = vmul.f32 %v705, %v505
  %v1184 = vmul.f32 %v710, %v505
  %v1186 = vsel %vm277, %v1183, 0
  %v1189 = vsel %vm277, %v1184, 0
  %1191 = vmatprep.subr.mxu0 0.0
  %1192 = vmatpush1.xpose.msra.mxu0 0.0
  %1193 = vmatprep.subr.mxu0 0.0
  %1194 = vmatpush1.xpose.msra.mxu0 0.0
  %1195 = vmatprep.subr.mxu0 0.0
  %1196 = vmatpush1.xpose.msra.mxu0 0.0
  %1197 = vmatprep.subr.mxu0 0.0
  %1198 = vmatpush1.xpose.msra.mxu0 0.0
  %1199 = vmatprep.subr.mxu0 0.0
  %1200 = vmatpush1.xpose.msra.mxu0 0.0
  %1201 = vmatprep.subr.mxu0 0.0
  %1202 = vmatpush1.xpose.msra.mxu0 0.0
  %1203 = vmatprep.subr.mxu0 0.0
  %1204 = vmatpush1.xpose.msra.mxu0 0.0
  %1205 = vmatprep.subr.mxu0 0.0
  %1206 = vmatpush1.xpose.msra.mxu0 0.0
  %1207 = vmatprep.subr.mxu0 0.0
  %1208 = vmatpush1.xpose.msra.mxu0 0.0
  %1209 = vmatprep.subr.mxu0 0.0
  %1210 = vmatpush1.xpose.msra.mxu0 0.0
  %1211 = vmatprep.subr.mxu0 0.0
  %1212 = vmatpush1.xpose.msra.mxu0 0.0
  %1213 = vmatprep.subr.mxu0 0.0
  %1214 = vmatpush1.xpose.msra.mxu0 0.0
  %1215 = vmatprep.subr.mxu0 0.0
  %1216 = vmatpush1.xpose.msra.mxu0 0.0
  %1217 = vmatprep.subr.mxu0 0.0
  %1218 = vmatpush1.xpose.msra.mxu0 0.0
  %1219 = vmatprep.subr.mxu0 0.0
  %1220 = vmatpush1.xpose.msra.mxu0 %v1189
  %1221 = vmatprep.subr.mxu0 0.0
  %1222 = vmatpush1.xpose.msra.mxu0 %v1186
  %1223 = vmatprep.subr.mxu0 0.0
  %1224 = vmatpush2.xpose.msra.mxu0 0.0
  %1225 = vmatprep.subr.mxu0 0.0
  %1226 = vmatpush2.xpose.msra.mxu0 0.0
  %1227 = vmatprep.subr.mxu0 0.0
  %1228 = vmatpush2.xpose.msra.mxu0 0.0
  %1229 = vmatprep.subr.mxu0 0.0
  %1230 = vmatpush2.xpose.msra.mxu0 0.0
  %1231 = vmatprep.subr.mxu0 0.0
  %1232 = vmatpush2.xpose.msra.mxu0 0.0
  %1233 = vmatprep.subr.mxu0 0.0
  %1234 = vmatpush2.xpose.msra.mxu0 0.0
  %1235 = vmatprep.subr.mxu0 0.0
  %1236 = vmatpush2.xpose.msra.mxu0 0.0
  %1237 = vmatprep.subr.mxu0 0.0
  %1238 = vmatpush2.xpose.msra.mxu0 0.0
  %1239 = vmatprep.subr.mxu0 0.0
  %1240 = vmatpush2.xpose.msra.mxu0 0.0
  %1241 = vmatprep.subr.mxu0 0.0
  %1242 = vmatpush2.xpose.msra.mxu0 0.0
  %1243 = vmatprep.subr.mxu0 0.0
  %1244 = vmatpush2.xpose.msra.mxu0 0.0
  %1245 = vmatprep.subr.mxu0 0.0
  %1246 = vmatpush2.xpose.msra.mxu0 0.0
  %1247 = vmatprep.subr.mxu0 0.0
  %1248 = vmatpush2.xpose.msra.mxu0 0.0
  %1249 = vmatprep.subr.mxu0 0.0
  %1250 = vmatpush2.xpose.msra.mxu0 0.0
  %1251 = vmatprep.subr.mxu0 0.0
  %1252 = vmatpush2.xpose.msra.mxu0 0.0
  %1253 = vmatprep.subr.mxu0 0.0
  %1254 = vmatpush2.xpose.msra.mxu0 0.0
  %1255 = vmatprep.mubr.f32.mxu0 0.0
  %1256 = vmatmul.mubr.f32.gmra.mxu0 %v795
  %v1257 = vpop.f32.mrf.mxu0
  %v1258 = vadd.f32 0.0, %v1257
  %v1259 = vpop.f32.mrf.mxu0
  %1260 = vmatprep.mubr.f32.mxu0 0.0
  %1261 = vmatmul.mubr.f32.gmra.mxu0 %v798
  %v1262 = vpop.f32.mrf.mxu0
  %v1263 = vadd.f32 0.0, %v1262
  %v1264 = vpop.f32.mrf.mxu0
  %1265 = vdwg.mxu0
  %v1266 = vmul.f32 %v1258, 0.35355338
  %v1267 = vmul.f32 %v1263, 0.35355338
  %v1268 = vadd.f32 %v1266, %v35
  %v1269 = vadd.f32 %v1267, %v36
  %v1270 = vsel %vm885, %v1268, -inf
  %1271 = vmax.xlane.f32.xlu0 %v1270
  %v1272 = vpop.xlane.xlu0 %1271
  %v1273 = vsel %vm885, %v1269, -inf
  %1274 = vmax.xlane.f32.xlu0 %v1273
  %v1275 = vpop.xlane.xlu0 %1274
  %v1276 = vsub.f32 %v1268, %v1272
  %v1277 = vsub.f32 %v1269, %v1275
  %v1278 = vmul.f32 %v1276, 1.442695
  %v1279 = vpow.pop %v1278
  %v1280 = vmul.f32 %v1277, 1.442695
  %v1281 = vpow.pop %v1280
  %v1282 = vsel %vm885, %v1279, 0.0
  %1283 = vadd.xlane.f32.xlu0 %v1282
  %v1284 = vpop.xlane.xlu0 %1283
  %v1285 = vsel %vm885, %v1281, 0.0
  %1286 = vadd.xlane.f32.xlu0 %v1285
  %v1287 = vpop.xlane.xlu0 %1286
  %v1288 = vrcp.pop %v1284
  %v1289 = vrcp.pop %v1287
  %v1290 = vmul.f32 %v1279, %v1288
  %v1291 = vmul.f32 %v1281, %v1289
  %v1292 = vmul.f32 %v784, %v505
  %v1293 = vmul.f32 %v789, %v505
  %v1295 = vsel %vm885, %v1290, 0
  %v1298 = vsel %vm885, %v1291, 0
  %1300 = vmatprep.subr.mxu0 0.0
  %1301 = vmatpush1.msra.mxu0 0.0
  %1302 = vmatprep.subr.mxu0 0.0
  %1303 = vmatpush1.msra.mxu0 0.0
  %1304 = vmatprep.subr.mxu0 0.0
  %1305 = vmatpush1.msra.mxu0 0.0
  %1306 = vmatprep.subr.mxu0 0.0
  %1307 = vmatpush1.msra.mxu0 0.0
  %1308 = vmatprep.subr.mxu0 0.0
  %1309 = vmatpush1.msra.mxu0 0.0
  %1310 = vmatprep.subr.mxu0 0.0
  %1311 = vmatpush1.msra.mxu0 0.0
  %1312 = vmatprep.subr.mxu0 0.0
  %1313 = vmatpush1.msra.mxu0 0.0
  %1314 = vmatprep.subr.mxu0 0.0
  %1315 = vmatpush1.msra.mxu0 0.0
  %1316 = vmatprep.subr.mxu0 0.0
  %1317 = vmatpush1.msra.mxu0 0.0
  %1318 = vmatprep.subr.mxu0 0.0
  %1319 = vmatpush1.msra.mxu0 0.0
  %1320 = vmatprep.subr.mxu0 0.0
  %1321 = vmatpush1.msra.mxu0 0.0
  %1322 = vmatprep.subr.mxu0 0.0
  %1323 = vmatpush1.msra.mxu0 0.0
  %1324 = vmatprep.subr.mxu0 0.0
  %1325 = vmatpush1.msra.mxu0 0.0
  %1326 = vmatprep.subr.mxu0 0.0
  %1327 = vmatpush1.msra.mxu0 0.0
  %1328 = vmatprep.subr.mxu0 0.0
  %1329 = vmatpush1.msra.mxu0 %v1293
  %1330 = vmatprep.subr.mxu0 0.0
  %1331 = vmatpush1.msra.mxu0 %v1292
  %1332 = vmatprep.subr.mxu0 0.0
  %1333 = vmatpush2.msra.mxu0 0.0
  %1334 = vmatprep.subr.mxu0 0.0
  %1335 = vmatpush2.msra.mxu0 0.0
  %1336 = vmatprep.subr.mxu0 0.0
  %1337 = vmatpush2.msra.mxu0 0.0
  %1338 = vmatprep.subr.mxu0 0.0
  %1339 = vmatpush2.msra.mxu0 0.0
  %1340 = vmatprep.subr.mxu0 0.0
  %1341 = vmatpush2.msra.mxu0 0.0
  %1342 = vmatprep.subr.mxu0 0.0
  %1343 = vmatpush2.msra.mxu0 0.0
  %1344 = vmatprep.subr.mxu0 0.0
  %1345 = vmatpush2.msra.mxu0 0.0
  %1346 = vmatprep.subr.mxu0 0.0
  %1347 = vmatpush2.msra.mxu0 0.0
  %1348 = vmatprep.subr.mxu0 0.0
  %1349 = vmatpush2.msra.mxu0 0.0
  %1350 = vmatprep.subr.mxu0 0.0
  %1351 = vmatpush2.msra.mxu0 0.0
  %1352 = vmatprep.subr.mxu0 0.0
  %1353 = vmatpush2.msra.mxu0 0.0
  %1354 = vmatprep.subr.mxu0 0.0
  %1355 = vmatpush2.msra.mxu0 0.0
  %1356 = vmatprep.subr.mxu0 0.0
  %1357 = vmatpush2.msra.mxu0 0.0
  %1358 = vmatprep.subr.mxu0 0.0
  %1359 = vmatpush2.msra.mxu0 0.0
  %1360 = vmatprep.subr.mxu0 0.0
  %1361 = vmatpush2.msra.mxu0 0.0
  %1362 = vmatprep.subr.mxu0 0.0
  %1363 = vmatpush2.msra.mxu0 0.0
  %1364 = vmatprep.mubr.f32.mxu0 0.0
  %1365 = vmatmul.mubr.f32.gmra.mxu0 %v1295
  %v1366 = vpop.f32.mrf.mxu0
  %v1367 = vadd.f32 0.0, %v1366
  %v1368 = vpop.f32.mrf.mxu0
  %1369 = vmatprep.mubr.f32.mxu0 0.0
  %1370 = vmatmul.mubr.f32.gmra.mxu0 %v1298
  %v1371 = vpop.f32.mrf.mxu0
  %v1372 = vadd.f32 0.0, %v1371
  %v1373 = vpop.f32.mrf.mxu0
  %1374 = vdwg.mxu0
  %v1375 = vadd.f32 %v1175, %v1367
  %v1376 = vadd.f32 %v1180, %v1372
  %v1377 = vmul.f32 %v705, %v510
  %v1378 = vmul.f32 %v710, %v510
  %v1380 = vsel %vm277, %v1377, 0
  %v1383 = vsel %vm277, %v1378, 0
  %1385 = vmatprep.subr.mxu0 0.0
  %1386 = vmatpush1.xpose.msra.mxu0 0.0
  %1387 = vmatprep.subr.mxu0 0.0
  %1388 = vmatpush1.xpose.msra.mxu0 0.0
  %1389 = vmatprep.subr.mxu0 0.0
  %1390 = vmatpush1.xpose.msra.mxu0 0.0
  %1391 = vmatprep.subr.mxu0 0.0
  %1392 = vmatpush1.xpose.msra.mxu0 0.0
  %1393 = vmatprep.subr.mxu0 0.0
  %1394 = vmatpush1.xpose.msra.mxu0 0.0
  %1395 = vmatprep.subr.mxu0 0.0
  %1396 = vmatpush1.xpose.msra.mxu0 0.0
  %1397 = vmatprep.subr.mxu0 0.0
  %1398 = vmatpush1.xpose.msra.mxu0 0.0
  %1399 = vmatprep.subr.mxu0 0.0
  %1400 = vmatpush1.xpose.msra.mxu0 0.0
  %1401 = vmatprep.subr.mxu0 0.0
  %1402 = vmatpush1.xpose.msra.mxu0 0.0
  %1403 = vmatprep.subr.mxu0 0.0
  %1404 = vmatpush1.xpose.msra.mxu0 0.0
  %1405 = vmatprep.subr.mxu0 0.0
  %1406 = vmatpush1.xpose.msra.mxu0 0.0
  %1407 = vmatprep.subr.mxu0 0.0
  %1408 = vmatpush1.xpose.msra.mxu0 0.0
  %1409 = vmatprep.subr.mxu0 0.0
  %1410 = vmatpush1.xpose.msra.mxu0 0.0
  %1411 = vmatprep.subr.mxu0 0.0
  %1412 = vmatpush1.xpose.msra.mxu0 0.0
  %1413 = vmatprep.subr.mxu0 0.0
  %1414 = vmatpush1.xpose.msra.mxu0 %v1383
  %1415 = vmatprep.subr.mxu0 0.0
  %1416 = vmatpush1.xpose.msra.mxu0 %v1380
  %1417 = vmatprep.subr.mxu0 0.0
  %1418 = vmatpush2.xpose.msra.mxu0 0.0
  %1419 = vmatprep.subr.mxu0 0.0
  %1420 = vmatpush2.xpose.msra.mxu0 0.0
  %1421 = vmatprep.subr.mxu0 0.0
  %1422 = vmatpush2.xpose.msra.mxu0 0.0
  %1423 = vmatprep.subr.mxu0 0.0
  %1424 = vmatpush2.xpose.msra.mxu0 0.0
  %1425 = vmatprep.subr.mxu0 0.0
  %1426 = vmatpush2.xpose.msra.mxu0 0.0
  %1427 = vmatprep.subr.mxu0 0.0
  %1428 = vmatpush2.xpose.msra.mxu0 0.0
  %1429 = vmatprep.subr.mxu0 0.0
  %1430 = vmatpush2.xpose.msra.mxu0 0.0
  %1431 = vmatprep.subr.mxu0 0.0
  %1432 = vmatpush2.xpose.msra.mxu0 0.0
  %1433 = vmatprep.subr.mxu0 0.0
  %1434 = vmatpush2.xpose.msra.mxu0 0.0
  %1435 = vmatprep.subr.mxu0 0.0
  %1436 = vmatpush2.xpose.msra.mxu0 0.0
  %1437 = vmatprep.subr.mxu0 0.0
  %1438 = vmatpush2.xpose.msra.mxu0 0.0
  %1439 = vmatprep.subr.mxu0 0.0
  %1440 = vmatpush2.xpose.msra.mxu0 0.0
  %1441 = vmatprep.subr.mxu0 0.0
  %1442 = vmatpush2.xpose.msra.mxu0 0.0
  %1443 = vmatprep.subr.mxu0 0.0
  %1444 = vmatpush2.xpose.msra.mxu0 0.0
  %1445 = vmatprep.subr.mxu0 0.0
  %1446 = vmatpush2.xpose.msra.mxu0 0.0
  %1447 = vmatprep.subr.mxu0 0.0
  %1448 = vmatpush2.xpose.msra.mxu0 0.0
  %1449 = vmatprep.mubr.f32.mxu0 0.0
  %1450 = vmatmul.mubr.f32.gmra.mxu0 %v795
  %v1451 = vpop.f32.mrf.mxu0
  %v1452 = vadd.f32 0.0, %v1451
  %v1453 = vpop.f32.mrf.mxu0
  %1454 = vmatprep.mubr.f32.mxu0 0.0
  %1455 = vmatmul.mubr.f32.gmra.mxu0 %v798
  %v1456 = vpop.f32.mrf.mxu0
  %v1457 = vadd.f32 0.0, %v1456
  %v1458 = vpop.f32.mrf.mxu0
  %1459 = vdwg.mxu0
  %v1460 = vmul.f32 %v1452, 0.35355338
  %v1461 = vmul.f32 %v1457, 0.35355338
  %v1462 = vadd.f32 %v1460, %v35
  %v1463 = vadd.f32 %v1461, %v36
  %v1464 = vsel %vm885, %v1462, -inf
  %1465 = vmax.xlane.f32.xlu0 %v1464
  %v1466 = vpop.xlane.xlu0 %1465
  %v1467 = vsel %vm885, %v1463, -inf
  %1468 = vmax.xlane.f32.xlu0 %v1467
  %v1469 = vpop.xlane.xlu0 %1468
  %v1470 = vsub.f32 %v1462, %v1466
  %v1471 = vsub.f32 %v1463, %v1469
  %v1472 = vmul.f32 %v1470, 1.442695
  %v1473 = vpow.pop %v1472
  %v1474 = vmul.f32 %v1471, 1.442695
  %v1475 = vpow.pop %v1474
  %v1476 = vsel %vm885, %v1473, 0.0
  %1477 = vadd.xlane.f32.xlu0 %v1476
  %v1478 = vpop.xlane.xlu0 %1477
  %v1479 = vsel %vm885, %v1475, 0.0
  %1480 = vadd.xlane.f32.xlu0 %v1479
  %v1481 = vpop.xlane.xlu0 %1480
  %v1482 = vrcp.pop %v1478
  %v1483 = vrcp.pop %v1481
  %v1484 = vmul.f32 %v1473, %v1482
  %v1485 = vmul.f32 %v1475, %v1483
  %v1486 = vmul.f32 %v784, %v510
  %v1487 = vmul.f32 %v789, %v510
  %v1489 = vsel %vm885, %v1484, 0
  %v1492 = vsel %vm885, %v1485, 0
  %1494 = vmatprep.subr.mxu0 0.0
  %1495 = vmatpush1.msra.mxu0 0.0
  %1496 = vmatprep.subr.mxu0 0.0
  %1497 = vmatpush1.msra.mxu0 0.0
  %1498 = vmatprep.subr.mxu0 0.0
  %1499 = vmatpush1.msra.mxu0 0.0
  %1500 = vmatprep.subr.mxu0 0.0
  %1501 = vmatpush1.msra.mxu0 0.0
  %1502 = vmatprep.subr.mxu0 0.0
  %1503 = vmatpush1.msra.mxu0 0.0
  %1504 = vmatprep.subr.mxu0 0.0
  %1505 = vmatpush1.msra.mxu0 0.0
  %1506 = vmatprep.subr.mxu0 0.0
  %1507 = vmatpush1.msra.mxu0 0.0
  %1508 = vmatprep.subr.mxu0 0.0
  %1509 = vmatpush1.msra.mxu0 0.0
  %1510 = vmatprep.subr.mxu0 0.0
  %1511 = vmatpush1.msra.mxu0 0.0
  %1512 = vmatprep.subr.mxu0 0.0
  %1513 = vmatpush1.msra.mxu0 0.0
  %1514 = vmatprep.subr.mxu0 0.0
  %1515 = vmatpush1.msra.mxu0 0.0
  %1516 = vmatprep.subr.mxu0 0.0
  %1517 = vmatpush1.msra.mxu0 0.0
  %1518 = vmatprep.subr.mxu0 0.0
  %1519 = vmatpush1.msra.mxu0 0.0
  %1520 = vmatprep.subr.mxu0 0.0
  %1521 = vmatpush1.msra.mxu0 0.0
  %1522 = vmatprep.subr.mxu0 0.0
  %1523 = vmatpush1.msra.mxu0 %v1487
  %1524 = vmatprep.subr.mxu0 0.0
  %1525 = vmatpush1.msra.mxu0 %v1486
  %1526 = vmatprep.subr.mxu0 0.0
  %1527 = vmatpush2.msra.mxu0 0.0
  %1528 = vmatprep.subr.mxu0 0.0
  %1529 = vmatpush2.msra.mxu0 0.0
  %1530 = vmatprep.subr.mxu0 0.0
  %1531 = vmatpush2.msra.mxu0 0.0
  %1532 = vmatprep.subr.mxu0 0.0
  %1533 = vmatpush2.msra.mxu0 0.0
  %1534 = vmatprep.subr.mxu0 0.0
  %1535 = vmatpush2.msra.mxu0 0.0
  %1536 = vmatprep.subr.mxu0 0.0
  %1537 = vmatpush2.msra.mxu0 0.0
  %1538 = vmatprep.subr.mxu0 0.0
  %1539 = vmatpush2.msra.mxu0 0.0
  %1540 = vmatprep.subr.mxu0 0.0
  %1541 = vmatpush2.msra.mxu0 0.0
  %1542 = vmatprep.subr.mxu0 0.0
  %1543 = vmatpush2.msra.mxu0 0.0
  %1544 = vmatprep.subr.mxu0 0.0
  %1545 = vmatpush2.msra.mxu0 0.0
  %1546 = vmatprep.subr.mxu0 0.0
  %1547 = vmatpush2.msra.mxu0 0.0
  %1548 = vmatprep.subr.mxu0 0.0
  %1549 = vmatpush2.msra.mxu0 0.0
  %1550 = vmatprep.subr.mxu0 0.0
  %1551 = vmatpush2.msra.mxu0 0.0
  %1552 = vmatprep.subr.mxu0 0.0
  %1553 = vmatpush2.msra.mxu0 0.0
  %1554 = vmatprep.subr.mxu0 0.0
  %1555 = vmatpush2.msra.mxu0 0.0
  %1556 = vmatprep.subr.mxu0 0.0
  %1557 = vmatpush2.msra.mxu0 0.0
  %1558 = vmatprep.mubr.f32.mxu0 0.0
  %1559 = vmatmul.mubr.f32.gmra.mxu0 %v1489
  %v1560 = vpop.f32.mrf.mxu0
  %v1561 = vadd.f32 0.0, %v1560
  %v1562 = vpop.f32.mrf.mxu0
  %1563 = vmatprep.mubr.f32.mxu0 0.0
  %1564 = vmatmul.mubr.f32.gmra.mxu0 %v1492
  %v1565 = vpop.f32.mrf.mxu0
  %v1566 = vadd.f32 0.0, %v1565
  %v1567 = vpop.f32.mrf.mxu0
  %1568 = vdwg.mxu0
  %v1569 = vadd.f32 %v1375, %v1561
  %v1570 = vadd.f32 %v1376, %v1566
  %v1571 = vlaneseq
  %v1572 = vshrl.u32 %v1571, 7
  %v1573 = vsub.s32 0, %v1572
  %v1574 = vrot.slane %v542, %v1573
  %v1576 = vsel %vm277, %v1569, 0
  %v1579 = vsel %vm277, %v1570, 0
  %1581 = vmatprep.subr.mxu0 0.0
  %1582 = vmatpush1.msra.mxu0 0.0
  %1583 = vmatprep.subr.mxu0 0.0
  %1584 = vmatpush1.msra.mxu0 0.0
  %1585 = vmatprep.subr.mxu0 0.0
  %1586 = vmatpush1.msra.mxu0 0.0
  %1587 = vmatprep.subr.mxu0 0.0
  %1588 = vmatpush1.msra.mxu0 0.0
  %1589 = vmatprep.subr.mxu0 0.0
  %1590 = vmatpush1.msra.mxu0 0.0
  %1591 = vmatprep.subr.mxu0 0.0
  %1592 = vmatpush1.msra.mxu0 0.0
  %1593 = vmatprep.subr.mxu0 0.0
  %1594 = vmatpush1.msra.mxu0 0.0
  %1595 = vmatprep.subr.mxu0 0.0
  %1596 = vmatpush1.msra.mxu0 0.0
  %1597 = vmatprep.subr.mxu0 0.0
  %1598 = vmatpush1.msra.mxu0 0.0
  %1599 = vmatprep.subr.mxu0 0.0
  %1600 = vmatpush1.msra.mxu0 0.0
  %1601 = vmatprep.subr.mxu0 0.0
  %1602 = vmatpush1.msra.mxu0 0.0
  %1603 = vmatprep.subr.mxu0 0.0
  %1604 = vmatpush1.msra.mxu0 0.0
  %1605 = vmatprep.subr.mxu0 0.0
  %1606 = vmatpush1.msra.mxu0 %v526
  %1607 = vmatprep.subr.mxu0 0.0
  %1608 = vmatpush1.msra.mxu0 %v525
  %1609 = vmatprep.subr.mxu0 0.0
  %1610 = vmatpush1.msra.mxu0 %v524
  %1611 = vmatprep.subr.mxu0 0.0
  %1612 = vmatpush1.msra.mxu0 %v523
  %1613 = vmatprep.subr.mxu0 0.0
  %1614 = vmatpush2.msra.mxu0 0.0
  %1615 = vmatprep.subr.mxu0 0.0
  %1616 = vmatpush2.msra.mxu0 0.0
  %1617 = vmatprep.subr.mxu0 0.0
  %1618 = vmatpush2.msra.mxu0 0.0
  %1619 = vmatprep.subr.mxu0 0.0
  %1620 = vmatpush2.msra.mxu0 0.0
  %1621 = vmatprep.subr.mxu0 0.0
  %1622 = vmatpush2.msra.mxu0 0.0
  %1623 = vmatprep.subr.mxu0 0.0
  %1624 = vmatpush2.msra.mxu0 0.0
  %1625 = vmatprep.subr.mxu0 0.0
  %1626 = vmatpush2.msra.mxu0 0.0
  %1627 = vmatprep.subr.mxu0 0.0
  %1628 = vmatpush2.msra.mxu0 0.0
  %1629 = vmatprep.subr.mxu0 0.0
  %1630 = vmatpush2.msra.mxu0 0.0
  %1631 = vmatprep.subr.mxu0 0.0
  %1632 = vmatpush2.msra.mxu0 0.0
  %1633 = vmatprep.subr.mxu0 0.0
  %1634 = vmatpush2.msra.mxu0 0.0
  %1635 = vmatprep.subr.mxu0 0.0
  %1636 = vmatpush2.msra.mxu0 0.0
  %1637 = vmatprep.subr.mxu0 0.0
  %1638 = vmatpush2.msra.mxu0 0.0
  %1639 = vmatprep.subr.mxu0 0.0
  %1640 = vmatpush2.msra.mxu0 0.0
  %1641 = vmatprep.subr.mxu0 0.0
  %1642 = vmatpush2.msra.mxu0 0.0
  %1643 = vmatprep.subr.mxu0 0.0
  %1644 = vmatpush2.msra.mxu0 0.0
  %1645 = vmatprep.mubr.f32.mxu0 0.0
  %1646 = vmatmul.mubr.f32.gmra.mxu0 %v1576
  %v1647 = vpop.f32.mrf.mxu0
  %v1648 = vadd.f32 %v1574, %v1647
  %v1649 = vpop.f32.mrf.mxu0
  %1650 = vmatprep.mubr.f32.mxu0 0.0
  %1651 = vmatmul.mubr.f32.gmra.mxu0 %v1579
  %v1652 = vpop.f32.mrf.mxu0
  %v1653 = vadd.f32 %v1574, %v1652
  %v1654 = vpop.f32.mrf.mxu0
  %1655 = vdwg.mxu0
  %v1656 = vadd.f32 %v487, %v1648
  %v1657 = vadd.f32 %v488, %v1653
  %v1658 = vsel %vm277, %v1656, 0.0
  %1659 = vadd.xlane.f32.xlu0 %v1658
  %v1660 = vpop.xlane.xlu0 %1659
  %v1661 = vsel %vm277, %v1657, 0.0
  %1662 = vadd.xlane.f32.xlu0 %v1661
  %v1663 = vpop.xlane.xlu0 %1662
  %v1664 = vrcp.pop 32.0
  %v1665 = vmul.f32 %v1660, %v1664
  %v1666 = vmul.f32 %v1663, %v1664
  %v1667 = vsub.f32 %v1656, %v1665
  %v1668 = vsub.f32 %v1657, %v1666
  %v1669 = vmul.f32 %v1667, %v1667
  %v1670 = vmul.f32 %v1668, %v1668
  %v1671 = vsel %vm277, %v1669, 0.0
  %1672 = vadd.xlane.f32.xlu0 %v1671
  %v1673 = vpop.xlane.xlu0 %1672
  %v1674 = vsel %vm277, %v1670, 0.0
  %1675 = vadd.xlane.f32.xlu0 %v1674
  %v1676 = vpop.xlane.xlu0 %1675
  %v1677 = vmul.f32 %v1673, %v1664
  %v1678 = vmul.f32 %v1676, %v1664
  %v1679 = vadd.f32 %v1677, 1e-05
  %v1680 = vadd.f32 %v1678, 1e-05
  %v1681 = vrsqrt.pop %v1679
  %v1682 = vrsqrt.pop %v1680
  %v1683 = vmul.f32 %v1667, %v1681
  %v1684 = vmul.f32 %v1668, %v1682
  %v1685 = vlaneseq
  %v1686 = vshrl.u32 %v1685, 7
  %v1687 = vsub.s32 0, %v1686
  %v1688 = vrot.slane %v545, %v1687
  %v1689 = vmul.f32 %v1683, %v1688
  %v1690 = vmul.f32 %v1684, %v1688
  %v1691 = vlaneseq
  %v1692 = vshrl.u32 %v1691, 7
  %v1693 = vsub.s32 0, %v1692
  %v1694 = vrot.slane %v546, %v1693
  %v1695 = vadd.f32 %v1689, %v1694
  %v1696 = vadd.f32 %v1690, %v1694
  %v1697 = vlaneseq
  %v1698 = vshrl.u32 %v1697, 7
  %v1699 = vsub.s32 0, %v1698
  %v1700 = vrot.slane %v543, %v1699
  %v1702 = vsel %vm277, %v1695, 0
  %v1705 = vsel %vm277, %v1696, 0
  %1707 = vmatprep.subr.mxu0 0.0
  %1708 = vmatpush1.msra.mxu0 0.0
  %1709 = vmatprep.subr.mxu0 0.0
  %1710 = vmatpush1.msra.mxu0 0.0
  %1711 = vmatprep.subr.mxu0 0.0
  %1712 = vmatpush1.msra.mxu0 0.0
  %1713 = vmatprep.subr.mxu0 0.0
  %1714 = vmatpush1.msra.mxu0 0.0
  %1715 = vmatprep.subr.mxu0 0.0
  %1716 = vmatpush1.msra.mxu0 0.0
  %1717 = vmatprep.subr.mxu0 0.0
  %1718 = vmatpush1.msra.mxu0 0.0
  %1719 = vmatprep.subr.mxu0 0.0
  %1720 = vmatpush1.msra.mxu0 0.0
  %1721 = vmatprep.subr.mxu0 0.0
  %1722 = vmatpush1.msra.mxu0 0.0
  %1723 = vmatprep.subr.mxu0 0.0
  %1724 = vmatpush1.msra.mxu0 0.0
  %1725 = vmatprep.subr.mxu0 0.0
  %1726 = vmatpush1.msra.mxu0 0.0
  %1727 = vmatprep.subr.mxu0 0.0
  %1728 = vmatpush1.msra.mxu0 0.0
  %1729 = vmatprep.subr.mxu0 0.0
  %1730 = vmatpush1.msra.mxu0 0.0
  %1731 = vmatprep.subr.mxu0 0.0
  %1732 = vmatpush1.msra.mxu0 %v530
  %1733 = vmatprep.subr.mxu0 0.0
  %1734 = vmatpush1.msra.mxu0 %v529
  %1735 = vmatprep.subr.mxu0 0.0
  %1736 = vmatpush1.msra.mxu0 %v528
  %1737 = vmatprep.subr.mxu0 0.0
  %1738 = vmatpush1.msra.mxu0 %v527
  %1739 = vmatprep.subr.mxu0 0.0
  %1740 = vmatpush2.msra.mxu0 0.0
  %1741 = vmatprep.subr.mxu0 0.0
  %1742 = vmatpush2.msra.mxu0 0.0
  %1743 = vmatprep.subr.mxu0 0.0
  %1744 = vmatpush2.msra.mxu0 0.0
  %1745 = vmatprep.subr.mxu0 0.0
  %1746 = vmatpush2.msra.mxu0 0.0
  %1747 = vmatprep.subr.mxu0 0.0
  %1748 = vmatpush2.msra.mxu0 0.0
  %1749 = vmatprep.subr.mxu0 0.0
  %1750 = vmatpush2.msra.mxu0 0.0
  %1751 = vmatprep.subr.mxu0 0.0
  %1752 = vmatpush2.msra.mxu0 0.0
  %1753 = vmatprep.subr.mxu0 0.0
  %1754 = vmatpush2.msra.mxu0 0.0
  %1755 = vmatprep.subr.mxu0 0.0
  %1756 = vmatpush2.msra.mxu0 0.0
  %1757 = vmatprep.subr.mxu0 0.0
  %1758 = vmatpush2.msra.mxu0 0.0
  %1759 = vmatprep.subr.mxu0 0.0
  %1760 = vmatpush2.msra.mxu0 0.0
  %1761 = vmatprep.subr.mxu0 0.0
  %1762 = vmatpush2.msra.mxu0 0.0
  %1763 = vmatprep.subr.mxu0 0.0
  %1764 = vmatpush2.msra.mxu0 0.0
  %1765 = vmatprep.subr.mxu0 0.0
  %1766 = vmatpush2.msra.mxu0 0.0
  %1767 = vmatprep.subr.mxu0 0.0
  %1768 = vmatpush2.msra.mxu0 0.0
  %1769 = vmatprep.subr.mxu0 0.0
  %1770 = vmatpush2.msra.mxu0 0.0
  %1771 = vmatprep.mubr.f32.mxu0 0.0
  %1772 = vmatmul.mubr.f32.gmra.mxu0 %v1702
  %v1773 = vpop.f32.mrf.mxu0
  %v1774 = vadd.f32 %v1700, %v1773
  %v1775 = vpop.f32.mrf.mxu0
  %1776 = vmatprep.mubr.f32.mxu0 0.0
  %1777 = vmatmul.mubr.f32.gmra.mxu0 %v1705
  %v1778 = vpop.f32.mrf.mxu0
  %v1779 = vadd.f32 %v1700, %v1778
  %v1780 = vpop.f32.mrf.mxu0
  %1781 = vdwg.mxu0
  %v1782 = vmul.f32 %v1774, %v1774
  %v1783 = vmul.f32 %v1779, %v1779
  %v1784 = vmul.f32 %v1774, %v1782
  %v1785 = vmul.f32 %v1779, %v1783
  %v1786 = vmul.f32 %v1784, 0.044715
  %v1787 = vmul.f32 %v1785, 0.044715
  %v1788 = vadd.f32 %v1774, %v1786
  %v1789 = vadd.f32 %v1779, %v1787
  %v1790 = vmul.f32 %v1788, 0.7978846
  %v1791 = vmul.f32 %v1789, 0.7978846
  %v1792 = vtanh.pop %v1790
  %v1793 = vtanh.pop %v1791
  %v1794 = vadd.f32 %v1792, 1.0
  %v1795 = vadd.f32 %v1793, 1.0
  %v1796 = vmul.f32 %v1794, 0.5
  %v1797 = vmul.f32 %v1795, 0.5
  %v1798 = vmul.f32 %v1774, %v1796
  %v1799 = vmul.f32 %v1779, %v1797
  %v1800 = vlaneseq
  %v1801 = vshrl.u32 %v1800, 7
  %v1802 = vsub.s32 0, %v1801
  %v1803 = vrot.slane %v544, %v1802
  %v1805 = vsel %vm170, %v1798, 0
  %v1808 = vsel %vm170, %v1799, 0
  %1810 = vmatprep.subr.mxu0 0.0
  %1811 = vmatpush1.msra.mxu0 0.0
  %1812 = vmatprep.subr.mxu0 0.0
  %1813 = vmatpush1.msra.mxu0 0.0
  %1814 = vmatprep.subr.mxu0 0.0
  %1815 = vmatpush1.msra.mxu0 0.0
  %1816 = vmatprep.subr.mxu0 0.0
  %1817 = vmatpush1.msra.mxu0 0.0
  %1818 = vmatprep.subr.mxu0 0.0
  %1819 = vmatpush1.msra.mxu0 0.0
  %1820 = vmatprep.subr.mxu0 0.0
  %1821 = vmatpush1.msra.mxu0 0.0
  %1822 = vmatprep.subr.mxu0 0.0
  %1823 = vmatpush1.msra.mxu0 0.0
  %1824 = vmatprep.subr.mxu0 0.0
  %1825 = vmatpush1.msra.mxu0 0.0
  %1826 = vmatprep.subr.mxu0 0.0
  %1827 = vmatpush1.msra.mxu0 %v538
  %1828 = vmatprep.subr.mxu0 0.0
  %1829 = vmatpush1.msra.mxu0 %v537
  %1830 = vmatprep.subr.mxu0 0.0
  %1831 = vmatpush1.msra.mxu0 %v536
  %1832 = vmatprep.subr.mxu0 0.0
  %1833 = vmatpush1.msra.mxu0 %v535
  %1834 = vmatprep.subr.mxu0 0.0
  %1835 = vmatpush1.msra.mxu0 %v534
  %1836 = vmatprep.subr.mxu0 0.0
  %1837 = vmatpush1.msra.mxu0 %v533
  %1838 = vmatprep.subr.mxu0 0.0
  %1839 = vmatpush1.msra.mxu0 %v532
  %1840 = vmatprep.subr.mxu0 0.0
  %1841 = vmatpush1.msra.mxu0 %v531
  %1842 = vmatprep.subr.mxu0 0.0
  %1843 = vmatpush2.msra.mxu0 0.0
  %1844 = vmatprep.subr.mxu0 0.0
  %1845 = vmatpush2.msra.mxu0 0.0
  %1846 = vmatprep.subr.mxu0 0.0
  %1847 = vmatpush2.msra.mxu0 0.0
  %1848 = vmatprep.subr.mxu0 0.0
  %1849 = vmatpush2.msra.mxu0 0.0
  %1850 = vmatprep.subr.mxu0 0.0
  %1851 = vmatpush2.msra.mxu0 0.0
  %1852 = vmatprep.subr.mxu0 0.0
  %1853 = vmatpush2.msra.mxu0 0.0
  %1854 = vmatprep.subr.mxu0 0.0
  %1855 = vmatpush2.msra.mxu0 0.0
  %1856 = vmatprep.subr.mxu0 0.0
  %1857 = vmatpush2.msra.mxu0 0.0
  %1858 = vmatprep.subr.mxu0 0.0
  %1859 = vmatpush2.msra.mxu0 0.0
  %1860 = vmatprep.subr.mxu0 0.0
  %1861 = vmatpush2.msra.mxu0 0.0
  %1862 = vmatprep.subr.mxu0 0.0
  %1863 = vmatpush2.msra.mxu0 0.0
  %1864 = vmatprep.subr.mxu0 0.0
  %1865 = vmatpush2.msra.mxu0 0.0
  %1866 = vmatprep.subr.mxu0 0.0
  %1867 = vmatpush2.msra.mxu0 0.0
  %1868 = vmatprep.subr.mxu0 0.0
  %1869 = vmatpush2.msra.mxu0 0.0
  %1870 = vmatprep.subr.mxu0 0.0
  %1871 = vmatpush2.msra.mxu0 0.0
  %1872 = vmatprep.subr.mxu0 0.0
  %1873 = vmatpush2.msra.mxu0 0.0
  %1874 = vmatprep.mubr.f32.mxu0 0.0
  %1875 = vmatmul.mubr.f32.gmra.mxu0 %v1805
  %v1876 = vpop.f32.mrf.mxu0
  %v1877 = vadd.f32 %v1803, %v1876
  %v1878 = vpop.f32.mrf.mxu0
  %1879 = vmatprep.mubr.f32.mxu0 0.0
  %1880 = vmatmul.mubr.f32.gmra.mxu0 %v1808
  %v1881 = vpop.f32.mrf.mxu0
  %v1882 = vadd.f32 %v1803, %v1881
  %v1883 = vpop.f32.mrf.mxu0
  %1884 = vdwg.mxu0
  %v1885 = vadd.f32 %v1695, %v1877
  %v1886 = vadd.f32 %v1696, %v1882
  %v1887 = vsel %vm277, %v1885, 0.0
  %1888 = vadd.xlane.f32.xlu0 %v1887
  %v1889 = vpop.xlane.xlu0 %1888
  %v1890 = vsel %vm277, %v1886, 0.0
  %1891 = vadd.xlane.f32.xlu0 %v1890
  %v1892 = vpop.xlane.xlu0 %1891
  %v1893 = vmul.f32 %v1889, %v1664
  %v1894 = vmul.f32 %v1892, %v1664
  %v1895 = vsub.f32 %v1885, %v1893
  %v1896 = vsub.f32 %v1886, %v1894
  %v1897 = vmul.f32 %v1895, %v1895
  %v1898 = vmul.f32 %v1896, %v1896
  %v1899 = vsel %vm277, %v1897, 0.0
  %1900 = vadd.xlane.f32.xlu0 %v1899
  %v1901 = vpop.xlane.xlu0 %1900
  %v1902 = vsel %vm277, %v1898, 0.0
  %1903 = vadd.xlane.f32.xlu0 %v1902
  %v1904 = vpop.xlane.xlu0 %1903
  %v1905 = vmul.f32 %v1901, %v1664
  %v1906 = vmul.f32 %v1904, %v1664
  %v1907 = vadd.f32 %v1905, 1e-05
  %v1908 = vadd.f32 %v1906, 1e-05
  %v1909 = vrsqrt.pop %v1907
  %v1910 = vrsqrt.pop %v1908
  %v1911 = vmul.f32 %v1895, %v1909
  %v1912 = vmul.f32 %v1896, %v1910
  %v1913 = vlaneseq
  %v1914 = vshrl.u32 %v1913, 7
  %v1915 = vsub.s32 0, %v1914
  %v1916 = vrot.slane %v547, %v1915
  %v1917 = vmul.f32 %v1911, %v1916
  %v1918 = vmul.f32 %v1912, %v1916
  %v1919 = vlaneseq
  %v1920 = vshrl.u32 %v1919, 7
  %v1921 = vsub.s32 0, %v1920
  %v1922 = vrot.slane %v548, %v1921
  %v1923 = vadd.f32 %v1917, %v1922
  %v1924 = vadd.f32 %v1918, %v1922
  %s1925 = scalar_lea.vmem %s6, 224
  %v1926 = vld [vmem:[%s1925] sm:$0xff]
  %v1927 = vld [vmem:[%s1925 + $0x8] sm:$0xff]
  %v1928 = vld [vmem:[%s1925 + $0x10] sm:$0xff]
  %v1929 = vld [vmem:[%s1925 + $0x18] sm:$0xff]
  %v1930 = vld [vmem:[%s1925 + $0x20] sm:$0xff]
  %v1931 = vld [vmem:[%s1925 + $0x28] sm:$0xff]
  %v1932 = vld [vmem:[%s1925 + $0x30] sm:$0xff]
  %v1933 = vld [vmem:[%s1925 + $0x38] sm:$0xff]
  %v1934 = vld [vmem:[%s1925 + $0x40] sm:$0xff]
  %v1935 = vld [vmem:[%s1925 + $0x48] sm:$0xff]
  %v1936 = vld [vmem:[%s1925 + $0x50] sm:$0xff]
  %v1937 = vld [vmem:[%s1925 + $0x58] sm:$0xff]
  %v1938 = vld [vmem:[%s1925 + $0x60] sm:$0xff]
  %v1939 = vld [vmem:[%s1925 + $0x68] sm:$0xff]
  %v1940 = vld [vmem:[%s1925 + $0x70] sm:$0xff]
  %v1941 = vld [vmem:[%s1925 + $0x78] sm:$0xff]
  %v1942 = vld [vmem:[%s1925 + $0x80] sm:$0xff]
  %v1943 = vld [vmem:[%s1925 + $0x88] sm:$0xff]
  %v1944 = vld [vmem:[%s1925 + $0x90] sm:$0xff]
  %v1945 = vld [vmem:[%s1925 + $0x98] sm:$0xff]
  %v1946 = vld [vmem:[%s1925 + $0xa0] sm:$0xff]
  %v1947 = vld [vmem:[%s1925 + $0xa8] sm:$0xff]
  %v1948 = vld [vmem:[%s1925 + $0xb0] sm:$0xff]
  %v1949 = vld [vmem:[%s1925 + $0xb8] sm:$0xff]
  %v1950 = vld [vmem:[%s1925 + $0xc0] sm:$0xff]
  %v1951 = vld [vmem:[%s1925 + $0xc8] sm:$0xff]
  %v1952 = vld [vmem:[%s1925 + $0xd0] sm:$0xff]
  %v1953 = vld [vmem:[%s1925 + $0xd8] sm:$0xff]
  %s1954 = scalar_lea.vmem %s7, 16
  %v1955 = vld [vmem:[%s1954] sm:$0x1]
  %v1956 = vld [vmem:[%s1954 + $0x1] sm:$0x1]
  %v1957 = vld [vmem:[%s1954 + $0x2] sm:$0x1]
  %v1958 = vld [vmem:[%s1954 + $0x3] sm:$0x1]
  %v1959 = vld [vmem:[%s1954 + $0x4] sm:$0x1]
  %v1960 = vld [vmem:[%s1954 + $0x5] sm:$0x1]
  %v1961 = vld [vmem:[%s1954 + $0x6] sm:$0x1]
  %v1962 = vld [vmem:[%s1954 + $0x7] sm:$0x1]
  %v1963 = vld [vmem:[%s1954 + $0x8] sm:$0x1]
  %v1964 = vld [vmem:[%s1954 + $0x9] sm:$0x1]
  %v1965 = vlaneseq
  %v1966 = vshrl.u32 %v1965, 7
  %v1967 = vsub.s32 0, %v1966
  %v1968 = vrot.slane %v1955, %v1967
  %v1970 = vsel %vm277, %v1923, 0
  %v1973 = vsel %vm277, %v1924, 0
  %1975 = vmatprep.subr.mxu0 0.0
  %1976 = vmatpush1.msra.mxu0 0.0
  %1977 = vmatprep.subr.mxu0 0.0
  %1978 = vmatpush1.msra.mxu0 0.0
  %1979 = vmatprep.subr.mxu0 0.0
  %1980 = vmatpush1.msra.mxu0 0.0
  %1981 = vmatprep.subr.mxu0 0.0
  %1982 = vmatpush1.msra.mxu0 0.0
  %1983 = vmatprep.subr.mxu0 0.0
  %1984 = vmatpush1.msra.mxu0 0.0
  %1985 = vmatprep.subr.mxu0 0.0
  %1986 = vmatpush1.msra.mxu0 0.0
  %1987 = vmatprep.subr.mxu0 0.0
  %1988 = vmatpush1.msra.mxu0 0.0
  %1989 = vmatprep.subr.mxu0 0.0
  %1990 = vmatpush1.msra.mxu0 0.0
  %1991 = vmatprep.subr.mxu0 0.0
  %1992 = vmatpush1.msra.mxu0 0.0
  %1993 = vmatprep.subr.mxu0 0.0
  %1994 = vmatpush1.msra.mxu0 0.0
  %1995 = vmatprep.subr.mxu0 0.0
  %1996 = vmatpush1.msra.mxu0 0.0
  %1997 = vmatprep.subr.mxu0 0.0
  %1998 = vmatpush1.msra.mxu0 0.0
  %1999 = vmatprep.subr.mxu0 0.0
  %2000 = vmatpush1.msra.mxu0 %v1929
  %2001 = vmatprep.subr.mxu0 0.0
  %2002 = vmatpush1.msra.mxu0 %v1928
  %2003 = vmatprep.subr.mxu0 0.0
  %2004 = vmatpush1.msra.mxu0 %v1927
  %2005 = vmatprep.subr.mxu0 0.0
  %2006 = vmatpush1.msra.mxu0 %v1926
  %2007 = vmatprep.subr.mxu0 0.0
  %2008 = vmatpush2.msra.mxu0 0.0
  %2009 = vmatprep.subr.mxu0 0.0
  %2010 = vmatpush2.msra.mxu0 0.0
  %2011 = vmatprep.subr.mxu0 0.0
  %2012 = vmatpush2.msra.mxu0 0.0
  %2013 = vmatprep.subr.mxu0 0.0
  %2014 = vmatpush2.msra.mxu0 0.0
  %2015 = vmatprep.subr.mxu0 0.0
  %2016 = vmatpush2.msra.mxu0 0.0
  %2017 = vmatprep.subr.mxu0 0.0
  %2018 = vmatpush2.msra.mxu0 0.0
  %2019 = vmatprep.subr.mxu0 0.0
  %2020 = vmatpush2.msra.mxu0 0.0
  %2021 = vmatprep.subr.mxu0 0.0
  %2022 = vmatpush2.msra.mxu0 0.0
  %2023 = vmatprep.subr.mxu0 0.0
  %2024 = vmatpush2.msra.mxu0 0.0
  %2025 = vmatprep.subr.mxu0 0.0
  %2026 = vmatpush2.msra.mxu0 0.0
  %2027 = vmatprep.subr.mxu0 0.0
  %2028 = vmatpush2.msra.mxu0 0.0
  %2029 = vmatprep.subr.mxu0 0.0
  %2030 = vmatpush2.msra.mxu0 0.0
  %2031 = vmatprep.subr.mxu0 0.0
  %2032 = vmatpush2.msra.mxu0 0.0
  %2033 = vmatprep.subr.mxu0 0.0
  %2034 = vmatpush2.msra.mxu0 0.0
  %2035 = vmatprep.subr.mxu0 0.0
  %2036 = vmatpush2.msra.mxu0 0.0
  %2037 = vmatprep.subr.mxu0 0.0
  %2038 = vmatpush2.msra.mxu0 0.0
  %2039 = vmatprep.mubr.f32.mxu0 0.0
  %2040 = vmatmul.mubr.f32.gmra.mxu0 %v1970
  %v2041 = vpop.f32.mrf.mxu0
  %v2042 = vadd.f32 %v1968, %v2041
  %v2043 = vpop.f32.mrf.mxu0
  %2044 = vmatprep.mubr.f32.mxu0 0.0
  %2045 = vmatmul.mubr.f32.gmra.mxu0 %v1973
  %v2046 = vpop.f32.mrf.mxu0
  %v2047 = vadd.f32 %v1968, %v2046
  %v2048 = vpop.f32.mrf.mxu0
  %2049 = vdwg.mxu0
  %v2050 = vlaneseq
  %v2051 = vshrl.u32 %v2050, 7
  %v2052 = vsub.s32 0, %v2051
  %v2053 = vrot.slane %v1956, %v2052
  %2054 = vmatprep.subr.mxu0 0.0
  %2055 = vmatpush1.msra.mxu0 0.0
  %2056 = vmatprep.subr.mxu0 0.0
  %2057 = vmatpush1.msra.mxu0 0.0
  %2058 = vmatprep.subr.mxu0 0.0
  %2059 = vmatpush1.msra.mxu0 0.0
  %2060 = vmatprep.subr.mxu0 0.0
  %2061 = vmatpush1.msra.mxu0 0.0
  %2062 = vmatprep.subr.mxu0 0.0
  %2063 = vmatpush1.msra.mxu0 0.0
  %2064 = vmatprep.subr.mxu0 0.0
  %2065 = vmatpush1.msra.mxu0 0.0
  %2066 = vmatprep.subr.mxu0 0.0
  %2067 = vmatpush1.msra.mxu0 0.0
  %2068 = vmatprep.subr.mxu0 0.0
  %2069 = vmatpush1.msra.mxu0 0.0
  %2070 = vmatprep.subr.mxu0 0.0
  %2071 = vmatpush1.msra.mxu0 0.0
  %2072 = vmatprep.subr.mxu0 0.0
  %2073 = vmatpush1.msra.mxu0 0.0
  %2074 = vmatprep.subr.mxu0 0.0
  %2075 = vmatpush1.msra.mxu0 0.0
  %2076 = vmatprep.subr.mxu0 0.0
  %2077 = vmatpush1.msra.mxu0 0.0
  %2078 = vmatprep.subr.mxu0 0.0
  %2079 = vmatpush1.msra.mxu0 %v1933
  %2080 = vmatprep.subr.mxu0 0.0
  %2081 = vmatpush1.msra.mxu0 %v1932
  %2082 = vmatprep.subr.mxu0 0.0
  %2083 = vmatpush1.msra.mxu0 %v1931
  %2084 = vmatprep.subr.mxu0 0.0
  %2085 = vmatpush1.msra.mxu0 %v1930
  %2086 = vmatprep.subr.mxu0 0.0
  %2087 = vmatpush2.msra.mxu0 0.0
  %2088 = vmatprep.subr.mxu0 0.0
  %2089 = vmatpush2.msra.mxu0 0.0
  %2090 = vmatprep.subr.mxu0 0.0
  %2091 = vmatpush2.msra.mxu0 0.0
  %2092 = vmatprep.subr.mxu0 0.0
  %2093 = vmatpush2.msra.mxu0 0.0
  %2094 = vmatprep.subr.mxu0 0.0
  %2095 = vmatpush2.msra.mxu0 0.0
  %2096 = vmatprep.subr.mxu0 0.0
  %2097 = vmatpush2.msra.mxu0 0.0
  %2098 = vmatprep.subr.mxu0 0.0
  %2099 = vmatpush2.msra.mxu0 0.0
  %2100 = vmatprep.subr.mxu0 0.0
  %2101 = vmatpush2.msra.mxu0 0.0
  %2102 = vmatprep.subr.mxu0 0.0
  %2103 = vmatpush2.msra.mxu0 0.0
  %2104 = vmatprep.subr.mxu0 0.0
  %2105 = vmatpush2.msra.mxu0 0.0
  %2106 = vmatprep.subr.mxu0 0.0
  %2107 = vmatpush2.msra.mxu0 0.0
  %2108 = vmatprep.subr.mxu0 0.0
  %2109 = vmatpush2.msra.mxu0 0.0
  %2110 = vmatprep.subr.mxu0 0.0
  %2111 = vmatpush2.msra.mxu0 0.0
  %2112 = vmatprep.subr.mxu0 0.0
  %2113 = vmatpush2.msra.mxu0 0.0
  %2114 = vmatprep.subr.mxu0 0.0
  %2115 = vmatpush2.msra.mxu0 0.0
  %2116 = vmatprep.subr.mxu0 0.0
  %2117 = vmatpush2.msra.mxu0 0.0
  %2118 = vmatprep.mubr.f32.mxu0 0.0
  %2119 = vmatmul.mubr.f32.gmra.mxu0 %v1970
  %v2120 = vpop.f32.mrf.mxu0
  %v2121 = vadd.f32 %v2053, %v2120
  %v2122 = vpop.f32.mrf.mxu0
  %2123 = vmatprep.mubr.f32.mxu0 0.0
  %2124 = vmatmul.mubr.f32.gmra.mxu0 %v1973
  %v2125 = vpop.f32.mrf.mxu0
  %v2126 = vadd.f32 %v2053, %v2125
  %v2127 = vpop.f32.mrf.mxu0
  %2128 = vdwg.mxu0
  %v2129 = vlaneseq
  %v2130 = vshrl.u32 %v2129, 7
  %v2131 = vsub.s32 0, %v2130
  %v2132 = vrot.slane %v1957, %v2131
  %2133 = vmatprep.subr.mxu0 0.0
  %2134 = vmatpush1.msra.mxu0 0.0
  %2135 = vmatprep.subr.mxu0 0.0
  %2136 = vmatpush1.msra.mxu0 0.0
  %2137 = vmatprep.subr.mxu0 0.0
  %2138 = vmatpush1.msra.mxu0 0.0
  %2139 = vmatprep.subr.mxu0 0.0
  %2140 = vmatpush1.msra.mxu0 0.0
  %2141 = vmatprep.subr.mxu0 0.0
  %2142 = vmatpush1.msra.mxu0 0.0
  %2143 = vmatprep.subr.mxu0 0.0
  %2144 = vmatpush1.msra.mxu0 0.0
  %2145 = vmatprep.subr.mxu0 0.0
  %2146 = vmatpush1.msra.mxu0 0.0
  %2147 = vmatprep.subr.mxu0 0.0
  %2148 = vmatpush1.msra.mxu0 0.0
  %2149 = vmatprep.subr.mxu0 0.0
  %2150 = vmatpush1.msra.mxu0 0.0
  %2151 = vmatprep.subr.mxu0 0.0
  %2152 = vmatpush1.msra.mxu0 0.0
  %2153 = vmatprep.subr.mxu0 0.0
  %2154 = vmatpush1.msra.mxu0 0.0
  %2155 = vmatprep.subr.mxu0 0.0
  %2156 = vmatpush1.msra.mxu0 0.0
  %2157 = vmatprep.subr.mxu0 0.0
  %2158 = vmatpush1.msra.mxu0 %v1937
  %2159 = vmatprep.subr.mxu0 0.0
  %2160 = vmatpush1.msra.mxu0 %v1936
  %2161 = vmatprep.subr.mxu0 0.0
  %2162 = vmatpush1.msra.mxu0 %v1935
  %2163 = vmatprep.subr.mxu0 0.0
  %2164 = vmatpush1.msra.mxu0 %v1934
  %2165 = vmatprep.subr.mxu0 0.0
  %2166 = vmatpush2.msra.mxu0 0.0
  %2167 = vmatprep.subr.mxu0 0.0
  %2168 = vmatpush2.msra.mxu0 0.0
  %2169 = vmatprep.subr.mxu0 0.0
  %2170 = vmatpush2.msra.mxu0 0.0
  %2171 = vmatprep.subr.mxu0 0.0
  %2172 = vmatpush2.msra.mxu0 0.0
  %2173 = vmatprep.subr.mxu0 0.0
  %2174 = vmatpush2.msra.mxu0 0.0
  %2175 = vmatprep.subr.mxu0 0.0
  %2176 = vmatpush2.msra.mxu0 0.0
  %2177 = vmatprep.subr.mxu0 0.0
  %2178 = vmatpush2.msra.mxu0 0.0
  %2179 = vmatprep.subr.mxu0 0.0
  %2180 = vmatpush2.msra.mxu0 0.0
  %2181 = vmatprep.subr.mxu0 0.0
  %2182 = vmatpush2.msra.mxu0 0.0
  %2183 = vmatprep.subr.mxu0 0.0
  %2184 = vmatpush2.msra.mxu0 0.0
  %2185 = vmatprep.subr.mxu0 0.0
  %2186 = vmatpush2.msra.mxu0 0.0
  %2187 = vmatprep.subr.mxu0 0.0
  %2188 = vmatpush2.msra.mxu0 0.0
  %2189 = vmatprep.subr.mxu0 0.0
  %2190 = vmatpush2.msra.mxu0 0.0
  %2191 = vmatprep.subr.mxu0 0.0
  %2192 = vmatpush2.msra.mxu0 0.0
  %2193 = vmatprep.subr.mxu0 0.0
  %2194 = vmatpush2.msra.mxu0 0.0
  %2195 = vmatprep.subr.mxu0 0.0
  %2196 = vmatpush2.msra.mxu0 0.0
  %2197 = vmatprep.mubr.f32.mxu0 0.0
  %2198 = vmatmul.mubr.f32.gmra.mxu0 %v1970
  %v2199 = vpop.f32.mrf.mxu0
  %v2200 = vadd.f32 %v2132, %v2199
  %v2201 = vpop.f32.mrf.mxu0
  %2202 = vmatprep.mubr.f32.mxu0 0.0
  %2203 = vmatmul.mubr.f32.gmra.mxu0 %v1973
  %v2204 = vpop.f32.mrf.mxu0
  %v2205 = vadd.f32 %v2132, %v2204
  %v2206 = vpop.f32.mrf.mxu0
  %2207 = vdwg.mxu0
  %v2208 = vmul.f32 %v2121, %v495
  %v2209 = vmul.f32 %v2126, %v495
  %v2211 = vsel %vm277, %v2042, 0
  %v2214 = vsel %vm277, %v2047, 0
  %v2217 = vsel %vm277, %v2208, 0
  %v2220 = vsel %vm277, %v2209, 0
  %2222 = vmatprep.subr.mxu0 0.0
  %2223 = vmatpush1.xpose.msra.mxu0 0.0
  %2224 = vmatprep.subr.mxu0 0.0
  %2225 = vmatpush1.xpose.msra.mxu0 0.0
  %2226 = vmatprep.subr.mxu0 0.0
  %2227 = vmatpush1.xpose.msra.mxu0 0.0
  %2228 = vmatprep.subr.mxu0 0.0
  %2229 = vmatpush1.xpose.msra.mxu0 0.0
  %2230 = vmatprep.subr.mxu0 0.0
  %2231 = vmatpush1.xpose.msra.mxu0 0.0
  %2232 = vmatprep.subr.mxu0 0.0
  %2233 = vmatpush1.xpose.msra.mxu0 0.0
  %2234 = vmatprep.subr.mxu0 0.0
  %2235 = vmatpush1.xpose.msra.mxu0 0.0
  %2236 = vmatprep.subr.mxu0 0.0
  %2237 = vmatpush1.xpose.msra.mxu0 0.0
  %2238 = vmatprep.subr.mxu0 0.0
  %2239 = vmatpush1.xpose.msra.mxu0 0.0
  %2240 = vmatprep.subr.mxu0 0.0
  %2241 = vmatpush1.xpose.msra.mxu0 0.0
  %2242 = vmatprep.subr.mxu0 0.0
  %2243 = vmatpush1.xpose.msra.mxu0 0.0
  %2244 = vmatprep.subr.mxu0 0.0
  %2245 = vmatpush1.xpose.msra.mxu0 0.0
  %2246 = vmatprep.subr.mxu0 0.0
  %2247 = vmatpush1.xpose.msra.mxu0 0.0
  %2248 = vmatprep.subr.mxu0 0.0
  %2249 = vmatpush1.xpose.msra.mxu0 0.0
  %2250 = vmatprep.subr.mxu0 0.0
  %2251 = vmatpush1.xpose.msra.mxu0 %v2220
  %2252 = vmatprep.subr.mxu0 0.0
  %2253 = vmatpush1.xpose.msra.mxu0 %v2217
  %2254 = vmatprep.subr.mxu0 0.0
  %2255 = vmatpush2.xpose.msra.mxu0 0.0
  %2256 = vmatprep.subr.mxu0 0.0
  %2257 = vmatpush2.xpose.msra.mxu0 0.0
  %2258 = vmatprep.subr.mxu0 0.0
  %2259 = vmatpush2.xpose.msra.mxu0 0.0
  %2260 = vmatprep.subr.mxu0 0.0
  %2261 = vmatpush2.xpose.msra.mxu0 0.0
  %2262 = vmatprep.subr.mxu0 0.0
  %2263 = vmatpush2.xpose.msra.mxu0 0.0
  %2264 = vmatprep.subr.mxu0 0.0
  %2265 = vmatpush2.xpose.msra.mxu0 0.0
  %2266 = vmatprep.subr.mxu0 0.0
  %2267 = vmatpush2.xpose.msra.mxu0 0.0
  %2268 = vmatprep.subr.mxu0 0.0
  %2269 = vmatpush2.xpose.msra.mxu0 0.0
  %2270 = vmatprep.subr.mxu0 0.0
  %2271 = vmatpush2.xpose.msra.mxu0 0.0
  %2272 = vmatprep.subr.mxu0 0.0
  %2273 = vmatpush2.xpose.msra.mxu0 0.0
  %2274 = vmatprep.subr.mxu0 0.0
  %2275 = vmatpush2.xpose.msra.mxu0 0.0
  %2276 = vmatprep.subr.mxu0 0.0
  %2277 = vmatpush2.xpose.msra.mxu0 0.0
  %2278 = vmatprep.subr.mxu0 0.0
  %2279 = vmatpush2.xpose.msra.mxu0 0.0
  %2280 = vmatprep.subr.mxu0 0.0
  %2281 = vmatpush2.xpose.msra.mxu0 0.0
  %2282 = vmatprep.subr.mxu0 0.0
  %2283 = vmatpush2.xpose.msra.mxu0 0.0
  %2284 = vmatprep.subr.mxu0 0.0
  %2285 = vmatpush2.xpose.msra.mxu0 0.0
  %2286 = vmatprep.mubr.f32.mxu0 0.0
  %2287 = vmatmul.mubr.f32.gmra.mxu0 %v2211
  %v2288 = vpop.f32.mrf.mxu0
  %v2289 = vadd.f32 0.0, %v2288
  %v2290 = vpop.f32.mrf.mxu0
  %2291 = vmatprep.mubr.f32.mxu0 0.0
  %2292 = vmatmul.mubr.f32.gmra.mxu0 %v2214
  %v2293 = vpop.f32.mrf.mxu0
  %v2294 = vadd.f32 0.0, %v2293
  %v2295 = vpop.f32.mrf.mxu0
  %2296 = vdwg.mxu0
  %v2297 = vmul.f32 %v2289, 0.35355338
  %v2298 = vmul.f32 %v2294, 0.35355338
  %v2299 = vadd.f32 %v2297, %v35
  %v2300 = vadd.f32 %v2298, %v36
  %v2301 = vsel %vm885, %v2299, -inf
  %2302 = vmax.xlane.f32.xlu0 %v2301
  %v2303 = vpop.xlane.xlu0 %2302
  %v2304 = vsel %vm885, %v2300, -inf
  %2305 = vmax.xlane.f32.xlu0 %v2304
  %v2306 = vpop.xlane.xlu0 %2305
  %v2307 = vsub.f32 %v2299, %v2303
  %v2308 = vsub.f32 %v2300, %v2306
  %v2309 = vmul.f32 %v2307, 1.442695
  %v2310 = vpow.pop %v2309
  %v2311 = vmul.f32 %v2308, 1.442695
  %v2312 = vpow.pop %v2311
  %v2313 = vsel %vm885, %v2310, 0.0
  %2314 = vadd.xlane.f32.xlu0 %v2313
  %v2315 = vpop.xlane.xlu0 %2314
  %v2316 = vsel %vm885, %v2312, 0.0
  %2317 = vadd.xlane.f32.xlu0 %v2316
  %v2318 = vpop.xlane.xlu0 %2317
  %v2319 = vrcp.pop %v2315
  %v2320 = vrcp.pop %v2318
  %v2321 = vmul.f32 %v2310, %v2319
  %v2322 = vmul.f32 %v2312, %v2320
  %v2323 = vmul.f32 %v2200, %v495
  %v2324 = vmul.f32 %v2205, %v495
  %v2325 = vmul.f32 %v2121, %v500
  %v2326 = vmul.f32 %v2126, %v500
  %v2328 = vsel %vm277, %v2325, 0
  %v2331 = vsel %vm277, %v2326, 0
  %2333 = vmatprep.subr.mxu0 0.0
  %2334 = vmatpush1.xpose.msra.mxu0 0.0
  %2335 = vmatprep.subr.mxu0 0.0
  %2336 = vmatpush1.xpose.msra.mxu0 0.0
  %2337 = vmatprep.subr.mxu0 0.0
  %2338 = vmatpush1.xpose.msra.mxu0 0.0
  %2339 = vmatprep.subr.mxu0 0.0
  %2340 = vmatpush1.xpose.msra.mxu0 0.0
  %2341 = vmatprep.subr.mxu0 0.0
  %2342 = vmatpush1.xpose.msra.mxu0 0.0
  %2343 = vmatprep.subr.mxu0 0.0
  %2344 = vmatpush1.xpose.msra.mxu0 0.0
  %2345 = vmatprep.subr.mxu0 0.0
  %2346 = vmatpush1.xpose.msra.mxu0 0.0
  %2347 = vmatprep.subr.mxu0 0.0
  %2348 = vmatpush1.xpose.msra.mxu0 0.0
  %2349 = vmatprep.subr.mxu0 0.0
  %2350 = vmatpush1.xpose.msra.mxu0 0.0
  %2351 = vmatprep.subr.mxu0 0.0
  %2352 = vmatpush1.xpose.msra.mxu0 0.0
  %2353 = vmatprep.subr.mxu0 0.0
  %2354 = vmatpush1.xpose.msra.mxu0 0.0
  %2355 = vmatprep.subr.mxu0 0.0
  %2356 = vmatpush1.xpose.msra.mxu0 0.0
  %2357 = vmatprep.subr.mxu0 0.0
  %2358 = vmatpush1.xpose.msra.mxu0 0.0
  %2359 = vmatprep.subr.mxu0 0.0
  %2360 = vmatpush1.xpose.msra.mxu0 0.0
  %2361 = vmatprep.subr.mxu0 0.0
  %2362 = vmatpush1.xpose.msra.mxu0 %v2331
  %2363 = vmatprep.subr.mxu0 0.0
  %2364 = vmatpush1.xpose.msra.mxu0 %v2328
  %2365 = vmatprep.subr.mxu0 0.0
  %2366 = vmatpush2.xpose.msra.mxu0 0.0
  %2367 = vmatprep.subr.mxu0 0.0
  %2368 = vmatpush2.xpose.msra.mxu0 0.0
  %2369 = vmatprep.subr.mxu0 0.0
  %2370 = vmatpush2.xpose.msra.mxu0 0.0
  %2371 = vmatprep.subr.mxu0 0.0
  %2372 = vmatpush2.xpose.msra.mxu0 0.0
  %2373 = vmatprep.subr.mxu0 0.0
  %2374 = vmatpush2.xpose.msra.mxu0 0.0
  %2375 = vmatprep.subr.mxu0 0.0
  %2376 = vmatpush2.xpose.msra.mxu0 0.0
  %2377 = vmatprep.subr.mxu0 0.0
  %2378 = vmatpush2.xpose.msra.mxu0 0.0
  %2379 = vmatprep.subr.mxu0 0.0
  %2380 = vmatpush2.xpose.msra.mxu0 0.0
  %2381 = vmatprep.subr.mxu0 0.0
  %2382 = vmatpush2.xpose.msra.mxu0 0.0
  %2383 = vmatprep.subr.mxu0 0.0
  %2384 = vmatpush2.xpose.msra.mxu0 0.0
  %2385 = vmatprep.subr.mxu0 0.0
  %2386 = vmatpush2.xpose.msra.mxu0 0.0
  %2387 = vmatprep.subr.mxu0 0.0
  %2388 = vmatpush2.xpose.msra.mxu0 0.0
  %2389 = vmatprep.subr.mxu0 0.0
  %2390 = vmatpush2.xpose.msra.mxu0 0.0
  %2391 = vmatprep.subr.mxu0 0.0
  %2392 = vmatpush2.xpose.msra.mxu0 0.0
  %2393 = vmatprep.subr.mxu0 0.0
  %2394 = vmatpush2.xpose.msra.mxu0 0.0
  %2395 = vmatprep.subr.mxu0 0.0
  %2396 = vmatpush2.xpose.msra.mxu0 0.0
  %2397 = vmatprep.mubr.f32.mxu0 0.0
  %2398 = vmatmul.mubr.f32.gmra.mxu0 %v2211
  %v2399 = vpop.f32.mrf.mxu0
  %v2400 = vadd.f32 0.0, %v2399
  %v2401 = vpop.f32.mrf.mxu0
  %2402 = vmatprep.mubr.f32.mxu0 0.0
  %2403 = vmatmul.mubr.f32.gmra.mxu0 %v2214
  %v2404 = vpop.f32.mrf.mxu0
  %v2405 = vadd.f32 0.0, %v2404
  %v2406 = vpop.f32.mrf.mxu0
  %2407 = vdwg.mxu0
  %v2408 = vmul.f32 %v2400, 0.35355338
  %v2409 = vmul.f32 %v2405, 0.35355338
  %v2410 = vadd.f32 %v2408, %v35
  %v2411 = vadd.f32 %v2409, %v36
  %v2412 = vsel %vm885, %v2410, -inf
  %2413 = vmax.xlane.f32.xlu0 %v2412
  %v2414 = vpop.xlane.xlu0 %2413
  %v2415 = vsel %vm885, %v2411, -inf
  %2416 = vmax.xlane.f32.xlu0 %v2415
  %v2417 = vpop.xlane.xlu0 %2416
  %v2418 = vsub.f32 %v2410, %v2414
  %v2419 = vsub.f32 %v2411, %v2417
  %v2420 = vmul.f32 %v2418, 1.442695
  %v2421 = vpow.pop %v2420
  %v2422 = vmul.f32 %v2419, 1.442695
  %v2423 = vpow.pop %v2422
  %v2424 = vsel %vm885, %v2421, 0.0
  %2425 = vadd.xlane.f32.xlu0 %v2424
  %v2426 = vpop.xlane.xlu0 %2425
  %v2427 = vsel %vm885, %v2423, 0.0
  %2428 = vadd.xlane.f32.xlu0 %v2427
  %v2429 = vpop.xlane.xlu0 %2428
  %v2430 = vrcp.pop %v2426
  %v2431 = vrcp.pop %v2429
  %v2432 = vmul.f32 %v2421, %v2430
  %v2433 = vmul.f32 %v2423, %v2431
  %v2434 = vmul.f32 %v2200, %v500
  %v2435 = vmul.f32 %v2205, %v500
  %v2437 = vsel %vm885, %v2432, 0
  %v2440 = vsel %vm885, %v2433, 0
  %2442 = vmatprep.subr.mxu0 0.0
  %2443 = vmatpush1.msra.mxu0 0.0
  %2444 = vmatprep.subr.mxu0 0.0
  %2445 = vmatpush1.msra.mxu0 0.0
  %2446 = vmatprep.subr.mxu0 0.0
  %2447 = vmatpush1.msra.mxu0 0.0
  %2448 = vmatprep.subr.mxu0 0.0
  %2449 = vmatpush1.msra.mxu0 0.0
  %2450 = vmatprep.subr.mxu0 0.0
  %2451 = vmatpush1.msra.mxu0 0.0
  %2452 = vmatprep.subr.mxu0 0.0
  %2453 = vmatpush1.msra.mxu0 0.0
  %2454 = vmatprep.subr.mxu0 0.0
  %2455 = vmatpush1.msra.mxu0 0.0
  %2456 = vmatprep.subr.mxu0 0.0
  %2457 = vmatpush1.msra.mxu0 0.0
  %2458 = vmatprep.subr.mxu0 0.0
  %2459 = vmatpush1.msra.mxu0 0.0
  %2460 = vmatprep.subr.mxu0 0.0
  %2461 = vmatpush1.msra.mxu0 0.0
  %2462 = vmatprep.subr.mxu0 0.0
  %2463 = vmatpush1.msra.mxu0 0.0
  %2464 = vmatprep.subr.mxu0 0.0
  %2465 = vmatpush1.msra.mxu0 0.0
  %2466 = vmatprep.subr.mxu0 0.0
  %2467 = vmatpush1.msra.mxu0 0.0
  %2468 = vmatprep.subr.mxu0 0.0
  %2469 = vmatpush1.msra.mxu0 0.0
  %2470 = vmatprep.subr.mxu0 0.0
  %2471 = vmatpush1.msra.mxu0 %v2435
  %2472 = vmatprep.subr.mxu0 0.0
  %2473 = vmatpush1.msra.mxu0 %v2434
  %2474 = vmatprep.subr.mxu0 0.0
  %2475 = vmatpush2.msra.mxu0 0.0
  %2476 = vmatprep.subr.mxu0 0.0
  %2477 = vmatpush2.msra.mxu0 0.0
  %2478 = vmatprep.subr.mxu0 0.0
  %2479 = vmatpush2.msra.mxu0 0.0
  %2480 = vmatprep.subr.mxu0 0.0
  %2481 = vmatpush2.msra.mxu0 0.0
  %2482 = vmatprep.subr.mxu0 0.0
  %2483 = vmatpush2.msra.mxu0 0.0
  %2484 = vmatprep.subr.mxu0 0.0
  %2485 = vmatpush2.msra.mxu0 0.0
  %2486 = vmatprep.subr.mxu0 0.0
  %2487 = vmatpush2.msra.mxu0 0.0
  %2488 = vmatprep.subr.mxu0 0.0
  %2489 = vmatpush2.msra.mxu0 0.0
  %2490 = vmatprep.subr.mxu0 0.0
  %2491 = vmatpush2.msra.mxu0 0.0
  %2492 = vmatprep.subr.mxu0 0.0
  %2493 = vmatpush2.msra.mxu0 0.0
  %2494 = vmatprep.subr.mxu0 0.0
  %2495 = vmatpush2.msra.mxu0 0.0
  %2496 = vmatprep.subr.mxu0 0.0
  %2497 = vmatpush2.msra.mxu0 0.0
  %2498 = vmatprep.subr.mxu0 0.0
  %2499 = vmatpush2.msra.mxu0 0.0
  %2500 = vmatprep.subr.mxu0 0.0
  %2501 = vmatpush2.msra.mxu0 0.0
  %2502 = vmatprep.subr.mxu0 0.0
  %2503 = vmatpush2.msra.mxu0 0.0
  %2504 = vmatprep.subr.mxu0 0.0
  %2505 = vmatpush2.msra.mxu0 0.0
  %2506 = vmatprep.mubr.f32.mxu0 0.0
  %2507 = vmatmul.mubr.f32.gmra.mxu0 %v2437
  %v2508 = vpop.f32.mrf.mxu0
  %v2509 = vadd.f32 0.0, %v2508
  %v2510 = vpop.f32.mrf.mxu0
  %2511 = vmatprep.mubr.f32.mxu0 0.0
  %2512 = vmatmul.mubr.f32.gmra.mxu0 %v2440
  %v2513 = vpop.f32.mrf.mxu0
  %v2514 = vadd.f32 0.0, %v2513
  %v2515 = vpop.f32.mrf.mxu0
  %2516 = vdwg.mxu0
  %v2518 = vsel %vm885, %v2321, 0
  %v2521 = vsel %vm885, %v2322, 0
  %2523 = vmatprep.subr.mxu0 0.0
  %2524 = vmatpush1.msra.mxu0 0.0
  %2525 = vmatprep.subr.mxu0 0.0
  %2526 = vmatpush1.msra.mxu0 0.0
  %2527 = vmatprep.subr.mxu0 0.0
  %2528 = vmatpush1.msra.mxu0 0.0
  %2529 = vmatprep.subr.mxu0 0.0
  %2530 = vmatpush1.msra.mxu0 0.0
  %2531 = vmatprep.subr.mxu0 0.0
  %2532 = vmatpush1.msra.mxu0 0.0
  %2533 = vmatprep.subr.mxu0 0.0
  %2534 = vmatpush1.msra.mxu0 0.0
  %2535 = vmatprep.subr.mxu0 0.0
  %2536 = vmatpush1.msra.mxu0 0.0
  %2537 = vmatprep.subr.mxu0 0.0
  %2538 = vmatpush1.msra.mxu0 0.0
  %2539 = vmatprep.subr.mxu0 0.0
  %2540 = vmatpush1.msra.mxu0 0.0
  %2541 = vmatprep.subr.mxu0 0.0
  %2542 = vmatpush1.msra.mxu0 0.0
  %2543 = vmatprep.subr.mxu0 0.0
  %2544 = vmatpush1.msra.mxu0 0.0
  %2545 = vmatprep.subr.mxu0 0.0
  %2546 = vmatpush1.msra.mxu0 0.0
  %2547 = vmatprep.subr.mxu0 0.0
  %2548 = vmatpush1.msra.mxu0 0.0
  %2549 = vmatprep.subr.mxu0 0.0
  %2550 = vmatpush1.msra.mxu0 0.0
  %2551 = vmatprep.subr.mxu0 0.0
  %2552 = vmatpush1.msra.mxu0 %v2324
  %2553 = vmatprep.subr.mxu0 0.0
  %2554 = vmatpush1.msra.mxu0 %v2323
  %2555 = vmatprep.subr.mxu0 0.0
  %2556 = vmatpush2.msra.mxu0 0.0
  %2557 = vmatprep.subr.mxu0 0.0
  %2558 = vmatpush2.msra.mxu0 0.0
  %2559 = vmatprep.subr.mxu0 0.0
  %2560 = vmatpush2.msra.mxu0 0.0
  %2561 = vmatprep.subr.mxu0 0.0
  %2562 = vmatpush2.msra.mxu0 0.0
  %2563 = vmatprep.subr.mxu0 0.0
  %2564 = vmatpush2.msra.mxu0 0.0
  %2565 = vmatprep.subr.mxu0 0.0
  %2566 = vmatpush2.msra.mxu0 0.0
  %2567 = vmatprep.subr.mxu0 0.0
  %2568 = vmatpush2.msra.mxu0 0.0
  %2569 = vmatprep.subr.mxu0 0.0
  %2570 = vmatpush2.msra.mxu0 0.0
  %2571 = vmatprep.subr.mxu0 0.0
  %2572 = vmatpush2.msra.mxu0 0.0
  %2573 = vmatprep.subr.mxu0 0.0
  %2574 = vmatpush2.msra.mxu0 0.0
  %2575 = vmatprep.subr.mxu0 0.0
  %2576 = vmatpush2.msra.mxu0 0.0
  %2577 = vmatprep.subr.mxu0 0.0
  %2578 = vmatpush2.msra.mxu0 0.0
  %2579 = vmatprep.subr.mxu0 0.0
  %2580 = vmatpush2.msra.mxu0 0.0
  %2581 = vmatprep.subr.mxu0 0.0
  %2582 = vmatpush2.msra.mxu0 0.0
  %2583 = vmatprep.subr.mxu0 0.0
  %2584 = vmatpush2.msra.mxu0 0.0
  %2585 = vmatprep.subr.mxu0 0.0
  %2586 = vmatpush2.msra.mxu0 0.0
  %2587 = vmatprep.mubr.f32.mxu0 0.0
  %2588 = vmatmul.mubr.f32.gmra.mxu0 %v2518
  %v2589 = vpop.f32.mrf.mxu0
  %v2590 = vadd.f32 %v2509, %v2589
  %v2591 = vpop.f32.mrf.mxu0
  %2592 = vmatprep.mubr.f32.mxu0 0.0
  %2593 = vmatmul.mubr.f32.gmra.mxu0 %v2521
  %v2594 = vpop.f32.mrf.mxu0
  %v2595 = vadd.f32 %v2514, %v2594
  %v2596 = vpop.f32.mrf.mxu0
  %2597 = vdwg.mxu0
  %v2598 = vmul.f32 %v2121, %v505
  %v2599 = vmul.f32 %v2126, %v505
  %v2601 = vsel %vm277, %v2598, 0
  %v2604 = vsel %vm277, %v2599, 0
  %2606 = vmatprep.subr.mxu0 0.0
  %2607 = vmatpush1.xpose.msra.mxu0 0.0
  %2608 = vmatprep.subr.mxu0 0.0
  %2609 = vmatpush1.xpose.msra.mxu0 0.0
  %2610 = vmatprep.subr.mxu0 0.0
  %2611 = vmatpush1.xpose.msra.mxu0 0.0
  %2612 = vmatprep.subr.mxu0 0.0
  %2613 = vmatpush1.xpose.msra.mxu0 0.0
  %2614 = vmatprep.subr.mxu0 0.0
  %2615 = vmatpush1.xpose.msra.mxu0 0.0
  %2616 = vmatprep.subr.mxu0 0.0
  %2617 = vmatpush1.xpose.msra.mxu0 0.0
  %2618 = vmatprep.subr.mxu0 0.0
  %2619 = vmatpush1.xpose.msra.mxu0 0.0
  %2620 = vmatprep.subr.mxu0 0.0
  %2621 = vmatpush1.xpose.msra.mxu0 0.0
  %2622 = vmatprep.subr.mxu0 0.0
  %2623 = vmatpush1.xpose.msra.mxu0 0.0
  %2624 = vmatprep.subr.mxu0 0.0
  %2625 = vmatpush1.xpose.msra.mxu0 0.0
  %2626 = vmatprep.subr.mxu0 0.0
  %2627 = vmatpush1.xpose.msra.mxu0 0.0
  %2628 = vmatprep.subr.mxu0 0.0
  %2629 = vmatpush1.xpose.msra.mxu0 0.0
  %2630 = vmatprep.subr.mxu0 0.0
  %2631 = vmatpush1.xpose.msra.mxu0 0.0
  %2632 = vmatprep.subr.mxu0 0.0
  %2633 = vmatpush1.xpose.msra.mxu0 0.0
  %2634 = vmatprep.subr.mxu0 0.0
  %2635 = vmatpush1.xpose.msra.mxu0 %v2604
  %2636 = vmatprep.subr.mxu0 0.0
  %2637 = vmatpush1.xpose.msra.mxu0 %v2601
  %2638 = vmatprep.subr.mxu0 0.0
  %2639 = vmatpush2.xpose.msra.mxu0 0.0
  %2640 = vmatprep.subr.mxu0 0.0
  %2641 = vmatpush2.xpose.msra.mxu0 0.0
  %2642 = vmatprep.subr.mxu0 0.0
  %2643 = vmatpush2.xpose.msra.mxu0 0.0
  %2644 = vmatprep.subr.mxu0 0.0
  %2645 = vmatpush2.xpose.msra.mxu0 0.0
  %2646 = vmatprep.subr.mxu0 0.0
  %2647 = vmatpush2.xpose.msra.mxu0 0.0
  %2648 = vmatprep.subr.mxu0 0.0
  %2649 = vmatpush2.xpose.msra.mxu0 0.0
  %2650 = vmatprep.subr.mxu0 0.0
  %2651 = vmatpush2.xpose.msra.mxu0 0.0
  %2652 = vmatprep.subr.mxu0 0.0
  %2653 = vmatpush2.xpose.msra.mxu0 0.0
  %2654 = vmatprep.subr.mxu0 0.0
  %2655 = vmatpush2.xpose.msra.mxu0 0.0
  %2656 = vmatprep.subr.mxu0 0.0
  %2657 = vmatpush2.xpose.msra.mxu0 0.0
  %2658 = vmatprep.subr.mxu0 0.0
  %2659 = vmatpush2.xpose.msra.mxu0 0.0
  %2660 = vmatprep.subr.mxu0 0.0
  %2661 = vmatpush2.xpose.msra.mxu0 0.0
  %2662 = vmatprep.subr.mxu0 0.0
  %2663 = vmatpush2.xpose.msra.mxu0 0.0
  %2664 = vmatprep.subr.mxu0 0.0
  %2665 = vmatpush2.xpose.msra.mxu0 0.0
  %2666 = vmatprep.subr.mxu0 0.0
  %2667 = vmatpush2.xpose.msra.mxu0 0.0
  %2668 = vmatprep.subr.mxu0 0.0
  %2669 = vmatpush2.xpose.msra.mxu0 0.0
  %2670 = vmatprep.mubr.f32.mxu0 0.0
  %2671 = vmatmul.mubr.f32.gmra.mxu0 %v2211
  %v2672 = vpop.f32.mrf.mxu0
  %v2673 = vadd.f32 0.0, %v2672
  %v2674 = vpop.f32.mrf.mxu0
  %2675 = vmatprep.mubr.f32.mxu0 0.0
  %2676 = vmatmul.mubr.f32.gmra.mxu0 %v2214
  %v2677 = vpop.f32.mrf.mxu0
  %v2678 = vadd.f32 0.0, %v2677
  %v2679 = vpop.f32.mrf.mxu0
  %2680 = vdwg.mxu0
  %v2681 = vmul.f32 %v2673, 0.35355338
  %v2682 = vmul.f32 %v2678, 0.35355338
  %v2683 = vadd.f32 %v2681, %v35
  %v2684 = vadd.f32 %v2682, %v36
  %v2685 = vsel %vm885, %v2683, -inf
  %2686 = vmax.xlane.f32.xlu0 %v2685
  %v2687 = vpop.xlane.xlu0 %2686
  %v2688 = vsel %vm885, %v2684, -inf
  %2689 = vmax.xlane.f32.xlu0 %v2688
  %v2690 = vpop.xlane.xlu0 %2689
  %v2691 = vsub.f32 %v2683, %v2687
  %v2692 = vsub.f32 %v2684, %v2690
  %v2693 = vmul.f32 %v2691, 1.442695
  %v2694 = vpow.pop %v2693
  %v2695 = vmul.f32 %v2692, 1.442695
  %v2696 = vpow.pop %v2695
  %v2697 = vsel %vm885, %v2694, 0.0
  %2698 = vadd.xlane.f32.xlu0 %v2697
  %v2699 = vpop.xlane.xlu0 %2698
  %v2700 = vsel %vm885, %v2696, 0.0
  %2701 = vadd.xlane.f32.xlu0 %v2700
  %v2702 = vpop.xlane.xlu0 %2701
  %v2703 = vrcp.pop %v2699
  %v2704 = vrcp.pop %v2702
  %v2705 = vmul.f32 %v2694, %v2703
  %v2706 = vmul.f32 %v2696, %v2704
  %v2707 = vmul.f32 %v2200, %v505
  %v2708 = vmul.f32 %v2205, %v505
  %v2710 = vsel %vm885, %v2705, 0
  %v2713 = vsel %vm885, %v2706, 0
  %2715 = vmatprep.subr.mxu0 0.0
  %2716 = vmatpush1.msra.mxu0 0.0
  %2717 = vmatprep.subr.mxu0 0.0
  %2718 = vmatpush1.msra.mxu0 0.0
  %2719 = vmatprep.subr.mxu0 0.0
  %2720 = vmatpush1.msra.mxu0 0.0
  %2721 = vmatprep.subr.mxu0 0.0
  %2722 = vmatpush1.msra.mxu0 0.0
  %2723 = vmatprep.subr.mxu0 0.0
  %2724 = vmatpush1.msra.mxu0 0.0
  %2725 = vmatprep.subr.mxu0 0.0
  %2726 = vmatpush1.msra.mxu0 0.0
  %2727 = vmatprep.subr.mxu0 0.0
  %2728 = vmatpush1.msra.mxu0 0.0
  %2729 = vmatprep.subr.mxu0 0.0
  %2730 = vmatpush1.msra.mxu0 0.0
  %2731 = vmatprep.subr.mxu0 0.0
  %2732 = vmatpush1.msra.mxu0 0.0
  %2733 = vmatprep.subr.mxu0 0.0
  %2734 = vmatpush1.msra.mxu0 0.0
  %2735 = vmatprep.subr.mxu0 0.0
  %2736 = vmatpush1.msra.mxu0 0.0
  %2737 = vmatprep.subr.mxu0 0.0
  %2738 = vmatpush1.msra.mxu0 0.0
  %2739 = vmatprep.subr.mxu0 0.0
  %2740 = vmatpush1.msra.mxu0 0.0
  %2741 = vmatprep.subr.mxu0 0.0
  %2742 = vmatpush1.msra.mxu0 0.0
  %2743 = vmatprep.subr.mxu0 0.0
  %2744 = vmatpush1.msra.mxu0 %v2708
  %2745 = vmatprep.subr.mxu0 0.0
  %2746 = vmatpush1.msra.mxu0 %v2707
  %2747 = vmatprep.subr.mxu0 0.0
  %2748 = vmatpush2.msra.mxu0 0.0
  %2749 = vmatprep.subr.mxu0 0.0
  %2750 = vmatpush2.msra.mxu0 0.0
  %2751 = vmatprep.subr.mxu0 0.0
  %2752 = vmatpush2.msra.mxu0 0.0
  %2753 = vmatprep.subr.mxu0 0.0
  %2754 = vmatpush2.msra.mxu0 0.0
  %2755 = vmatprep.subr.mxu0 0.0
  %2756 = vmatpush2.msra.mxu0 0.0
  %2757 = vmatprep.subr.mxu0 0.0
  %2758 = vmatpush2.msra.mxu0 0.0
  %2759 = vmatprep.subr.mxu0 0.0
  %2760 = vmatpush2.msra.mxu0 0.0
  %2761 = vmatprep.subr.mxu0 0.0
  %2762 = vmatpush2.msra.mxu0 0.0
  %2763 = vmatprep.subr.mxu0 0.0
  %2764 = vmatpush2.msra.mxu0 0.0
  %2765 = vmatprep.subr.mxu0 0.0
  %2766 = vmatpush2.msra.mxu0 0.0
  %2767 = vmatprep.subr.mxu0 0.0
  %2768 = vmatpush2.msra.mxu0 0.0
  %2769 = vmatprep.subr.mxu0 0.0
  %2770 = vmatpush2.msra.mxu0 0.0
  %2771 = vmatprep.subr.mxu0 0.0
  %2772 = vmatpush2.msra.mxu0 0.0
  %2773 = vmatprep.subr.mxu0 0.0
  %2774 = vmatpush2.msra.mxu0 0.0
  %2775 = vmatprep.subr.mxu0 0.0
  %2776 = vmatpush2.msra.mxu0 0.0
  %2777 = vmatprep.subr.mxu0 0.0
  %2778 = vmatpush2.msra.mxu0 0.0
  %2779 = vmatprep.mubr.f32.mxu0 0.0
  %2780 = vmatmul.mubr.f32.gmra.mxu0 %v2710
  %v2781 = vpop.f32.mrf.mxu0
  %v2782 = vadd.f32 0.0, %v2781
  %v2783 = vpop.f32.mrf.mxu0
  %2784 = vmatprep.mubr.f32.mxu0 0.0
  %2785 = vmatmul.mubr.f32.gmra.mxu0 %v2713
  %v2786 = vpop.f32.mrf.mxu0
  %v2787 = vadd.f32 0.0, %v2786
  %v2788 = vpop.f32.mrf.mxu0
  %2789 = vdwg.mxu0
  %v2790 = vadd.f32 %v2590, %v2782
  %v2791 = vadd.f32 %v2595, %v2787
  %v2792 = vmul.f32 %v2121, %v510
  %v2793 = vmul.f32 %v2126, %v510
  %v2795 = vsel %vm277, %v2792, 0
  %v2798 = vsel %vm277, %v2793, 0
  %2800 = vmatprep.subr.mxu0 0.0
  %2801 = vmatpush1.xpose.msra.mxu0 0.0
  %2802 = vmatprep.subr.mxu0 0.0
  %2803 = vmatpush1.xpose.msra.mxu0 0.0
  %2804 = vmatprep.subr.mxu0 0.0
  %2805 = vmatpush1.xpose.msra.mxu0 0.0
  %2806 = vmatprep.subr.mxu0 0.0
  %2807 = vmatpush1.xpose.msra.mxu0 0.0
  %2808 = vmatprep.subr.mxu0 0.0
  %2809 = vmatpush1.xpose.msra.mxu0 0.0
  %2810 = vmatprep.subr.mxu0 0.0
  %2811 = vmatpush1.xpose.msra.mxu0 0.0
  %2812 = vmatprep.subr.mxu0 0.0
  %2813 = vmatpush1.xpose.msra.mxu0 0.0
  %2814 = vmatprep.subr.mxu0 0.0
  %2815 = vmatpush1.xpose.msra.mxu0 0.0
  %2816 = vmatprep.subr.mxu0 0.0
  %2817 = vmatpush1.xpose.msra.mxu0 0.0
  %2818 = vmatprep.subr.mxu0 0.0
  %2819 = vmatpush1.xpose.msra.mxu0 0.0
  %2820 = vmatprep.subr.mxu0 0.0
  %2821 = vmatpush1.xpose.msra.mxu0 0.0
  %2822 = vmatprep.subr.mxu0 0.0
  %2823 = vmatpush1.xpose.msra.mxu0 0.0
  %2824 = vmatprep.subr.mxu0 0.0
  %2825 = vmatpush1.xpose.msra.mxu0 0.0
  %2826 = vmatprep.subr.mxu0 0.0
  %2827 = vmatpush1.xpose.msra.mxu0 0.0
  %2828 = vmatprep.subr.mxu0 0.0
  %2829 = vmatpush1.xpose.msra.mxu0 %v2798
  %2830 = vmatprep.subr.mxu0 0.0
  %2831 = vmatpush1.xpose.msra.mxu0 %v2795
  %2832 = vmatprep.subr.mxu0 0.0
  %2833 = vmatpush2.xpose.msra.mxu0 0.0
  %2834 = vmatprep.subr.mxu0 0.0
  %2835 = vmatpush2.xpose.msra.mxu0 0.0
  %2836 = vmatprep.subr.mxu0 0.0
  %2837 = vmatpush2.xpose.msra.mxu0 0.0
  %2838 = vmatprep.subr.mxu0 0.0
  %2839 = vmatpush2.xpose.msra.mxu0 0.0
  %2840 = vmatprep.subr.mxu0 0.0
  %2841 = vmatpush2.xpose.msra.mxu0 0.0
  %2842 = vmatprep.subr.mxu0 0.0
  %2843 = vmatpush2.xpose.msra.mxu0 0.0
  %2844 = vmatprep.subr.mxu0 0.0
  %2845 = vmatpush2.xpose.msra.mxu0 0.0
  %2846 = vmatprep.subr.mxu0 0.0
  %2847 = vmatpush2.xpose.msra.mxu0 0.0
  %2848 = vmatprep.subr.mxu0 0.0
  %2849 = vmatpush2.xpose.msra.mxu0 0.0
  %2850 = vmatprep.subr.mxu0 0.0
  %2851 = vmatpush2.xpose.msra.mxu0 0.0
  %2852 = vmatprep.subr.mxu0 0.0
  %2853 = vmatpush2.xpose.msra.mxu0 0.0
  %2854 = vmatprep.subr.mxu0 0.0
  %2855 = vmatpush2.xpose.msra.mxu0 0.0
  %2856 = vmatprep.subr.mxu0 0.0
  %2857 = vmatpush2.xpose.msra.mxu0 0.0
  %2858 = vmatprep.subr.mxu0 0.0
  %2859 = vmatpush2.xpose.msra.mxu0 0.0
  %2860 = vmatprep.subr.mxu0 0.0
  %2861 = vmatpush2.xpose.msra.mxu0 0.0
  %2862 = vmatprep.subr.mxu0 0.0
  %2863 = vmatpush2.xpose.msra.mxu0 0.0
  %2864 = vmatprep.mubr.f32.mxu0 0.0
  %2865 = vmatmul.mubr.f32.gmra.mxu0 %v2211
  %v2866 = vpop.f32.mrf.mxu0
  %v2867 = vadd.f32 0.0, %v2866
  %v2868 = vpop.f32.mrf.mxu0
  %2869 = vmatprep.mubr.f32.mxu0 0.0
  %2870 = vmatmul.mubr.f32.gmra.mxu0 %v2214
  %v2871 = vpop.f32.mrf.mxu0
  %v2872 = vadd.f32 0.0, %v2871
  %v2873 = vpop.f32.mrf.mxu0
  %2874 = vdwg.mxu0
  %v2875 = vmul.f32 %v2867, 0.35355338
  %v2876 = vmul.f32 %v2872, 0.35355338
  %v2877 = vadd.f32 %v2875, %v35
  %v2878 = vadd.f32 %v2876, %v36
  %v2879 = vsel %vm885, %v2877, -inf
  %2880 = vmax.xlane.f32.xlu0 %v2879
  %v2881 = vpop.xlane.xlu0 %2880
  %v2882 = vsel %vm885, %v2878, -inf
  %2883 = vmax.xlane.f32.xlu0 %v2882
  %v2884 = vpop.xlane.xlu0 %2883
  %v2885 = vsub.f32 %v2877, %v2881
  %v2886 = vsub.f32 %v2878, %v2884
  %v2887 = vmul.f32 %v2885, 1.442695
  %v2888 = vpow.pop %v2887
  %v2889 = vmul.f32 %v2886, 1.442695
  %v2890 = vpow.pop %v2889
  %v2891 = vsel %vm885, %v2888, 0.0
  %2892 = vadd.xlane.f32.xlu0 %v2891
  %v2893 = vpop.xlane.xlu0 %2892
  %v2894 = vsel %vm885, %v2890, 0.0
  %2895 = vadd.xlane.f32.xlu0 %v2894
  %v2896 = vpop.xlane.xlu0 %2895
  %v2897 = vrcp.pop %v2893
  %v2898 = vrcp.pop %v2896
  %v2899 = vmul.f32 %v2888, %v2897
  %v2900 = vmul.f32 %v2890, %v2898
  %v2901 = vmul.f32 %v2200, %v510
  %v2902 = vmul.f32 %v2205, %v510
  %v2904 = vsel %vm885, %v2899, 0
  %v2907 = vsel %vm885, %v2900, 0
  %2909 = vmatprep.subr.mxu0 0.0
  %2910 = vmatpush1.msra.mxu0 0.0
  %2911 = vmatprep.subr.mxu0 0.0
  %2912 = vmatpush1.msra.mxu0 0.0
  %2913 = vmatprep.subr.mxu0 0.0
  %2914 = vmatpush1.msra.mxu0 0.0
  %2915 = vmatprep.subr.mxu0 0.0
  %2916 = vmatpush1.msra.mxu0 0.0
  %2917 = vmatprep.subr.mxu0 0.0
  %2918 = vmatpush1.msra.mxu0 0.0
  %2919 = vmatprep.subr.mxu0 0.0
  %2920 = vmatpush1.msra.mxu0 0.0
  %2921 = vmatprep.subr.mxu0 0.0
  %2922 = vmatpush1.msra.mxu0 0.0
  %2923 = vmatprep.subr.mxu0 0.0
  %2924 = vmatpush1.msra.mxu0 0.0
  %2925 = vmatprep.subr.mxu0 0.0
  %2926 = vmatpush1.msra.mxu0 0.0
  %2927 = vmatprep.subr.mxu0 0.0
  %2928 = vmatpush1.msra.mxu0 0.0
  %2929 = vmatprep.subr.mxu0 0.0
  %2930 = vmatpush1.msra.mxu0 0.0
  %2931 = vmatprep.subr.mxu0 0.0
  %2932 = vmatpush1.msra.mxu0 0.0
  %2933 = vmatprep.subr.mxu0 0.0
  %2934 = vmatpush1.msra.mxu0 0.0
  %2935 = vmatprep.subr.mxu0 0.0
  %2936 = vmatpush1.msra.mxu0 0.0
  %2937 = vmatprep.subr.mxu0 0.0
  %2938 = vmatpush1.msra.mxu0 %v2902
  %2939 = vmatprep.subr.mxu0 0.0
  %2940 = vmatpush1.msra.mxu0 %v2901
  %2941 = vmatprep.subr.mxu0 0.0
  %2942 = vmatpush2.msra.mxu0 0.0
  %2943 = vmatprep.subr.mxu0 0.0
  %2944 = vmatpush2.msra.mxu0 0.0
  %2945 = vmatprep.subr.mxu0 0.0
  %2946 = vmatpush2.msra.mxu0 0.0
  %2947 = vmatprep.subr.mxu0 0.0
  %2948 = vmatpush2.msra.mxu0 0.0
  %2949 = vmatprep.subr.mxu0 0.0
  %2950 = vmatpush2.msra.mxu0 0.0
  %2951 = vmatprep.subr.mxu0 0.0
  %2952 = vmatpush2.msra.mxu0 0.0
  %2953 = vmatprep.subr.mxu0 0.0
  %2954 = vmatpush2.msra.mxu0 0.0
  %2955 = vmatprep.subr.mxu0 0.0
  %2956 = vmatpush2.msra.mxu0 0.0
  %2957 = vmatprep.subr.mxu0 0.0
  %2958 = vmatpush2.msra.mxu0 0.0
  %2959 = vmatprep.subr.mxu0 0.0
  %2960 = vmatpush2.msra.mxu0 0.0
  %2961 = vmatprep.subr.mxu0 0.0
  %2962 = vmatpush2.msra.mxu0 0.0
  %2963 = vmatprep.subr.mxu0 0.0
  %2964 = vmatpush2.msra.mxu0 0.0
  %2965 = vmatprep.subr.mxu0 0.0
  %2966 = vmatpush2.msra.mxu0 0.0
  %2967 = vmatprep.subr.mxu0 0.0
  %2968 = vmatpush2.msra.mxu0 0.0
  %2969 = vmatprep.subr.mxu0 0.0
  %2970 = vmatpush2.msra.mxu0 0.0
  %2971 = vmatprep.subr.mxu0 0.0
  %2972 = vmatpush2.msra.mxu0 0.0
  %2973 = vmatprep.mubr.f32.mxu0 0.0
  %2974 = vmatmul.mubr.f32.gmra.mxu0 %v2904
  %v2975 = vpop.f32.mrf.mxu0
  %v2976 = vadd.f32 0.0, %v2975
  %v2977 = vpop.f32.mrf.mxu0
  %2978 = vmatprep.mubr.f32.mxu0 0.0
  %2979 = vmatmul.mubr.f32.gmra.mxu0 %v2907
  %v2980 = vpop.f32.mrf.mxu0
  %v2981 = vadd.f32 0.0, %v2980
  %v2982 = vpop.f32.mrf.mxu0
  %2983 = vdwg.mxu0
  %v2984 = vadd.f32 %v2790, %v2976
  %v2985 = vadd.f32 %v2791, %v2981
  %v2986 = vlaneseq
  %v2987 = vshrl.u32 %v2986, 7
  %v2988 = vsub.s32 0, %v2987
  %v2989 = vrot.slane %v1958, %v2988
  %v2991 = vsel %vm277, %v2984, 0
  %v2994 = vsel %vm277, %v2985, 0
  %2996 = vmatprep.subr.mxu0 0.0
  %2997 = vmatpush1.msra.mxu0 0.0
  %2998 = vmatprep.subr.mxu0 0.0
  %2999 = vmatpush1.msra.mxu0 0.0
  %3000 = vmatprep.subr.mxu0 0.0
  %3001 = vmatpush1.msra.mxu0 0.0
  %3002 = vmatprep.subr.mxu0 0.0
  %3003 = vmatpush1.msra.mxu0 0.0
  %3004 = vmatprep.subr.mxu0 0.0
  %3005 = vmatpush1.msra.mxu0 0.0
  %3006 = vmatprep.subr.mxu0 0.0
  %3007 = vmatpush1.msra.mxu0 0.0
  %3008 = vmatprep.subr.mxu0 0.0
  %3009 = vmatpush1.msra.mxu0 0.0
  %3010 = vmatprep.subr.mxu0 0.0
  %3011 = vmatpush1.msra.mxu0 0.0
  %3012 = vmatprep.subr.mxu0 0.0
  %3013 = vmatpush1.msra.mxu0 0.0
  %3014 = vmatprep.subr.mxu0 0.0
  %3015 = vmatpush1.msra.mxu0 0.0
  %3016 = vmatprep.subr.mxu0 0.0
  %3017 = vmatpush1.msra.mxu0 0.0
  %3018 = vmatprep.subr.mxu0 0.0
  %3019 = vmatpush1.msra.mxu0 0.0
  %3020 = vmatprep.subr.mxu0 0.0
  %3021 = vmatpush1.msra.mxu0 %v1941
  %3022 = vmatprep.subr.mxu0 0.0
  %3023 = vmatpush1.msra.mxu0 %v1940
  %3024 = vmatprep.subr.mxu0 0.0
  %3025 = vmatpush1.msra.mxu0 %v1939
  %3026 = vmatprep.subr.mxu0 0.0
  %3027 = vmatpush1.msra.mxu0 %v1938
  %3028 = vmatprep.subr.mxu0 0.0
  %3029 = vmatpush2.msra.mxu0 0.0
  %3030 = vmatprep.subr.mxu0 0.0
  %3031 = vmatpush2.msra.mxu0 0.0
  %3032 = vmatprep.subr.mxu0 0.0
  %3033 = vmatpush2.msra.mxu0 0.0
  %3034 = vmatprep.subr.mxu0 0.0
  %3035 = vmatpush2.msra.mxu0 0.0
  %3036 = vmatprep.subr.mxu0 0.0
  %3037 = vmatpush2.msra.mxu0 0.0
  %3038 = vmatprep.subr.mxu0 0.0
  %3039 = vmatpush2.msra.mxu0 0.0
  %3040 = vmatprep.subr.mxu0 0.0
  %3041 = vmatpush2.msra.mxu0 0.0
  %3042 = vmatprep.subr.mxu0 0.0
  %3043 = vmatpush2.msra.mxu0 0.0
  %3044 = vmatprep.subr.mxu0 0.0
  %3045 = vmatpush2.msra.mxu0 0.0
  %3046 = vmatprep.subr.mxu0 0.0
  %3047 = vmatpush2.msra.mxu0 0.0
  %3048 = vmatprep.subr.mxu0 0.0
  %3049 = vmatpush2.msra.mxu0 0.0
  %3050 = vmatprep.subr.mxu0 0.0
  %3051 = vmatpush2.msra.mxu0 0.0
  %3052 = vmatprep.subr.mxu0 0.0
  %3053 = vmatpush2.msra.mxu0 0.0
  %3054 = vmatprep.subr.mxu0 0.0
  %3055 = vmatpush2.msra.mxu0 0.0
  %3056 = vmatprep.subr.mxu0 0.0
  %3057 = vmatpush2.msra.mxu0 0.0
  %3058 = vmatprep.subr.mxu0 0.0
  %3059 = vmatpush2.msra.mxu0 0.0
  %3060 = vmatprep.mubr.f32.mxu0 0.0
  %3061 = vmatmul.mubr.f32.gmra.mxu0 %v2991
  %v3062 = vpop.f32.mrf.mxu0
  %v3063 = vadd.f32 %v2989, %v3062
  %v3064 = vpop.f32.mrf.mxu0
  %3065 = vmatprep.mubr.f32.mxu0 0.0
  %3066 = vmatmul.mubr.f32.gmra.mxu0 %v2994
  %v3067 = vpop.f32.mrf.mxu0
  %v3068 = vadd.f32 %v2989, %v3067
  %v3069 = vpop.f32.mrf.mxu0
  %3070 = vdwg.mxu0
  %v3071 = vadd.f32 %v1923, %v3063
  %v3072 = vadd.f32 %v1924, %v3068
  %v3073 = vsel %vm277, %v3071, 0.0
  %3074 = vadd.xlane.f32.xlu0 %v3073
  %v3075 = vpop.xlane.xlu0 %3074
  %v3076 = vsel %vm277, %v3072, 0.0
  %3077 = vadd.xlane.f32.xlu0 %v3076
  %v3078 = vpop.xlane.xlu0 %3077
  %v3079 = vmul.f32 %v3075, %v1664
  %v3080 = vmul.f32 %v3078, %v1664
  %v3081 = vsub.f32 %v3071, %v3079
  %v3082 = vsub.f32 %v3072, %v3080
  %v3083 = vmul.f32 %v3081, %v3081
  %v3084 = vmul.f32 %v3082, %v3082
  %v3085 = vsel %vm277, %v3083, 0.0
  %3086 = vadd.xlane.f32.xlu0 %v3085
  %v3087 = vpop.xlane.xlu0 %3086
  %v3088 = vsel %vm277, %v3084, 0.0
  %3089 = vadd.xlane.f32.xlu0 %v3088
  %v3090 = vpop.xlane.xlu0 %3089
  %v3091 = vmul.f32 %v3087, %v1664
  %v3092 = vmul.f32 %v3090, %v1664
  %v3093 = vadd.f32 %v3091, 1e-05
  %v3094 = vadd.f32 %v3092, 1e-05
  %v3095 = vrsqrt.pop %v3093
  %v3096 = vrsqrt.pop %v3094
  %v3097 = vmul.f32 %v3081, %v3095
  %v3098 = vmul.f32 %v3082, %v3096
  %v3099 = vlaneseq
  %v3100 = vshrl.u32 %v3099, 7
  %v3101 = vsub.s32 0, %v3100
  %v3102 = vrot.slane %v1961, %v3101
  %v3103 = vmul.f32 %v3097, %v3102
  %v3104 = vmul.f32 %v3098, %v3102
  %v3105 = vlaneseq
  %v3106 = vshrl.u32 %v3105, 7
  %v3107 = vsub.s32 0, %v3106
  %v3108 = vrot.slane %v1962, %v3107
  %v3109 = vadd.f32 %v3103, %v3108
  %v3110 = vadd.f32 %v3104, %v3108
  %v3111 = vlaneseq
  %v3112 = vshrl.u32 %v3111, 7
  %v3113 = vsub.s32 0, %v3112
  %v3114 = vrot.slane %v1959, %v3113
  %v3116 = vsel %vm277, %v3109, 0
  %v3119 = vsel %vm277, %v3110, 0
  %3121 = vmatprep.subr.mxu0 0.0
  %3122 = vmatpush1.msra.mxu0 0.0
  %3123 = vmatprep.subr.mxu0 0.0
  %3124 = vmatpush1.msra.mxu0 0.0
  %3125 = vmatprep.subr.mxu0 0.0
  %3126 = vmatpush1.msra.mxu0 0.0
  %3127 = vmatprep.subr.mxu0 0.0
  %3128 = vmatpush1.msra.mxu0 0.0
  %3129 = vmatprep.subr.mxu0 0.0
  %3130 = vmatpush1.msra.mxu0 0.0
  %3131 = vmatprep.subr.mxu0 0.0
  %3132 = vmatpush1.msra.mxu0 0.0
  %3133 = vmatprep.subr.mxu0 0.0
  %3134 = vmatpush1.msra.mxu0 0.0
  %3135 = vmatprep.subr.mxu0 0.0
  %3136 = vmatpush1.msra.mxu0 0.0
  %3137 = vmatprep.subr.mxu0 0.0
  %3138 = vmatpush1.msra.mxu0 0.0
  %3139 = vmatprep.subr.mxu0 0.0
  %3140 = vmatpush1.msra.mxu0 0.0
  %3141 = vmatprep.subr.mxu0 0.0
  %3142 = vmatpush1.msra.mxu0 0.0
  %3143 = vmatprep.subr.mxu0 0.0
  %3144 = vmatpush1.msra.mxu0 0.0
  %3145 = vmatprep.subr.mxu0 0.0
  %3146 = vmatpush1.msra.mxu0 %v1945
  %3147 = vmatprep.subr.mxu0 0.0
  %3148 = vmatpush1.msra.mxu0 %v1944
  %3149 = vmatprep.subr.mxu0 0.0
  %3150 = vmatpush1.msra.mxu0 %v1943
  %3151 = vmatprep.subr.mxu0 0.0
  %3152 = vmatpush1.msra.mxu0 %v1942
  %3153 = vmatprep.subr.mxu0 0.0
  %3154 = vmatpush2.msra.mxu0 0.0
  %3155 = vmatprep.subr.mxu0 0.0
  %3156 = vmatpush2.msra.mxu0 0.0
  %3157 = vmatprep.subr.mxu0 0.0
  %3158 = vmatpush2.msra.mxu0 0.0
  %3159 = vmatprep.subr.mxu0 0.0
  %3160 = vmatpush2.msra.mxu0 0.0
  %3161 = vmatprep.subr.mxu0 0.0
  %3162 = vmatpush2.msra.mxu0 0.0
  %3163 = vmatprep.subr.mxu0 0.0
  %3164 = vmatpush2.msra.mxu0 0.0
  %3165 = vmatprep.subr.mxu0 0.0
  %3166 = vmatpush2.msra.mxu0 0.0
  %3167 = vmatprep.subr.mxu0 0.0
  %3168 = vmatpush2.msra.mxu0 0.0
  %3169 = vmatprep.subr.mxu0 0.0
  %3170 = vmatpush2.msra.mxu0 0.0
  %3171 = vmatprep.subr.mxu0 0.0
  %3172 = vmatpush2.msra.mxu0 0.0
  %3173 = vmatprep.subr.mxu0 0.0
  %3174 = vmatpush2.msra.mxu0 0.0
  %3175 = vmatprep.subr.mxu0 0.0
  %3176 = vmatpush2.msra.mxu0 0.0
  %3177 = vmatprep.subr.mxu0 0.0
  %3178 = vmatpush2.msra.mxu0 0.0
  %3179 = vmatprep.subr.mxu0 0.0
  %3180 = vmatpush2.msra.mxu0 0.0
  %3181 = vmatprep.subr.mxu0 0.0
  %3182 = vmatpush2.msra.mxu0 0.0
  %3183 = vmatprep.subr.mxu0 0.0
  %3184 = vmatpush2.msra.mxu0 0.0
  %3185 = vmatprep.mubr.f32.mxu0 0.0
  %3186 = vmatmul.mubr.f32.gmra.mxu0 %v3116
  %v3187 = vpop.f32.mrf.mxu0
  %v3188 = vadd.f32 %v3114, %v3187
  %v3189 = vpop.f32.mrf.mxu0
  %3190 = vmatprep.mubr.f32.mxu0 0.0
  %3191 = vmatmul.mubr.f32.gmra.mxu0 %v3119
  %v3192 = vpop.f32.mrf.mxu0
  %v3193 = vadd.f32 %v3114, %v3192
  %v3194 = vpop.f32.mrf.mxu0
  %3195 = vdwg.mxu0
  %v3196 = vmul.f32 %v3188, %v3188
  %v3197 = vmul.f32 %v3193, %v3193
  %v3198 = vmul.f32 %v3188, %v3196
  %v3199 = vmul.f32 %v3193, %v3197
  %v3200 = vmul.f32 %v3198, 0.044715
  %v3201 = vmul.f32 %v3199, 0.044715
  %v3202 = vadd.f32 %v3188, %v3200
  %v3203 = vadd.f32 %v3193, %v3201
  %v3204 = vmul.f32 %v3202, 0.7978846
  %v3205 = vmul.f32 %v3203, 0.7978846
  %v3206 = vtanh.pop %v3204
  %v3207 = vtanh.pop %v3205
  %v3208 = vadd.f32 %v3206, 1.0
  %v3209 = vadd.f32 %v3207, 1.0
  %v3210 = vmul.f32 %v3208, 0.5
  %v3211 = vmul.f32 %v3209, 0.5
  %v3212 = vmul.f32 %v3188, %v3210
  %v3213 = vmul.f32 %v3193, %v3211
  %v3214 = vlaneseq
  %v3215 = vshrl.u32 %v3214, 7
  %v3216 = vsub.s32 0, %v3215
  %v3217 = vrot.slane %v1960, %v3216
  %v3219 = vsel %vm170, %v3212, 0
  %v3222 = vsel %vm170, %v3213, 0
  %3224 = vmatprep.subr.mxu0 0.0
  %3225 = vmatpush1.msra.mxu0 0.0
  %3226 = vmatprep.subr.mxu0 0.0
  %3227 = vmatpush1.msra.mxu0 0.0
  %3228 = vmatprep.subr.mxu0 0.0
  %3229 = vmatpush1.msra.mxu0 0.0
  %3230 = vmatprep.subr.mxu0 0.0
  %3231 = vmatpush1.msra.mxu0 0.0
  %3232 = vmatprep.subr.mxu0 0.0
  %3233 = vmatpush1.msra.mxu0 0.0
  %3234 = vmatprep.subr.mxu0 0.0
  %3235 = vmatpush1.msra.mxu0 0.0
  %3236 = vmatprep.subr.mxu0 0.0
  %3237 = vmatpush1.msra.mxu0 0.0
  %3238 = vmatprep.subr.mxu0 0.0
  %3239 = vmatpush1.msra.mxu0 0.0
  %3240 = vmatprep.subr.mxu0 0.0
  %3241 = vmatpush1.msra.mxu0 %v1953
  %3242 = vmatprep.subr.mxu0 0.0
  %3243 = vmatpush1.msra.mxu0 %v1952
  %3244 = vmatprep.subr.mxu0 0.0
  %3245 = vmatpush1.msra.mxu0 %v1951
  %3246 = vmatprep.subr.mxu0 0.0
  %3247 = vmatpush1.msra.mxu0 %v1950
  %3248 = vmatprep.subr.mxu0 0.0
  %3249 = vmatpush1.msra.mxu0 %v1949
  %3250 = vmatprep.subr.mxu0 0.0
  %3251 = vmatpush1.msra.mxu0 %v1948
  %3252 = vmatprep.subr.mxu0 0.0
  %3253 = vmatpush1.msra.mxu0 %v1947
  %3254 = vmatprep.subr.mxu0 0.0
  %3255 = vmatpush1.msra.mxu0 %v1946
  %3256 = vmatprep.subr.mxu0 0.0
  %3257 = vmatpush2.msra.mxu0 0.0
  %3258 = vmatprep.subr.mxu0 0.0
  %3259 = vmatpush2.msra.mxu0 0.0
  %3260 = vmatprep.subr.mxu0 0.0
  %3261 = vmatpush2.msra.mxu0 0.0
  %3262 = vmatprep.subr.mxu0 0.0
  %3263 = vmatpush2.msra.mxu0 0.0
  %3264 = vmatprep.subr.mxu0 0.0
  %3265 = vmatpush2.msra.mxu0 0.0
  %3266 = vmatprep.subr.mxu0 0.0
  %3267 = vmatpush2.msra.mxu0 0.0
  %3268 = vmatprep.subr.mxu0 0.0
  %3269 = vmatpush2.msra.mxu0 0.0
  %3270 = vmatprep.subr.mxu0 0.0
  %3271 = vmatpush2.msra.mxu0 0.0
  %3272 = vmatprep.subr.mxu0 0.0
  %3273 = vmatpush2.msra.mxu0 0.0
  %3274 = vmatprep.subr.mxu0 0.0
  %3275 = vmatpush2.msra.mxu0 0.0
  %3276 = vmatprep.subr.mxu0 0.0
  %3277 = vmatpush2.msra.mxu0 0.0
  %3278 = vmatprep.subr.mxu0 0.0
  %3279 = vmatpush2.msra.mxu0 0.0
  %3280 = vmatprep.subr.mxu0 0.0
  %3281 = vmatpush2.msra.mxu0 0.0
  %3282 = vmatprep.subr.mxu0 0.0
  %3283 = vmatpush2.msra.mxu0 0.0
  %3284 = vmatprep.subr.mxu0 0.0
  %3285 = vmatpush2.msra.mxu0 0.0
  %3286 = vmatprep.subr.mxu0 0.0
  %3287 = vmatpush2.msra.mxu0 0.0
  %3288 = vmatprep.mubr.f32.mxu0 0.0
  %3289 = vmatmul.mubr.f32.gmra.mxu0 %v3219
  %v3290 = vpop.f32.mrf.mxu0
  %v3291 = vadd.f32 %v3217, %v3290
  %v3292 = vpop.f32.mrf.mxu0
  %3293 = vmatprep.mubr.f32.mxu0 0.0
  %3294 = vmatmul.mubr.f32.gmra.mxu0 %v3222
  %v3295 = vpop.f32.mrf.mxu0
  %v3296 = vadd.f32 %v3217, %v3295
  %v3297 = vpop.f32.mrf.mxu0
  %3298 = vdwg.mxu0
  %v3299 = vadd.f32 %v3109, %v3291
  %v3300 = vadd.f32 %v3110, %v3296
  %v3301 = vsel %vm277, %v3299, 0.0
  %3302 = vadd.xlane.f32.xlu0 %v3301
  %v3303 = vpop.xlane.xlu0 %3302
  %v3304 = vsel %vm277, %v3300, 0.0
  %3305 = vadd.xlane.f32.xlu0 %v3304
  %v3306 = vpop.xlane.xlu0 %3305
  %v3307 = vmul.f32 %v3303, %v1664
  %v3308 = vmul.f32 %v3306, %v1664
  %v3309 = vsub.f32 %v3299, %v3307
  %v3310 = vsub.f32 %v3300, %v3308
  %v3311 = vmul.f32 %v3309, %v3309
  %v3312 = vmul.f32 %v3310, %v3310
  %v3313 = vsel %vm277, %v3311, 0.0
  %3314 = vadd.xlane.f32.xlu0 %v3313
  %v3315 = vpop.xlane.xlu0 %3314
  %v3316 = vsel %vm277, %v3312, 0.0
  %3317 = vadd.xlane.f32.xlu0 %v3316
  %v3318 = vpop.xlane.xlu0 %3317
  %v3319 = vmul.f32 %v3315, %v1664
  %v3320 = vmul.f32 %v3318, %v1664
  %v3321 = vadd.f32 %v3319, 1e-05
  %v3322 = vadd.f32 %v3320, 1e-05
  %v3323 = vrsqrt.pop %v3321
  %v3324 = vrsqrt.pop %v3322
  %v3325 = vmul.f32 %v3309, %v3323
  %v3326 = vmul.f32 %v3310, %v3324
  %v3327 = vlaneseq
  %v3328 = vshrl.u32 %v3327, 7
  %v3329 = vsub.s32 0, %v3328
  %v3330 = vrot.slane %v1963, %v3329
  %v3331 = vmul.f32 %v3325, %v3330
  %v3332 = vmul.f32 %v3326, %v3330
  %v3333 = vlaneseq
  %v3334 = vshrl.u32 %v3333, 7
  %v3335 = vsub.s32 0, %v3334
  %v3336 = vrot.slane %v1964, %v3335
  %v3337 = vadd.f32 %v3331, %v3336
  %v3338 = vadd.f32 %v3332, %v3336
  %v3339 = vld [vmem:[%s4 + $0x100] sm:$0xff]
  %v3340 = vld [vmem:[%s4 + $0x108] sm:$0xff]
  %v3341 = vld [vmem:[%s4 + $0x110] sm:$0xff]
  %v3342 = vld [vmem:[%s4 + $0x118] sm:$0xff]
  %v3343 = vld [vmem:[%s5 + $0x4] sm:$0x1]
  %v3344 = vlaneseq
  %v3345 = vshrl.u32 %v3344, 7
  %v3346 = vsub.s32 0, %v3345
  %v3347 = vrot.slane %v3343, %v3346
  %v3349 = vsel %vm277, %v3337, 0
  %v3352 = vsel %vm277, %v3338, 0
  %3354 = vmatprep.subr.mxu0 0.0
  %3355 = vmatpush1.msra.mxu0 0.0
  %3356 = vmatprep.subr.mxu0 0.0
  %3357 = vmatpush1.msra.mxu0 0.0
  %3358 = vmatprep.subr.mxu0 0.0
  %3359 = vmatpush1.msra.mxu0 0.0
  %3360 = vmatprep.subr.mxu0 0.0
  %3361 = vmatpush1.msra.mxu0 0.0
  %3362 = vmatprep.subr.mxu0 0.0
  %3363 = vmatpush1.msra.mxu0 0.0
  %3364 = vmatprep.subr.mxu0 0.0
  %3365 = vmatpush1.msra.mxu0 0.0
  %3366 = vmatprep.subr.mxu0 0.0
  %3367 = vmatpush1.msra.mxu0 0.0
  %3368 = vmatprep.subr.mxu0 0.0
  %3369 = vmatpush1.msra.mxu0 0.0
  %3370 = vmatprep.subr.mxu0 0.0
  %3371 = vmatpush1.msra.mxu0 0.0
  %3372 = vmatprep.subr.mxu0 0.0
  %3373 = vmatpush1.msra.mxu0 0.0
  %3374 = vmatprep.subr.mxu0 0.0
  %3375 = vmatpush1.msra.mxu0 0.0
  %3376 = vmatprep.subr.mxu0 0.0
  %3377 = vmatpush1.msra.mxu0 0.0
  %3378 = vmatprep.subr.mxu0 0.0
  %3379 = vmatpush1.msra.mxu0 %v3342
  %3380 = vmatprep.subr.mxu0 0.0
  %3381 = vmatpush1.msra.mxu0 %v3341
  %3382 = vmatprep.subr.mxu0 0.0
  %3383 = vmatpush1.msra.mxu0 %v3340
  %3384 = vmatprep.subr.mxu0 0.0
  %3385 = vmatpush1.msra.mxu0 %v3339
  %3386 = vmatprep.subr.mxu0 0.0
  %3387 = vmatpush2.msra.mxu0 0.0
  %3388 = vmatprep.subr.mxu0 0.0
  %3389 = vmatpush2.msra.mxu0 0.0
  %3390 = vmatprep.subr.mxu0 0.0
  %3391 = vmatpush2.msra.mxu0 0.0
  %3392 = vmatprep.subr.mxu0 0.0
  %3393 = vmatpush2.msra.mxu0 0.0
  %3394 = vmatprep.subr.mxu0 0.0
  %3395 = vmatpush2.msra.mxu0 0.0
  %3396 = vmatprep.subr.mxu0 0.0
  %3397 = vmatpush2.msra.mxu0 0.0
  %3398 = vmatprep.subr.mxu0 0.0
  %3399 = vmatpush2.msra.mxu0 0.0
  %3400 = vmatprep.subr.mxu0 0.0
  %3401 = vmatpush2.msra.mxu0 0.0
  %3402 = vmatprep.subr.mxu0 0.0
  %3403 = vmatpush2.msra.mxu0 0.0
  %3404 = vmatprep.subr.mxu0 0.0
  %3405 = vmatpush2.msra.mxu0 0.0
  %3406 = vmatprep.subr.mxu0 0.0
  %3407 = vmatpush2.msra.mxu0 0.0
  %3408 = vmatprep.subr.mxu0 0.0
  %3409 = vmatpush2.msra.mxu0 0.0
  %3410 = vmatprep.subr.mxu0 0.0
  %3411 = vmatpush2.msra.mxu0 0.0
  %3412 = vmatprep.subr.mxu0 0.0
  %3413 = vmatpush2.msra.mxu0 0.0
  %3414 = vmatprep.subr.mxu0 0.0
  %3415 = vmatpush2.msra.mxu0 0.0
  %3416 = vmatprep.subr.mxu0 0.0
  %3417 = vmatpush2.msra.mxu0 0.0
  %3418 = vmatprep.mubr.f32.mxu0 0.0
  %3419 = vmatmul.mubr.f32.gmra.mxu0 %v3349
  %v3420 = vpop.f32.mrf.mxu0
  %v3421 = vadd.f32 %v3347, %v3420
  %v3422 = vpop.f32.mrf.mxu0
  %3423 = vmatprep.mubr.f32.mxu0 0.0
  %3424 = vmatmul.mubr.f32.gmra.mxu0 %v3352
  %v3425 = vpop.f32.mrf.mxu0
  %v3426 = vadd.f32 %v3347, %v3425
  %v3427 = vpop.f32.mrf.mxu0
  %3428 = vdwg.mxu0
  %v3429 = vmul.f32 %v3421, %v3421
  %v3430 = vmul.f32 %v3426, %v3426
  %v3431 = vmul.f32 %v3421, %v3429
  %v3432 = vmul.f32 %v3426, %v3430
  %v3433 = vmul.f32 %v3431, 0.044715
  %v3434 = vmul.f32 %v3432, 0.044715
  %v3435 = vadd.f32 %v3421, %v3433
  %v3436 = vadd.f32 %v3426, %v3434
  %v3437 = vmul.f32 %v3435, 0.7978846
  %v3438 = vmul.f32 %v3436, 0.7978846
  %v3439 = vtanh.pop %v3437
  %v3440 = vtanh.pop %v3438
  %v3441 = vadd.f32 %v3439, 1.0
  %v3442 = vadd.f32 %v3440, 1.0
  %v3443 = vmul.f32 %v3441, 0.5
  %v3444 = vmul.f32 %v3442, 0.5
  %v3445 = vmul.f32 %v3421, %v3443
  %v3446 = vmul.f32 %v3426, %v3444
  %v3447 = vld [vmem:[%s4 + $0x120] sm:$0xff]
  %v3448 = vld [vmem:[%s4 + $0x128] sm:$0xff]
  %v3449 = vld [vmem:[%s4 + $0x130] sm:$0xff]
  %v3450 = vld [vmem:[%s4 + $0x138] sm:$0xff]
  %v3451 = vld [vmem:[%s4 + $0x140] sm:$0xff]
  %v3452 = vld [vmem:[%s4 + $0x148] sm:$0xff]
  %v3453 = vld [vmem:[%s4 + $0x150] sm:$0xff]
  %v3454 = vld [vmem:[%s4 + $0x158] sm:$0xff]
  %v3455 = vld [vmem:[%s5 + $0x5] sm:$0x1]
  %v3456 = vlaneseq
  %v3457 = vshrl.u32 %v3456, 7
  %v3458 = vsub.s32 0, %v3457
  %v3459 = vrot.slane %v3455, %v3458
  %v3461 = vsel %vm170, %v3445, 0
  %v3464 = vsel %vm170, %v3446, 0
  %3466 = vmatprep.subr.mxu0 0.0
  %3467 = vmatpush1.msra.mxu0 0.0
  %3468 = vmatprep.subr.mxu0 0.0
  %3469 = vmatpush1.msra.mxu0 0.0
  %3470 = vmatprep.subr.mxu0 0.0
  %3471 = vmatpush1.msra.mxu0 0.0
  %3472 = vmatprep.subr.mxu0 0.0
  %3473 = vmatpush1.msra.mxu0 0.0
  %3474 = vmatprep.subr.mxu0 0.0
  %3475 = vmatpush1.msra.mxu0 0.0
  %3476 = vmatprep.subr.mxu0 0.0
  %3477 = vmatpush1.msra.mxu0 0.0
  %3478 = vmatprep.subr.mxu0 0.0
  %3479 = vmatpush1.msra.mxu0 0.0
  %3480 = vmatprep.subr.mxu0 0.0
  %3481 = vmatpush1.msra.mxu0 0.0
  %3482 = vmatprep.subr.mxu0 0.0
  %3483 = vmatpush1.msra.mxu0 %v3454
  %3484 = vmatprep.subr.mxu0 0.0
  %3485 = vmatpush1.msra.mxu0 %v3453
  %3486 = vmatprep.subr.mxu0 0.0
  %3487 = vmatpush1.msra.mxu0 %v3452
  %3488 = vmatprep.subr.mxu0 0.0
  %3489 = vmatpush1.msra.mxu0 %v3451
  %3490 = vmatprep.subr.mxu0 0.0
  %3491 = vmatpush1.msra.mxu0 %v3450
  %3492 = vmatprep.subr.mxu0 0.0
  %3493 = vmatpush1.msra.mxu0 %v3449
  %3494 = vmatprep.subr.mxu0 0.0
  %3495 = vmatpush1.msra.mxu0 %v3448
  %3496 = vmatprep.subr.mxu0 0.0
  %3497 = vmatpush1.msra.mxu0 %v3447
  %3498 = vmatprep.subr.mxu0 0.0
  %3499 = vmatpush2.msra.mxu0 0.0
  %3500 = vmatprep.subr.mxu0 0.0
  %3501 = vmatpush2.msra.mxu0 0.0
  %3502 = vmatprep.subr.mxu0 0.0
  %3503 = vmatpush2.msra.mxu0 0.0
  %3504 = vmatprep.subr.mxu0 0.0
  %3505 = vmatpush2.msra.mxu0 0.0
  %3506 = vmatprep.subr.mxu0 0.0
  %3507 = vmatpush2.msra.mxu0 0.0
  %3508 = vmatprep.subr.mxu0 0.0
  %3509 = vmatpush2.msra.mxu0 0.0
  %3510 = vmatprep.subr.mxu0 0.0
  %3511 = vmatpush2.msra.mxu0 0.0
  %3512 = vmatprep.subr.mxu0 0.0
  %3513 = vmatpush2.msra.mxu0 0.0
  %3514 = vmatprep.subr.mxu0 0.0
  %3515 = vmatpush2.msra.mxu0 0.0
  %3516 = vmatprep.subr.mxu0 0.0
  %3517 = vmatpush2.msra.mxu0 0.0
  %3518 = vmatprep.subr.mxu0 0.0
  %3519 = vmatpush2.msra.mxu0 0.0
  %3520 = vmatprep.subr.mxu0 0.0
  %3521 = vmatpush2.msra.mxu0 0.0
  %3522 = vmatprep.subr.mxu0 0.0
  %3523 = vmatpush2.msra.mxu0 0.0
  %3524 = vmatprep.subr.mxu0 0.0
  %3525 = vmatpush2.msra.mxu0 0.0
  %3526 = vmatprep.subr.mxu0 0.0
  %3527 = vmatpush2.msra.mxu0 0.0
  %3528 = vmatprep.subr.mxu0 0.0
  %3529 = vmatpush2.msra.mxu0 0.0
  %3530 = vmatprep.mubr.f32.mxu0 0.0
  %3531 = vmatmul.mubr.f32.gmra.mxu0 %v3461
  %v3532 = vpop.f32.mrf.mxu0
  %v3533 = vadd.f32 %v3459, %v3532
  %v3534 = vpop.f32.mrf.mxu0
  %3535 = vmatprep.mubr.f32.mxu0 0.0
  %3536 = vmatmul.mubr.f32.gmra.mxu0 %v3464
  %v3537 = vpop.f32.mrf.mxu0
  %v3538 = vadd.f32 %v3459, %v3537
  %v3539 = vpop.f32.mrf.mxu0
  %3540 = vdwg.mxu0
  %v3541 = vmul.f32 %v3533, %v3533
  %v3542 = vmul.f32 %v3538, %v3538
  %v3543 = vmul.f32 %v3533, %v3541
  %v3544 = vmul.f32 %v3538, %v3542
  %v3545 = vmul.f32 %v3543, 0.044715
  %v3546 = vmul.f32 %v3544, 0.044715
  %v3547 = vadd.f32 %v3533, %v3545
  %v3548 = vadd.f32 %v3538, %v3546
  %v3549 = vmul.f32 %v3547, 0.7978846
  %v3550 = vmul.f32 %v3548, 0.7978846
  %v3551 = vtanh.pop %v3549
  %v3552 = vtanh.pop %v3550
  %v3553 = vadd.f32 %v3551, 1.0
  %v3554 = vadd.f32 %v3552, 1.0
  %v3555 = vmul.f32 %v3553, 0.5
  %v3556 = vmul.f32 %v3554, 0.5
  %v3557 = vmul.f32 %v3533, %v3555
  %v3558 = vmul.f32 %v3538, %v3556
  %v3559 = vld [vmem:[%s4 + $0x160] sm:$0xff]
  %v3560 = vld [vmem:[%s4 + $0x168] sm:$0xff]
  %v3561 = vld [vmem:[%s4 + $0x170] sm:$0xff]
  %v3562 = vld [vmem:[%s4 + $0x178] sm:$0xff]
  %v3563 = vld [vmem:[%s4 + $0x180] sm:$0xff]
  %v3564 = vld [vmem:[%s4 + $0x188] sm:$0xff]
  %v3565 = vld [vmem:[%s4 + $0x190] sm:$0xff]
  %v3566 = vld [vmem:[%s4 + $0x198] sm:$0xff]
  %v3567 = vld [vmem:[%s4 + $0x1a0] sm:$0xff]
  %v3568 = vld [vmem:[%s4 + $0x1a8] sm:$0xff]
  %v3569 = vld [vmem:[%s4 + $0x1b0] sm:$0xff]
  %v3570 = vld [vmem:[%s4 + $0x1b8] sm:$0xff]
  %3571 = vmatprep.subr.mxu0 0.0
  %3572 = vmatpush1.msra.mxu0 0.0
  %3573 = vmatprep.subr.mxu0 0.0
  %3574 = vmatpush1.msra.mxu0 0.0
  %3575 = vmatprep.subr.mxu0 0.0
  %3576 = vmatpush1.msra.mxu0 0.0
  %3577 = vmatprep.subr.mxu0 0.0
  %3578 = vmatpush1.msra.mxu0 0.0
  %3579 = vmatprep.subr.mxu0 0.0
  %3580 = vmatpush1.msra.mxu0 0.0
  %3581 = vmatprep.subr.mxu0 0.0
  %3582 = vmatpush1.msra.mxu0 0.0
  %3583 = vmatprep.subr.mxu0 0.0
  %3584 = vmatpush1.msra.mxu0 0.0
  %3585 = vmatprep.subr.mxu0 0.0
  %3586 = vmatpush1.msra.mxu0 0.0
  %3587 = vmatprep.subr.mxu0 0.0
  %3588 = vmatpush1.msra.mxu0 0.0
  %3589 = vmatprep.subr.mxu0 0.0
  %3590 = vmatpush1.msra.mxu0 0.0
  %3591 = vmatprep.subr.mxu0 0.0
  %3592 = vmatpush1.msra.mxu0 0.0
  %3593 = vmatprep.subr.mxu0 0.0
  %3594 = vmatpush1.msra.mxu0 0.0
  %3595 = vmatprep.subr.mxu0 0.0
  %3596 = vmatpush1.msra.mxu0 %v3570
  %3597 = vmatprep.subr.mxu0 0.0
  %3598 = vmatpush1.msra.mxu0 %v3569
  %3599 = vmatprep.subr.mxu0 0.0
  %3600 = vmatpush1.msra.mxu0 %v3568
  %3601 = vmatprep.subr.mxu0 0.0
  %3602 = vmatpush1.msra.mxu0 %v3567
  %3603 = vmatprep.subr.mxu0 0.0
  %3604 = vmatpush2.msra.mxu0 0.0
  %3605 = vmatprep.subr.mxu0 0.0
  %3606 = vmatpush2.msra.mxu0 0.0
  %3607 = vmatprep.subr.mxu0 0.0
  %3608 = vmatpush2.msra.mxu0 0.0
  %3609 = vmatprep.subr.mxu0 0.0
  %3610 = vmatpush2.msra.mxu0 0.0
  %3611 = vmatprep.subr.mxu0 0.0
  %3612 = vmatpush2.msra.mxu0 0.0
  %3613 = vmatprep.subr.mxu0 0.0
  %3614 = vmatpush2.msra.mxu0 0.0
  %3615 = vmatprep.subr.mxu0 0.0
  %3616 = vmatpush2.msra.mxu0 0.0
  %3617 = vmatprep.subr.mxu0 0.0
  %3618 = vmatpush2.msra.mxu0 0.0
  %3619 = vmatprep.subr.mxu0 0.0
  %3620 = vmatpush2.msra.mxu0 0.0
  %3621 = vmatprep.subr.mxu0 0.0
  %3622 = vmatpush2.msra.mxu0 0.0
  %3623 = vmatprep.subr.mxu0 0.0
  %3624 = vmatpush2.msra.mxu0 0.0
  %3625 = vmatprep.subr.mxu0 0.0
  %3626 = vmatpush2.msra.mxu0 0.0
  %3627 = vmatprep.subr.mxu0 0.0
  %3628 = vmatpush2.msra.mxu0 0.0
  %3629 = vmatprep.subr.mxu0 0.0
  %3630 = vmatpush2.msra.mxu0 0.0
  %3631 = vmatprep.subr.mxu0 0.0
  %3632 = vmatpush2.msra.mxu0 0.0
  %3633 = vmatprep.subr.mxu0 0.0
  %3634 = vmatpush2.msra.mxu0 0.0
  %3635 = vmatprep.mubr.f32.mxu0 0.0
  %3636 = vmatmul.mubr.f32.gmra.mxu0 %v3349
  %v3637 = vpop.f32.mrf.mxu0
  %v3638 = vadd.f32 0.0, %v3637
  %v3639 = vpop.f32.mrf.mxu0
  %3640 = vmatprep.mubr.f32.mxu0 0.0
  %3641 = vmatmul.mubr.f32.gmra.mxu0 %v3352
  %v3642 = vpop.f32.mrf.mxu0
  %v3643 = vadd.f32 0.0, %v3642
  %v3644 = vpop.f32.mrf.mxu0
  %3645 = vdwg.mxu0
  %v3647 = vsel %vm170, %v3557, 0
  %v3650 = vsel %vm170, %v3558, 0
  %3652 = vmatprep.subr.mxu0 0.0
  %3653 = vmatpush1.msra.mxu0 0.0
  %3654 = vmatprep.subr.mxu0 0.0
  %3655 = vmatpush1.msra.mxu0 0.0
  %3656 = vmatprep.subr.mxu0 0.0
  %3657 = vmatpush1.msra.mxu0 0.0
  %3658 = vmatprep.subr.mxu0 0.0
  %3659 = vmatpush1.msra.mxu0 0.0
  %3660 = vmatprep.subr.mxu0 0.0
  %3661 = vmatpush1.msra.mxu0 0.0
  %3662 = vmatprep.subr.mxu0 0.0
  %3663 = vmatpush1.msra.mxu0 0.0
  %3664 = vmatprep.subr.mxu0 0.0
  %3665 = vmatpush1.msra.mxu0 0.0
  %3666 = vmatprep.subr.mxu0 0.0
  %3667 = vmatpush1.msra.mxu0 0.0
  %3668 = vmatprep.subr.mxu0 0.0
  %3669 = vmatpush1.msra.mxu0 %v3566
  %3670 = vmatprep.subr.mxu0 0.0
  %3671 = vmatpush1.msra.mxu0 %v3565
  %3672 = vmatprep.subr.mxu0 0.0
  %3673 = vmatpush1.msra.mxu0 %v3564
  %3674 = vmatprep.subr.mxu0 0.0
  %3675 = vmatpush1.msra.mxu0 %v3563
  %3676 = vmatprep.subr.mxu0 0.0
  %3677 = vmatpush1.msra.mxu0 %v3562
  %3678 = vmatprep.subr.mxu0 0.0
  %3679 = vmatpush1.msra.mxu0 %v3561
  %3680 = vmatprep.subr.mxu0 0.0
  %3681 = vmatpush1.msra.mxu0 %v3560
  %3682 = vmatprep.subr.mxu0 0.0
  %3683 = vmatpush1.msra.mxu0 %v3559
  %3684 = vmatprep.subr.mxu0 0.0
  %3685 = vmatpush2.msra.mxu0 0.0
  %3686 = vmatprep.subr.mxu0 0.0
  %3687 = vmatpush2.msra.mxu0 0.0
  %3688 = vmatprep.subr.mxu0 0.0
  %3689 = vmatpush2.msra.mxu0 0.0
  %3690 = vmatprep.subr.mxu0 0.0
  %3691 = vmatpush2.msra.mxu0 0.0
  %3692 = vmatprep.subr.mxu0 0.0
  %3693 = vmatpush2.msra.mxu0 0.0
  %3694 = vmatprep.subr.mxu0 0.0
  %3695 = vmatpush2.msra.mxu0 0.0
  %3696 = vmatprep.subr.mxu0 0.0
  %3697 = vmatpush2.msra.mxu0 0.0
  %3698 = vmatprep.subr.mxu0 0.0
  %3699 = vmatpush2.msra.mxu0 0.0
  %3700 = vmatprep.subr.mxu0 0.0
  %3701 = vmatpush2.msra.mxu0 0.0
  %3702 = vmatprep.subr.mxu0 0.0
  %3703 = vmatpush2.msra.mxu0 0.0
  %3704 = vmatprep.subr.mxu0 0.0
  %3705 = vmatpush2.msra.mxu0 0.0
  %3706 = vmatprep.subr.mxu0 0.0
  %3707 = vmatpush2.msra.mxu0 0.0
  %3708 = vmatprep.subr.mxu0 0.0
  %3709 = vmatpush2.msra.mxu0 0.0
  %3710 = vmatprep.subr.mxu0 0.0
  %3711 = vmatpush2.msra.mxu0 0.0
  %3712 = vmatprep.subr.mxu0 0.0
  %3713 = vmatpush2.msra.mxu0 0.0
  %3714 = vmatprep.subr.mxu0 0.0
  %3715 = vmatpush2.msra.mxu0 0.0
  %3716 = vmatprep.mubr.f32.mxu0 0.0
  %3717 = vmatmul.mubr.f32.gmra.mxu0 %v3647
  %v3718 = vpop.f32.mrf.mxu0
  %v3719 = vadd.f32 %v3638, %v3718
  %v3720 = vpop.f32.mrf.mxu0
  %3721 = vmatprep.mubr.f32.mxu0 0.0
  %3722 = vmatmul.mubr.f32.gmra.mxu0 %v3650
  %v3723 = vpop.f32.mrf.mxu0
  %v3724 = vadd.f32 %v3643, %v3723
  %v3725 = vpop.f32.mrf.mxu0
  %3726 = vdwg.mxu0
  %v3727 = vld [vmem:[%s5 + $0x6] sm:$0x1]
  %v3728 = vlaneseq
  %v3729 = vshrl.u32 %v3728, 7
  %v3730 = vsub.s32 0, %v3729
  %v3731 = vrot.slane %v3727, %v3730
  %v3732 = vadd.f32 %v3719, %v3731
  %v3733 = vadd.f32 %v3724, %v3731
  %vm3734 = vcmp.eq.s32.totalorder %v490, 6
  %v3735 = vsel %vm3734, 1, 0
  %v3736 = vcvt.s32.f32 %v3735
  %3738 = vset.pattern.permute.xlu0 0
  %3739 = vperm.xlu0 %3738, %v445
  %v3740 = vpop.permute.xlu0 %3739
  %3743 = vset.pattern.permute.xlu0 0
  %3744 = vperm.xlu0 %3743, %v450
  %v3745 = vpop.permute.xlu0 %3744
  %v3747 = vmul.f32 %v3740, %v3736
  %v3748 = vmul.f32 %v3745, %v3736
  %v3749 = vadd.f32 %v3732, %v3747
  %v3750 = vadd.f32 %v3733, %v3748
  %vm3751 = vcmask 64512
  %3752 = vst.msk [vmem:[%s8] sm:$0xff] %vm3751, %v3749
  %3753 = vst.msk [vmem:[%s8 + $0x8] sm:$0xff] %vm3751, %v3750
  // Predicated region
  $region34: #{_lambda_.1} parent=0 // pred_check
    _
  $region35: #{_lambda_.1} parent=0 // pred_check_branch
    %3755 = sbr.rel (0) target = $region37
  $region36: #{_lambda_.1} parent=0 // pred_region
    _
  $region37: #{_lambda_.1} parent=0 // pred_fallthru
    _
  // Predicated region
  $region38: #{_lambda_.1} parent=0 // pred_check
    _
  $region39: #{_lambda_.1} parent=0 // pred_check_branch
    %3757 = sbr.rel (0) target = $region41
  $region40: #{_lambda_.1} parent=0 // pred_region
    _
  $region41: #{_lambda_.1} parent=0 // pred_fallthru
    _

</llo_original>
